<compile_context>
chip_gen: v5e
topology: v5e:2x2
jax: 0.10.0
libtpu: 0.0.40
codegen_flags: <defaults>
</compile_context>

<pallas_src>
import functools

import jax
import jax.numpy as jnp
from jax.experimental import pallas as pl

_LANES = 128
_PARAM_DTYPE = jnp.bfloat16   # MXU-native operand dtype (f32 accumulation)


def _round_up(n, m):
    return ((n + m - 1) // m) * m


# ----------------------- wrapper-side weight packing ------------------------
# Pure layout plumbing, done once outside the kernel.

def _pack_conv(w_conv, b_conv, dtype):
    # torch Conv1d weight (Cout, Cin, K) -> per-tap matrices (K, Cin, Cout).
    wt = jnp.transpose(w_conv, (2, 1, 0)).astype(dtype)
    return wt, b_conv.reshape(1, -1).astype(jnp.float32)


def _pack_wih_shared(wih, gp, dtype):
    # (dup, 3H, Din) -> (Din, 3*GP); per gate: [dup0 H | dup1 H | ... | 0-pad].
    dup, three_h, din = wih.shape
    h = three_h // 3
    g = dup * h
    w = jnp.transpose(wih, (2, 1, 0)).reshape(din, 3, h, dup)   # (Din, gate, H, dup)
    w = jnp.transpose(w, (0, 1, 3, 2)).reshape(din, 3, g)       # (Din, gate, G)
    w = jnp.pad(w, ((0, 0), (0, 0), (0, gp - g)))               # lane-align gates
    return w.reshape(din, 3 * gp).astype(dtype)


def _pack_blockdiag(w, gp, dtype):
    # (dup, 3H, Hin) -> block-diagonal (GP, 3*GP): dup d only reads its own
    # Hin-slice of the dup-stacked (lane-padded) hidden state.  Exact zeros.
    dup, three_h, hin = w.shape
    h = three_h // 3
    g_in, g_out = dup * hin, dup * h
    wt = jnp.transpose(w, (2, 1, 0)).reshape(hin, 3, h, dup)    # (Hin, gate, H, dup)
    wt = jnp.transpose(wt, (3, 0, 1, 2))                        # (dup, Hin, gate, H)
    idx = jnp.arange(dup)
    w5 = jnp.zeros((dup, hin, 3, dup, h), w.dtype).at[idx, :, :, idx, :].set(wt)
    w5 = w5.reshape(g_in, 3, g_out)
    w5 = jnp.pad(w5, ((0, gp - g_in), (0, 0), (0, gp - g_out)))
    return w5.reshape(gp, 3 * gp).astype(dtype)


def _pack_bias(b, gp):
    # (dup, 3H) -> (1, 3*GP); per gate: [dup0 H | ... | 0-pad].  Kept in f32.
    dup, three_h = b.shape
    h = three_h // 3
    g = dup * h
    bb = jnp.transpose(b.reshape(dup, 3, h), (1, 0, 2)).reshape(3, g)
    bb = jnp.pad(bb, ((0, 0), (0, gp - g)))
    return bb.reshape(1, 3 * gp).astype(jnp.float32)


def _make_mean_selector(dup, h, gp, out_lanes, dtype):
    # 0/1 selector (GP, out_lanes): output lane j sums lane d*H+j over dups.
    # The 1/dup scale is applied in f32 inside the kernel (exact-sum mean).
    a = jnp.zeros((gp, out_lanes), dtype)
    eye = jnp.eye(h, dtype=dtype)
    for d in range(dup):
        a = a.at[d * h:(d + 1) * h, 0:h].set(eye)
    return a


def pack_params(params, *, rnn_layers, dup_num, hidden_dim, dtype=_PARAM_DTYPE):
    gp = _round_up(dup_num * hidden_dim, _LANES)
    out_lanes = _round_up(hidden_dim, _LANES)
    packed = {"layers": []}
    packed["conv_w"], packed["conv_b"] = _pack_conv(params["conv_w"],
                                                    params["conv_b"], dtype)
    packed["mean_sel"] = _make_mean_selector(dup_num, hidden_dim, gp, out_lanes,
                                             dtype)
    for l in range(rnn_layers):
        wih_p = (_pack_wih_shared(params["wih"][l], gp, dtype) if l == 0
                 else _pack_blockdiag(params["wih"][l], gp, dtype))
        packed["layers"].append((
            wih_p,
            _pack_blockdiag(params["whh"][l], gp, dtype),
            _pack_bias(params["bih"][l], gp),
            _pack_bias(params["bhh"][l], gp),
        ))
    return packed


# ------------------------------ fused kernel --------------------------------

def _make_fused_kernel(T, B, dup, n_layers, K, cout, GP, OUT_L):
    G3 = 3 * GP

    def kernel(x_ref, wc_ref, bc_ref, sel_ref, *rest):
        layer_refs = rest[:4 * n_layers]
        out_ref = rest[4 * n_layers]

        # --- Conv1d ('same') as K accumulated per-tap matmuls: the K-shifted
        # views are taken in-kernel, so no K-x expanded im2col copy hits HBM.
        y = jnp.zeros((T * B, cout), jnp.float32) + bc_ref[...]
        for k in range(K):
            xk = x_ref[pl.ds(k * B, T * B), :].astype(wc_ref.dtype)
            y = y + jnp.dot(xk, wc_ref[k], preferred_element_type=jnp.float32)
        x_all = y                                   # (T*B, Cout) f32, time-major

        # --- dup_num parallel multi-layer GRUs, dup-stacked along lanes.
        for l in range(n_layers):
            wih_ref, whh_ref, bih_ref, bhh_ref = layer_refs[4 * l:4 * (l + 1)]

            # Hoisted input projection: all timesteps x all dup copies in ONE
            # bf16 matmul (f32 accumulate), bih folded in.
            gx = jnp.dot(x_all.astype(wih_ref.dtype), wih_ref[...],
                         preferred_element_type=jnp.float32) + bih_ref[...]
            bhh = jnp.broadcast_to(bhh_ref[...], (B, G3))       # hoisted once

            h = jnp.zeros((B, GP), jnp.float32)
            hs = []
            # Recurrence fully unrolled (T static & small): step t+1's h@Whh
            # MXU push overlaps step t's sigmoid/tanh (EUP) + gate VPU work.
            for t in range(T):
                gxt = gx[t * B:(t + 1) * B, :]                  # static slice
                gh = jnp.dot(h.astype(whh_ref.dtype), whh_ref[...],
                             preferred_element_type=jnp.float32) + bhh
                # 128-lane-aligned gate slices: zero cross-lane work per step.
                r = jax.nn.sigmoid(gxt[:, 0:GP] + gh[:, 0:GP])
                z = jax.nn.sigmoid(gxt[:, GP:2 * GP] + gh[:, GP:2 * GP])
                n = jnp.tanh(gxt[:, 2 * GP:3 * GP] + r * gh[:, 2 * GP:3 * GP])
                h = (1.0 - z) * n + z * h
                hs.append(h)
            # Hidden states stay in registers; one bulk value feeds the next
            # layer (no per-step masked sub-tile VMEM stores / false tile deps).
            x_all = jnp.concatenate(hs, axis=0)                 # (T*B, GP) f32
            # TODO(synk): torch applies inter-layer GRU dropout only in train
            # mode; eval-mode (identity) semantics are implemented here.

        # --- Mean over dup copies as ONE matmul against a 0/1 selector, into a
        # 128-lane-dense output slab (single unmasked bulk store).
        s = jnp.dot(x_all.astype(sel_ref.dtype), sel_ref[...],
                    preferred_element_type=jnp.float32)
        out_ref[...] = (s * (1.0 / dup)).astype(out_ref.dtype)

    return kernel


@functools.partial(jax.jit, static_argnames=("kernel_size", "rnn_layers",
                                             "dup_num", "hidden_dim"))
def cnn_krnn_forward(x, packed, *, kernel_size, rnn_layers, dup_num, hidden_dim):
    """x: (B, T, cnn_input_dim) -> (B, T, rnn_output_dim)."""
    assert kernel_size % 2 == 1, "only odd kernel_size matches torch 'same' conv"
    B, T, Cin = x.shape
    H = hidden_dim
    GP = _round_up(dup_num * H, _LANES)
    OUT_L = _round_up(H, _LANES)
    pad = (kernel_size - 1) // 2
    K = kernel_size
    Cout = packed["conv_b"].shape[-1]

    # Time-major, zero-padded along time for the 'same' conv; the K per-tap
    # shifted views are taken inside the kernel (no im2col copy in HBM).
    x_seq = jnp.transpose(x, (1, 0, 2)).astype(jnp.float32)      # (T, B, Cin)
    x_seq = jnp.pad(x_seq, ((pad, pad), (0, 0), (0, 0)))
    x_seq = x_seq.reshape((T + 2 * pad) * B, Cin)
    # TODO(synk): at production shapes fold this transpose/pad into the grid's
    # index_map (or produce time-major data upstream) to avoid an extra HBM pass.

    flat_layers = [a for layer in packed["layers"] for a in layer]
    kernel = _make_fused_kernel(T, B, dup_num, rnn_layers, K, Cout, GP, OUT_L)

    out_flat = pl.pallas_call(
        kernel,
        out_shape=jax.ShapeDtypeStruct((T * B, OUT_L), jnp.float32),
    )(x_seq, packed["conv_w"], packed["conv_b"], packed["mean_sel"], *flat_layers)

    # (T*B, 128-lane slab) -> (B, T, H): layout plumbing outside the kernel.
    # TODO(synk): with a production grid, emit (B, T, ...) directly from the
    # kernel to drop this extra HBM pass.
    out = out_flat[:, :H].reshape(T, B, H)
    return jnp.transpose(out, (1, 0, 2)).astype(x.dtype)


# ----------------------- pure-JAX reference (torch semantics) ----------------

def _reference_forward(x, params, *, kernel_size, rnn_layers, dup_num):
    B, T, Cin = x.shape
    pad = (kernel_size - 1) // 2
    w, b = params["conv_w"], params["conv_b"]
    hp = jax.lax.Precision.HIGHEST
    xpad = jnp.pad(x, ((0, 0), (pad, pad), (0, 0)))
    y = jnp.zeros((B, T, w.shape[0]), jnp.float32) + b
    for k in range(kernel_size):
        y = y + jnp.einsum("btc,oc->bto", xpad[:, k:k + T, :], w[:, :, k],
                           precision=hp)
    seq = jnp.transpose(y, (1, 0, 2))                        # (T, B, Cout)
    H = params["whh"][0].shape[-1]
    hids = []
    for d in range(dup_num):
        inp = seq
        for l in range(rnn_layers):
            wih, whh = params["wih"][l][d], params["whh"][l][d]
            bih, bhh = params["bih"][l][d], params["bhh"][l][d]
            h = jnp.zeros((B, H), jnp.float32)
            outs = []
            for t in range(T):
                gx = jnp.dot(inp[t], wih.T, precision=hp) + bih
                gh = jnp.dot(h, whh.T, precision=hp) + bhh
                r = jax.nn.sigmoid(gx[:, :H] + gh[:, :H])
                z = jax.nn.sigmoid(gx[:, H:2 * H] + gh[:, H:2 * H])
                n = jnp.tanh(gx[:, 2 * H:] + r * gh[:, 2 * H:])
                h = (1.0 - z) * n + z * h
                outs.append(h)
            inp = jnp.stack(outs, axis=0)
        hids.append(inp)
    hids = jnp.mean(jnp.stack(hids, axis=-1), axis=-1)       # (T, B, H)
    return jnp.transpose(hids, (1, 0, 2))


# ---------------------------------- main -------------------------------------

if __name__ == "__main__":
    B, T = 2, 8
    cnn_input_dim, cnn_output_dim, cnn_kernel_size = 4, 16, 3
    rnn_output_dim, rnn_dup_num, rnn_layers = 32, 3, 2

    key_iter = iter(jax.random.split(jax.random.PRNGKey(0), 64))

    def u(shape, bound):
        return jax.random.uniform(next(key_iter), shape, jnp.float32,
                                  -bound, bound)

    conv_bound = 1.0 / (cnn_input_dim * cnn_kernel_size) ** 0.5
    H = rnn_output_dim
    gru_bound = 1.0 / H ** 0.5

    params = {
        "conv_w": u((cnn_output_dim, cnn_input_dim, cnn_kernel_size), conv_bound),
        "conv_b": u((cnn_output_dim,), conv_bound),
        "wih": [], "whh": [], "bih": [], "bhh": [],
    }
    for layer in range(rnn_layers):
        in_dim = cnn_output_dim if layer == 0 else H
        params["wih"].append(jnp.stack(
            [u((3 * H, in_dim), gru_bound) for _ in range(rnn_dup_num)]))
        params["whh"].append(jnp.stack(
            [u((3 * H, H), gru_bound) for _ in range(rnn_dup_num)]))
        params["bih"].append(jnp.stack(
            [u((3 * H,), gru_bound) for _ in range(rnn_dup_num)]))
        params["bhh"].append(jnp.stack(
            [u((3 * H,), gru_bound) for _ in range(rnn_dup_num)]))

    x = jax.random.normal(next(key_iter), (B, T, cnn_input_dim), jnp.float32)

    packed = pack_params(params, rnn_layers=rnn_layers, dup_num=rnn_dup_num,
                         hidden_dim=rnn_output_dim)
    out = cnn_krnn_forward(x, packed,
                           kernel_size=cnn_kernel_size,
                           rnn_layers=rnn_layers,
                           dup_num=rnn_dup_num,
                           hidden_dim=rnn_output_dim)
    out = jax.block_until_ready(out)
    assert out.shape == (B, T, rnn_output_dim), out.shape
    assert bool(jnp.all(jnp.isfinite(out)))

    ref = _reference_forward(x, params,
                             kernel_size=cnn_kernel_size,
                             rnn_layers=rnn_layers,
                             dup_num=rnn_dup_num)
    # Tolerance sized for bf16 MXU operands (weights + activations, ~2^-9
    # relative rounding) accumulated through T=8 recurrent steps x 2 layers,
    # compared against an f32 Precision.HIGHEST reference.
    assert bool(jnp.allclose(out, ref, rtol=2e-2, atol=4e-2)), \
        float(jnp.max(jnp.abs(out - ref)))

    print("KERNEL_OK")
</pallas_src>

<mosaic_0001>
module attributes {stable_mosaic.version = 11 : i64} {
  func.func @kernel(%arg0: memref<20x4xf32, #tpu.memory_space<vmem>>, %arg1: memref<3x4x16xbf16, #tpu.memory_space<vmem>>, %arg2: memref<1x16xf32, #tpu.memory_space<vmem>>, %arg3: memref<128x128xbf16, #tpu.memory_space<vmem>>, %arg4: memref<16x384xbf16, #tpu.memory_space<vmem>>, %arg5: memref<128x384xbf16, #tpu.memory_space<vmem>>, %arg6: memref<1x384xf32, #tpu.memory_space<vmem>>, %arg7: memref<1x384xf32, #tpu.memory_space<vmem>>, %arg8: memref<128x384xbf16, #tpu.memory_space<vmem>>, %arg9: memref<128x384xbf16, #tpu.memory_space<vmem>>, %arg10: memref<1x384xf32, #tpu.memory_space<vmem>>, %arg11: memref<1x384xf32, #tpu.memory_space<vmem>>, %arg12: memref<16x128xf32, #tpu.memory_space<vmem>>) attributes {dimension_semantics = [], scalar_prefetch = 0 : i64, scratch_operands = 0 : i64, tpu.core_type = #tpu.core_type<tc>} {
    %cst = arith.constant 0.000000e+00 : f32
    %0 = vector.broadcast %cst : f32 to vector<16x16xf32>
    %c0 = arith.constant 0 : index
    %c0_0 = arith.constant 0 : index
    %1 = vector.load %arg2[%c0, %c0_0] : memref<1x16xf32, #tpu.memory_space<vmem>>, vector<1x16xf32>
    %2 = vector.broadcast %1 : vector<1x16xf32> to vector<16x16xf32>
    %3 = arith.addf %0, %2 : vector<16x16xf32>
    %c0_1 = arith.constant 0 : index
    %c0_2 = arith.constant 0 : index
    %4 = vector.load %arg0[%c0_1, %c0_2] : memref<20x4xf32, #tpu.memory_space<vmem>>, vector<16x4xf32>
    %5 = arith.truncf %4 : vector<16x4xf32> to vector<16x4xbf16>
    %c0_3 = arith.constant 0 : index
    %c0_4 = arith.constant 0 : index
    %c0_5 = arith.constant 0 : index
    %6 = vector.load %arg1[%c0_3, %c0_4, %c0_5] : memref<3x4x16xbf16, #tpu.memory_space<vmem>>, vector<1x4x16xbf16>
    %7 = vector.shape_cast %6 : vector<1x4x16xbf16> to vector<4x16xbf16>
    %cst_6 = arith.constant dense<0.000000e+00> : vector<16x16xf32>
    %8 = tpu.matmul %5, %7, %cst_6 {dimension_numbers = #tpu.dot_dimension_numbers<[1], [0], [0], [1], [0, 0, 1, 1], [], []>} : vector<16x4xbf16>, vector<4x16xbf16>, vector<16x16xf32> -> vector<16x16xf32>
    %9 = arith.addf %3, %8 : vector<16x16xf32>
    %c2 = arith.constant 2 : index
    %c0_7 = arith.constant 0 : index
    %10 = vector.load %arg0[%c2, %c0_7] : memref<20x4xf32, #tpu.memory_space<vmem>>, vector<16x4xf32>
    %11 = arith.truncf %10 : vector<16x4xf32> to vector<16x4xbf16>
    %c1 = arith.constant 1 : index
    %c0_8 = arith.constant 0 : index
    %c0_9 = arith.constant 0 : index
    %12 = vector.load %arg1[%c1, %c0_8, %c0_9] : memref<3x4x16xbf16, #tpu.memory_space<vmem>>, vector<1x4x16xbf16>
    %13 = vector.shape_cast %12 : vector<1x4x16xbf16> to vector<4x16xbf16>
    %cst_10 = arith.constant dense<0.000000e+00> : vector<16x16xf32>
    %14 = tpu.matmul %11, %13, %cst_10 {dimension_numbers = #tpu.dot_dimension_numbers<[1], [0], [0], [1], [0, 0, 1, 1], [], []>} : vector<16x4xbf16>, vector<4x16xbf16>, vector<16x16xf32> -> vector<16x16xf32>
    %15 = arith.addf %9, %14 : vector<16x16xf32>
    %c4 = arith.constant 4 : index
    %c0_11 = arith.constant 0 : index
    %16 = vector.load %arg0[%c4, %c0_11] : memref<20x4xf32, #tpu.memory_space<vmem>>, vector<16x4xf32>
    %17 = arith.truncf %16 : vector<16x4xf32> to vector<16x4xbf16>
    %c2_12 = arith.constant 2 : index
    %c0_13 = arith.constant 0 : index
    %c0_14 = arith.constant 0 : index
    %18 = vector.load %arg1[%c2_12, %c0_13, %c0_14] : memref<3x4x16xbf16, #tpu.memory_space<vmem>>, vector<1x4x16xbf16>
    %19 = vector.shape_cast %18 : vector<1x4x16xbf16> to vector<4x16xbf16>
    %cst_15 = arith.constant dense<0.000000e+00> : vector<16x16xf32>
    %20 = tpu.matmul %17, %19, %cst_15 {dimension_numbers = #tpu.dot_dimension_numbers<[1], [0], [0], [1], [0, 0, 1, 1], [], []>} : vector<16x4xbf16>, vector<4x16xbf16>, vector<16x16xf32> -> vector<16x16xf32>
    %21 = arith.addf %15, %20 : vector<16x16xf32>
    %22 = arith.truncf %21 : vector<16x16xf32> to vector<16x16xbf16>
    %c0_16 = arith.constant 0 : index
    %c0_17 = arith.constant 0 : index
    %23 = vector.load %arg4[%c0_16, %c0_17] : memref<16x384xbf16, #tpu.memory_space<vmem>>, vector<16x384xbf16>
    %cst_18 = arith.constant dense<0.000000e+00> : vector<16x384xf32>
    %24 = tpu.matmul %22, %23, %cst_18 {dimension_numbers = #tpu.dot_dimension_numbers<[1], [0], [0], [1], [0, 0, 1, 1], [], []>} : vector<16x16xbf16>, vector<16x384xbf16>, vector<16x384xf32> -> vector<16x384xf32>
    %c0_19 = arith.constant 0 : index
    %c0_20 = arith.constant 0 : index
    %25 = vector.load %arg6[%c0_19, %c0_20] : memref<1x384xf32, #tpu.memory_space<vmem>>, vector<1x384xf32>
    %26 = vector.broadcast %25 : vector<1x384xf32> to vector<16x384xf32>
    %27 = arith.addf %24, %26 : vector<16x384xf32>
    %c0_21 = arith.constant 0 : index
    %c0_22 = arith.constant 0 : index
    %28 = vector.load %arg7[%c0_21, %c0_22] : memref<1x384xf32, #tpu.memory_space<vmem>>, vector<1x384xf32>
    %29 = vector.shape_cast %28 : vector<1x384xf32> to vector<1x384xf32>
    %30 = vector.broadcast %29 : vector<1x384xf32> to vector<2x384xf32>
    %cst_23 = arith.constant 0.000000e+00 : f32
    %31 = vector.broadcast %cst_23 : f32 to vector<2x128xf32>
    %32 = vector.extract_strided_slice %27 {offsets = [0, 0], sizes = [2, 384], strides = [1, 1]} : vector<16x384xf32> to vector<2x384xf32>
    %33 = arith.truncf %31 : vector<2x128xf32> to vector<2x128xbf16>
    %c0_24 = arith.constant 0 : index
    %c0_25 = arith.constant 0 : index
    %34 = vector.load %arg5[%c0_24, %c0_25] : memref<128x384xbf16, #tpu.memory_space<vmem>>, vector<128x384xbf16>
    %cst_26 = arith.constant dense<0.000000e+00> : vector<2x384xf32>
    %35 = tpu.matmul %33, %34, %cst_26 {dimension_numbers = #tpu.dot_dimension_numbers<[1], [0], [0], [1], [0, 0, 1, 1], [], []>} : vector<2x128xbf16>, vector<128x384xbf16>, vector<2x384xf32> -> vector<2x384xf32>
    %36 = arith.addf %35, %30 : vector<2x384xf32>
    %37 = vector.extract_strided_slice %32 {offsets = [0, 0], sizes = [2, 128], strides = [1, 1]} : vector<2x384xf32> to vector<2x128xf32>
    %38 = vector.extract_strided_slice %36 {offsets = [0, 0], sizes = [2, 128], strides = [1, 1]} : vector<2x384xf32> to vector<2x128xf32>
    %39 = arith.addf %37, %38 : vector<2x128xf32>
    %40 = arith.negf %39 : vector<2x128xf32>
    %41 = math.exp %40 : vector<2x128xf32>
    %cst_27 = arith.constant 1.000000e+00 : f32
    %42 = vector.broadcast %cst_27 : f32 to vector<2x128xf32>
    %43 = arith.addf %42, %41 : vector<2x128xf32>
    %44 = arith.divf %42, %43 : vector<2x128xf32>
    %45 = vector.extract_strided_slice %32 {offsets = [0, 128], sizes = [2, 128], strides = [1, 1]} : vector<2x384xf32> to vector<2x128xf32>
    %46 = vector.extract_strided_slice %36 {offsets = [0, 128], sizes = [2, 128], strides = [1, 1]} : vector<2x384xf32> to vector<2x128xf32>
    %47 = arith.addf %45, %46 : vector<2x128xf32>
    %48 = arith.negf %47 : vector<2x128xf32>
    %49 = math.exp %48 : vector<2x128xf32>
    %cst_28 = arith.constant 1.000000e+00 : f32
    %50 = vector.broadcast %cst_28 : f32 to vector<2x128xf32>
    %51 = arith.addf %50, %49 : vector<2x128xf32>
    %52 = arith.divf %50, %51 : vector<2x128xf32>
    %53 = vector.extract_strided_slice %32 {offsets = [0, 256], sizes = [2, 128], strides = [1, 1]} : vector<2x384xf32> to vector<2x128xf32>
    %54 = vector.extract_strided_slice %36 {offsets = [0, 256], sizes = [2, 128], strides = [1, 1]} : vector<2x384xf32> to vector<2x128xf32>
    %55 = arith.mulf %44, %54 : vector<2x128xf32>
    %56 = arith.addf %53, %55 : vector<2x128xf32>
    %57 = math.tanh %56 : vector<2x128xf32>
    %cst_29 = arith.constant 1.000000e+00 : f32
    %58 = vector.broadcast %cst_29 : f32 to vector<2x128xf32>
    %59 = arith.subf %58, %52 : vector<2x128xf32>
    %60 = arith.mulf %59, %57 : vector<2x128xf32>
    %61 = arith.mulf %52, %31 : vector<2x128xf32>
    %62 = arith.addf %60, %61 : vector<2x128xf32>
    %63 = vector.extract_strided_slice %27 {offsets = [2, 0], sizes = [2, 384], strides = [1, 1]} : vector<16x384xf32> to vector<2x384xf32>
    %64 = arith.truncf %62 : vector<2x128xf32> to vector<2x128xbf16>
    %c0_30 = arith.constant 0 : index
    %c0_31 = arith.constant 0 : index
    %65 = vector.load %arg5[%c0_30, %c0_31] : memref<128x384xbf16, #tpu.memory_space<vmem>>, vector<128x384xbf16>
    %cst_32 = arith.constant dense<0.000000e+00> : vector<2x384xf32>
    %66 = tpu.matmul %64, %65, %cst_32 {dimension_numbers = #tpu.dot_dimension_numbers<[1], [0], [0], [1], [0, 0, 1, 1], [], []>} : vector<2x128xbf16>, vector<128x384xbf16>, vector<2x384xf32> -> vector<2x384xf32>
    %67 = arith.addf %66, %30 : vector<2x384xf32>
    %68 = vector.extract_strided_slice %63 {offsets = [0, 0], sizes = [2, 128], strides = [1, 1]} : vector<2x384xf32> to vector<2x128xf32>
    %69 = vector.extract_strided_slice %67 {offsets = [0, 0], sizes = [2, 128], strides = [1, 1]} : vector<2x384xf32> to vector<2x128xf32>
    %70 = arith.addf %68, %69 : vector<2x128xf32>
    %71 = arith.negf %70 : vector<2x128xf32>
    %72 = math.exp %71 : vector<2x128xf32>
    %cst_33 = arith.constant 1.000000e+00 : f32
    %73 = vector.broadcast %cst_33 : f32 to vector<2x128xf32>
    %74 = arith.addf %73, %72 : vector<2x128xf32>
    %75 = arith.divf %73, %74 : vector<2x128xf32>
    %76 = vector.extract_strided_slice %63 {offsets = [0, 128], sizes = [2, 128], strides = [1, 1]} : vector<2x384xf32> to vector<2x128xf32>
    %77 = vector.extract_strided_slice %67 {offsets = [0, 128], sizes = [2, 128], strides = [1, 1]} : vector<2x384xf32> to vector<2x128xf32>
    %78 = arith.addf %76, %77 : vector<2x128xf32>
    %79 = arith.negf %78 : vector<2x128xf32>
    %80 = math.exp %79 : vector<2x128xf32>
    %cst_34 = arith.constant 1.000000e+00 : f32
    %81 = vector.broadcast %cst_34 : f32 to vector<2x128xf32>
    %82 = arith.addf %81, %80 : vector<2x128xf32>
    %83 = arith.divf %81, %82 : vector<2x128xf32>
    %84 = vector.extract_strided_slice %63 {offsets = [0, 256], sizes = [2, 128], strides = [1, 1]} : vector<2x384xf32> to vector<2x128xf32>
    %85 = vector.extract_strided_slice %67 {offsets = [0, 256], sizes = [2, 128], strides = [1, 1]} : vector<2x384xf32> to vector<2x128xf32>
    %86 = arith.mulf %75, %85 : vector<2x128xf32>
    %87 = arith.addf %84, %86 : vector<2x128xf32>
    %88 = math.tanh %87 : vector<2x128xf32>
    %cst_35 = arith.constant 1.000000e+00 : f32
    %89 = vector.broadcast %cst_35 : f32 to vector<2x128xf32>
    %90 = arith.subf %89, %83 : vector<2x128xf32>
    %91 = arith.mulf %90, %88 : vector<2x128xf32>
    %92 = arith.mulf %83, %62 : vector<2x128xf32>
    %93 = arith.addf %91, %92 : vector<2x128xf32>
    %94 = vector.extract_strided_slice %27 {offsets = [4, 0], sizes = [2, 384], strides = [1, 1]} : vector<16x384xf32> to vector<2x384xf32>
    %95 = arith.truncf %93 : vector<2x128xf32> to vector<2x128xbf16>
    %c0_36 = arith.constant 0 : index
    %c0_37 = arith.constant 0 : index
    %96 = vector.load %arg5[%c0_36, %c0_37] : memref<128x384xbf16, #tpu.memory_space<vmem>>, vector<128x384xbf16>
    %cst_38 = arith.constant dense<0.000000e+00> : vector<2x384xf32>
    %97 = tpu.matmul %95, %96, %cst_38 {dimension_numbers = #tpu.dot_dimension_numbers<[1], [0], [0], [1], [0, 0, 1, 1], [], []>} : vector<2x128xbf16>, vector<128x384xbf16>, vector<2x384xf32> -> vector<2x384xf32>
    %98 = arith.addf %97, %30 : vector<2x384xf32>
    %99 = vector.extract_strided_slice %94 {offsets = [0, 0], sizes = [2, 128], strides = [1, 1]} : vector<2x384xf32> to vector<2x128xf32>
    %100 = vector.extract_strided_slice %98 {offsets = [0, 0], sizes = [2, 128], strides = [1, 1]} : vector<2x384xf32> to vector<2x128xf32>
    %101 = arith.addf %99, %100 : vector<2x128xf32>
    %102 = arith.negf %101 : vector<2x128xf32>
    %103 = math.exp %102 : vector<2x128xf32>
    %cst_39 = arith.constant 1.000000e+00 : f32
    %104 = vector.broadcast %cst_39 : f32 to vector<2x128xf32>
    %105 = arith.addf %104, %103 : vector<2x128xf32>
    %106 = arith.divf %104, %105 : vector<2x128xf32>
    %107 = vector.extract_strided_slice %94 {offsets = [0, 128], sizes = [2, 128], strides = [1, 1]} : vector<2x384xf32> to vector<2x128xf32>
    %108 = vector.extract_strided_slice %98 {offsets = [0, 128], sizes = [2, 128], strides = [1, 1]} : vector<2x384xf32> to vector<2x128xf32>
    %109 = arith.addf %107, %108 : vector<2x128xf32>
    %110 = arith.negf %109 : vector<2x128xf32>
    %111 = math.exp %110 : vector<2x128xf32>
    %cst_40 = arith.constant 1.000000e+00 : f32
    %112 = vector.broadcast %cst_40 : f32 to vector<2x128xf32>
    %113 = arith.addf %112, %111 : vector<2x128xf32>
    %114 = arith.divf %112, %113 : vector<2x128xf32>
    %115 = vector.extract_strided_slice %94 {offsets = [0, 256], sizes = [2, 128], strides = [1, 1]} : vector<2x384xf32> to vector<2x128xf32>
    %116 = vector.extract_strided_slice %98 {offsets = [0, 256], sizes = [2, 128], strides = [1, 1]} : vector<2x384xf32> to vector<2x128xf32>
    %117 = arith.mulf %106, %116 : vector<2x128xf32>
    %118 = arith.addf %115, %117 : vector<2x128xf32>
    %119 = math.tanh %118 : vector<2x128xf32>
    %cst_41 = arith.constant 1.000000e+00 : f32
    %120 = vector.broadcast %cst_41 : f32 to vector<2x128xf32>
    %121 = arith.subf %120, %114 : vector<2x128xf32>
    %122 = arith.mulf %121, %119 : vector<2x128xf32>
    %123 = arith.mulf %114, %93 : vector<2x128xf32>
    %124 = arith.addf %122, %123 : vector<2x128xf32>
    %125 = vector.extract_strided_slice %27 {offsets = [6, 0], sizes = [2, 384], strides = [1, 1]} : vector<16x384xf32> to vector<2x384xf32>
    %126 = arith.truncf %124 : vector<2x128xf32> to vector<2x128xbf16>
    %c0_42 = arith.constant 0 : index
    %c0_43 = arith.constant 0 : index
    %127 = vector.load %arg5[%c0_42, %c0_43] : memref<128x384xbf16, #tpu.memory_space<vmem>>, vector<128x384xbf16>
    %cst_44 = arith.constant dense<0.000000e+00> : vector<2x384xf32>
    %128 = tpu.matmul %126, %127, %cst_44 {dimension_numbers = #tpu.dot_dimension_numbers<[1], [0], [0], [1], [0, 0, 1, 1], [], []>} : vector<2x128xbf16>, vector<128x384xbf16>, vector<2x384xf32> -> vector<2x384xf32>
    %129 = arith.addf %128, %30 : vector<2x384xf32>
    %130 = vector.extract_strided_slice %125 {offsets = [0, 0], sizes = [2, 128], strides = [1, 1]} : vector<2x384xf32> to vector<2x128xf32>
    %131 = vector.extract_strided_slice %129 {offsets = [0, 0], sizes = [2, 128], strides = [1, 1]} : vector<2x384xf32> to vector<2x128xf32>
    %132 = arith.addf %130, %131 : vector<2x128xf32>
    %133 = arith.negf %132 : vector<2x128xf32>
    %134 = math.exp %133 : vector<2x128xf32>
    %cst_45 = arith.constant 1.000000e+00 : f32
    %135 = vector.broadcast %cst_45 : f32 to vector<2x128xf32>
    %136 = arith.addf %135, %134 : vector<2x128xf32>
    %137 = arith.divf %135, %136 : vector<2x128xf32>
    %138 = vector.extract_strided_slice %125 {offsets = [0, 128], sizes = [2, 128], strides = [1, 1]} : vector<2x384xf32> to vector<2x128xf32>
    %139 = vector.extract_strided_slice %129 {offsets = [0, 128], sizes = [2, 128], strides = [1, 1]} : vector<2x384xf32> to vector<2x128xf32>
    %140 = arith.addf %138, %139 : vector<2x128xf32>
    %141 = arith.negf %140 : vector<2x128xf32>
    %142 = math.exp %141 : vector<2x128xf32>
    %cst_46 = arith.constant 1.000000e+00 : f32
    %143 = vector.broadcast %cst_46 : f32 to vector<2x128xf32>
    %144 = arith.addf %143, %142 : vector<2x128xf32>
    %145 = arith.divf %143, %144 : vector<2x128xf32>
    %146 = vector.extract_strided_slice %125 {offsets = [0, 256], sizes = [2, 128], strides = [1, 1]} : vector<2x384xf32> to vector<2x128xf32>
    %147 = vector.extract_strided_slice %129 {offsets = [0, 256], sizes = [2, 128], strides = [1, 1]} : vector<2x384xf32> to vector<2x128xf32>
    %148 = arith.mulf %137, %147 : vector<2x128xf32>
    %149 = arith.addf %146, %148 : vector<2x128xf32>
    %150 = math.tanh %149 : vector<2x128xf32>
    %cst_47 = arith.constant 1.000000e+00 : f32
    %151 = vector.broadcast %cst_47 : f32 to vector<2x128xf32>
    %152 = arith.subf %151, %145 : vector<2x128xf32>
    %153 = arith.mulf %152, %150 : vector<2x128xf32>
    %154 = arith.mulf %145, %124 : vector<2x128xf32>
    %155 = arith.addf %153, %154 : vector<2x128xf32>
    %156 = vector.extract_strided_slice %27 {offsets = [8, 0], sizes = [2, 384], strides = [1, 1]} : vector<16x384xf32> to vector<2x384xf32>
    %157 = arith.truncf %155 : vector<2x128xf32> to vector<2x128xbf16>
    %c0_48 = arith.constant 0 : index
    %c0_49 = arith.constant 0 : index
    %158 = vector.load %arg5[%c0_48, %c0_49] : memref<128x384xbf16, #tpu.memory_space<vmem>>, vector<128x384xbf16>
    %cst_50 = arith.constant dense<0.000000e+00> : vector<2x384xf32>
    %159 = tpu.matmul %157, %158, %cst_50 {dimension_numbers = #tpu.dot_dimension_numbers<[1], [0], [0], [1], [0, 0, 1, 1], [], []>} : vector<2x128xbf16>, vector<128x384xbf16>, vector<2x384xf32> -> vector<2x384xf32>
    %160 = arith.addf %159, %30 : vector<2x384xf32>
    %161 = vector.extract_strided_slice %156 {offsets = [0, 0], sizes = [2, 128], strides = [1, 1]} : vector<2x384xf32> to vector<2x128xf32>
    %162 = vector.extract_strided_slice %160 {offsets = [0, 0], sizes = [2, 128], strides = [1, 1]} : vector<2x384xf32> to vector<2x128xf32>
    %163 = arith.addf %161, %162 : vector<2x128xf32>
    %164 = arith.negf %163 : vector<2x128xf32>
    %165 = math.exp %164 : vector<2x128xf32>
    %cst_51 = arith.constant 1.000000e+00 : f32
    %166 = vector.broadcast %cst_51 : f32 to vector<2x128xf32>
    %167 = arith.addf %166, %165 : vector<2x128xf32>
    %168 = arith.divf %166, %167 : vector<2x128xf32>
    %169 = vector.extract_strided_slice %156 {offsets = [0, 128], sizes = [2, 128], strides = [1, 1]} : vector<2x384xf32> to vector<2x128xf32>
    %170 = vector.extract_strided_slice %160 {offsets = [0, 128], sizes = [2, 128], strides = [1, 1]} : vector<2x384xf32> to vector<2x128xf32>
    %171 = arith.addf %169, %170 : vector<2x128xf32>
    %172 = arith.negf %171 : vector<2x128xf32>
    %173 = math.exp %172 : vector<2x128xf32>
    %cst_52 = arith.constant 1.000000e+00 : f32
    %174 = vector.broadcast %cst_52 : f32 to vector<2x128xf32>
    %175 = arith.addf %174, %173 : vector<2x128xf32>
    %176 = arith.divf %174, %175 : vector<2x128xf32>
    %177 = vector.extract_strided_slice %156 {offsets = [0, 256], sizes = [2, 128], strides = [1, 1]} : vector<2x384xf32> to vector<2x128xf32>
    %178 = vector.extract_strided_slice %160 {offsets = [0, 256], sizes = [2, 128], strides = [1, 1]} : vector<2x384xf32> to vector<2x128xf32>
    %179 = arith.mulf %168, %178 : vector<2x128xf32>
    %180 = arith.addf %177, %179 : vector<2x128xf32>
    %181 = math.tanh %180 : vector<2x128xf32>
    %cst_53 = arith.constant 1.000000e+00 : f32
    %182 = vector.broadcast %cst_53 : f32 to vector<2x128xf32>
    %183 = arith.subf %182, %176 : vector<2x128xf32>
    %184 = arith.mulf %183, %181 : vector<2x128xf32>
    %185 = arith.mulf %176, %155 : vector<2x128xf32>
    %186 = arith.addf %184, %185 : vector<2x128xf32>
    %187 = vector.extract_strided_slice %27 {offsets = [10, 0], sizes = [2, 384], strides = [1, 1]} : vector<16x384xf32> to vector<2x384xf32>
    %188 = arith.truncf %186 : vector<2x128xf32> to vector<2x128xbf16>
    %c0_54 = arith.constant 0 : index
    %c0_55 = arith.constant 0 : index
    %189 = vector.load %arg5[%c0_54, %c0_55] : memref<128x384xbf16, #tpu.memory_space<vmem>>, vector<128x384xbf16>
    %cst_56 = arith.constant dense<0.000000e+00> : vector<2x384xf32>
    %190 = tpu.matmul %188, %189, %cst_56 {dimension_numbers = #tpu.dot_dimension_numbers<[1], [0], [0], [1], [0, 0, 1, 1], [], []>} : vector<2x128xbf16>, vector<128x384xbf16>, vector<2x384xf32> -> vector<2x384xf32>
    %191 = arith.addf %190, %30 : vector<2x384xf32>
    %192 = vector.extract_strided_slice %187 {offsets = [0, 0], sizes = [2, 128], strides = [1, 1]} : vector<2x384xf32> to vector<2x128xf32>
    %193 = vector.extract_strided_slice %191 {offsets = [0, 0], sizes = [2, 128], strides = [1, 1]} : vector<2x384xf32> to vector<2x128xf32>
    %194 = arith.addf %192, %193 : vector<2x128xf32>
    %195 = arith.negf %194 : vector<2x128xf32>
    %196 = math.exp %195 : vector<2x128xf32>
    %cst_57 = arith.constant 1.000000e+00 : f32
    %197 = vector.broadcast %cst_57 : f32 to vector<2x128xf32>
    %198 = arith.addf %197, %196 : vector<2x128xf32>
    %199 = arith.divf %197, %198 : vector<2x128xf32>
    %200 = vector.extract_strided_slice %187 {offsets = [0, 128], sizes = [2, 128], strides = [1, 1]} : vector<2x384xf32> to vector<2x128xf32>
    %201 = vector.extract_strided_slice %191 {offsets = [0, 128], sizes = [2, 128], strides = [1, 1]} : vector<2x384xf32> to vector<2x128xf32>
    %202 = arith.addf %200, %201 : vector<2x128xf32>
    %203 = arith.negf %202 : vector<2x128xf32>
    %204 = math.exp %203 : vector<2x128xf32>
    %cst_58 = arith.constant 1.000000e+00 : f32
    %205 = vector.broadcast %cst_58 : f32 to vector<2x128xf32>
    %206 = arith.addf %205, %204 : vector<2x128xf32>
    %207 = arith.divf %205, %206 : vector<2x128xf32>
    %208 = vector.extract_strided_slice %187 {offsets = [0, 256], sizes = [2, 128], strides = [1, 1]} : vector<2x384xf32> to vector<2x128xf32>
    %209 = vector.extract_strided_slice %191 {offsets = [0, 256], sizes = [2, 128], strides = [1, 1]} : vector<2x384xf32> to vector<2x128xf32>
    %210 = arith.mulf %199, %209 : vector<2x128xf32>
    %211 = arith.addf %208, %210 : vector<2x128xf32>
    %212 = math.tanh %211 : vector<2x128xf32>
    %cst_59 = arith.constant 1.000000e+00 : f32
    %213 = vector.broadcast %cst_59 : f32 to vector<2x128xf32>
    %214 = arith.subf %213, %207 : vector<2x128xf32>
    %215 = arith.mulf %214, %212 : vector<2x128xf32>
    %216 = arith.mulf %207, %186 : vector<2x128xf32>
    %217 = arith.addf %215, %216 : vector<2x128xf32>
    %218 = vector.extract_strided_slice %27 {offsets = [12, 0], sizes = [2, 384], strides = [1, 1]} : vector<16x384xf32> to vector<2x384xf32>
    %219 = arith.truncf %217 : vector<2x128xf32> to vector<2x128xbf16>
    %c0_60 = arith.constant 0 : index
    %c0_61 = arith.constant 0 : index
    %220 = vector.load %arg5[%c0_60, %c0_61] : memref<128x384xbf16, #tpu.memory_space<vmem>>, vector<128x384xbf16>
    %cst_62 = arith.constant dense<0.000000e+00> : vector<2x384xf32>
    %221 = tpu.matmul %219, %220, %cst_62 {dimension_numbers = #tpu.dot_dimension_numbers<[1], [0], [0], [1], [0, 0, 1, 1], [], []>} : vector<2x128xbf16>, vector<128x384xbf16>, vector<2x384xf32> -> vector<2x384xf32>
    %222 = arith.addf %221, %30 : vector<2x384xf32>
    %223 = vector.extract_strided_slice %218 {offsets = [0, 0], sizes = [2, 128], strides = [1, 1]} : vector<2x384xf32> to vector<2x128xf32>
    %224 = vector.extract_strided_slice %222 {offsets = [0, 0], sizes = [2, 128], strides = [1, 1]} : vector<2x384xf32> to vector<2x128xf32>
    %225 = arith.addf %223, %224 : vector<2x128xf32>
    %226 = arith.negf %225 : vector<2x128xf32>
    %227 = math.exp %226 : vector<2x128xf32>
    %cst_63 = arith.constant 1.000000e+00 : f32
    %228 = vector.broadcast %cst_63 : f32 to vector<2x128xf32>
    %229 = arith.addf %228, %227 : vector<2x128xf32>
    %230 = arith.divf %228, %229 : vector<2x128xf32>
    %231 = vector.extract_strided_slice %218 {offsets = [0, 128], sizes = [2, 128], strides = [1, 1]} : vector<2x384xf32> to vector<2x128xf32>
    %232 = vector.extract_strided_slice %222 {offsets = [0, 128], sizes = [2, 128], strides = [1, 1]} : vector<2x384xf32> to vector<2x128xf32>
    %233 = arith.addf %231, %232 : vector<2x128xf32>
    %234 = arith.negf %233 : vector<2x128xf32>
    %235 = math.exp %234 : vector<2x128xf32>
    %cst_64 = arith.constant 1.000000e+00 : f32
    %236 = vector.broadcast %cst_64 : f32 to vector<2x128xf32>
    %237 = arith.addf %236, %235 : vector<2x128xf32>
    %238 = arith.divf %236, %237 : vector<2x128xf32>
    %239 = vector.extract_strided_slice %218 {offsets = [0, 256], sizes = [2, 128], strides = [1, 1]} : vector<2x384xf32> to vector<2x128xf32>
    %240 = vector.extract_strided_slice %222 {offsets = [0, 256], sizes = [2, 128], strides = [1, 1]} : vector<2x384xf32> to vector<2x128xf32>
    %241 = arith.mulf %230, %240 : vector<2x128xf32>
    %242 = arith.addf %239, %241 : vector<2x128xf32>
    %243 = math.tanh %242 : vector<2x128xf32>
    %cst_65 = arith.constant 1.000000e+00 : f32
    %244 = vector.broadcast %cst_65 : f32 to vector<2x128xf32>
    %245 = arith.subf %244, %238 : vector<2x128xf32>
    %246 = arith.mulf %245, %243 : vector<2x128xf32>
    %247 = arith.mulf %238, %217 : vector<2x128xf32>
    %248 = arith.addf %246, %247 : vector<2x128xf32>
    %249 = vector.extract_strided_slice %27 {offsets = [14, 0], sizes = [2, 384], strides = [1, 1]} : vector<16x384xf32> to vector<2x384xf32>
    %250 = arith.truncf %248 : vector<2x128xf32> to vector<2x128xbf16>
    %c0_66 = arith.constant 0 : index
    %c0_67 = arith.constant 0 : index
    %251 = vector.load %arg5[%c0_66, %c0_67] : memref<128x384xbf16, #tpu.memory_space<vmem>>, vector<128x384xbf16>
    %cst_68 = arith.constant dense<0.000000e+00> : vector<2x384xf32>
    %252 = tpu.matmul %250, %251, %cst_68 {dimension_numbers = #tpu.dot_dimension_numbers<[1], [0], [0], [1], [0, 0, 1, 1], [], []>} : vector<2x128xbf16>, vector<128x384xbf16>, vector<2x384xf32> -> vector<2x384xf32>
    %253 = arith.addf %252, %30 : vector<2x384xf32>
    %254 = vector.extract_strided_slice %249 {offsets = [0, 0], sizes = [2, 128], strides = [1, 1]} : vector<2x384xf32> to vector<2x128xf32>
    %255 = vector.extract_strided_slice %253 {offsets = [0, 0], sizes = [2, 128], strides = [1, 1]} : vector<2x384xf32> to vector<2x128xf32>
    %256 = arith.addf %254, %255 : vector<2x128xf32>
    %257 = arith.negf %256 : vector<2x128xf32>
    %258 = math.exp %257 : vector<2x128xf32>
    %cst_69 = arith.constant 1.000000e+00 : f32
    %259 = vector.broadcast %cst_69 : f32 to vector<2x128xf32>
    %260 = arith.addf %259, %258 : vector<2x128xf32>
    %261 = arith.divf %259, %260 : vector<2x128xf32>
    %262 = vector.extract_strided_slice %249 {offsets = [0, 128], sizes = [2, 128], strides = [1, 1]} : vector<2x384xf32> to vector<2x128xf32>
    %263 = vector.extract_strided_slice %253 {offsets = [0, 128], sizes = [2, 128], strides = [1, 1]} : vector<2x384xf32> to vector<2x128xf32>
    %264 = arith.addf %262, %263 : vector<2x128xf32>
    %265 = arith.negf %264 : vector<2x128xf32>
    %266 = math.exp %265 : vector<2x128xf32>
    %cst_70 = arith.constant 1.000000e+00 : f32
    %267 = vector.broadcast %cst_70 : f32 to vector<2x128xf32>
    %268 = arith.addf %267, %266 : vector<2x128xf32>
    %269 = arith.divf %267, %268 : vector<2x128xf32>
    %270 = vector.extract_strided_slice %249 {offsets = [0, 256], sizes = [2, 128], strides = [1, 1]} : vector<2x384xf32> to vector<2x128xf32>
    %271 = vector.extract_strided_slice %253 {offsets = [0, 256], sizes = [2, 128], strides = [1, 1]} : vector<2x384xf32> to vector<2x128xf32>
    %272 = arith.mulf %261, %271 : vector<2x128xf32>
    %273 = arith.addf %270, %272 : vector<2x128xf32>
    %274 = math.tanh %273 : vector<2x128xf32>
    %cst_71 = arith.constant 1.000000e+00 : f32
    %275 = vector.broadcast %cst_71 : f32 to vector<2x128xf32>
    %276 = arith.subf %275, %269 : vector<2x128xf32>
    %277 = arith.mulf %276, %274 : vector<2x128xf32>
    %278 = arith.mulf %269, %248 : vector<2x128xf32>
    %279 = arith.addf %277, %278 : vector<2x128xf32>
    %280 = tpu.concatenate %62, %93, %124, %155, %186, %217, %248, %279 in 0 : vector<2x128xf32>, vector<2x128xf32>, vector<2x128xf32>, vector<2x128xf32>, vector<2x128xf32>, vector<2x128xf32>, vector<2x128xf32>, vector<2x128xf32> -> vector<16x128xf32>
    %281 = arith.truncf %280 : vector<16x128xf32> to vector<16x128xbf16>
    %c0_72 = arith.constant 0 : index
    %c0_73 = arith.constant 0 : index
    %282 = vector.load %arg8[%c0_72, %c0_73] : memref<128x384xbf16, #tpu.memory_space<vmem>>, vector<128x384xbf16>
    %cst_74 = arith.constant dense<0.000000e+00> : vector<16x384xf32>
    %283 = tpu.matmul %281, %282, %cst_74 {dimension_numbers = #tpu.dot_dimension_numbers<[1], [0], [0], [1], [0, 0, 1, 1], [], []>} : vector<16x128xbf16>, vector<128x384xbf16>, vector<16x384xf32> -> vector<16x384xf32>
    %c0_75 = arith.constant 0 : index
    %c0_76 = arith.constant 0 : index
    %284 = vector.load %arg10[%c0_75, %c0_76] : memref<1x384xf32, #tpu.memory_space<vmem>>, vector<1x384xf32>
    %285 = vector.broadcast %284 : vector<1x384xf32> to vector<16x384xf32>
    %286 = arith.addf %283, %285 : vector<16x384xf32>
    %c0_77 = arith.constant 0 : index
    %c0_78 = arith.constant 0 : index
    %287 = vector.load %arg11[%c0_77, %c0_78] : memref<1x384xf32, #tpu.memory_space<vmem>>, vector<1x384xf32>
    %288 = vector.shape_cast %287 : vector<1x384xf32> to vector<1x384xf32>
    %289 = vector.broadcast %288 : vector<1x384xf32> to vector<2x384xf32>
    %cst_79 = arith.constant 0.000000e+00 : f32
    %290 = vector.broadcast %cst_79 : f32 to vector<2x128xf32>
    %291 = vector.extract_strided_slice %286 {offsets = [0, 0], sizes = [2, 384], strides = [1, 1]} : vector<16x384xf32> to vector<2x384xf32>
    %292 = arith.truncf %290 : vector<2x128xf32> to vector<2x128xbf16>
    %c0_80 = arith.constant 0 : index
    %c0_81 = arith.constant 0 : index
    %293 = vector.load %arg9[%c0_80, %c0_81] : memref<128x384xbf16, #tpu.memory_space<vmem>>, vector<128x384xbf16>
    %cst_82 = arith.constant dense<0.000000e+00> : vector<2x384xf32>
    %294 = tpu.matmul %292, %293, %cst_82 {dimension_numbers = #tpu.dot_dimension_numbers<[1], [0], [0], [1], [0, 0, 1, 1], [], []>} : vector<2x128xbf16>, vector<128x384xbf16>, vector<2x384xf32> -> vector<2x384xf32>
    %295 = arith.addf %294, %289 : vector<2x384xf32>
    %296 = vector.extract_strided_slice %291 {offsets = [0, 0], sizes = [2, 128], strides = [1, 1]} : vector<2x384xf32> to vector<2x128xf32>
    %297 = vector.extract_strided_slice %295 {offsets = [0, 0], sizes = [2, 128], strides = [1, 1]} : vector<2x384xf32> to vector<2x128xf32>
    %298 = arith.addf %296, %297 : vector<2x128xf32>
    %299 = arith.negf %298 : vector<2x128xf32>
    %300 = math.exp %299 : vector<2x128xf32>
    %cst_83 = arith.constant 1.000000e+00 : f32
    %301 = vector.broadcast %cst_83 : f32 to vector<2x128xf32>
    %302 = arith.addf %301, %300 : vector<2x128xf32>
    %303 = arith.divf %301, %302 : vector<2x128xf32>
    %304 = vector.extract_strided_slice %291 {offsets = [0, 128], sizes = [2, 128], strides = [1, 1]} : vector<2x384xf32> to vector<2x128xf32>
    %305 = vector.extract_strided_slice %295 {offsets = [0, 128], sizes = [2, 128], strides = [1, 1]} : vector<2x384xf32> to vector<2x128xf32>
    %306 = arith.addf %304, %305 : vector<2x128xf32>
    %307 = arith.negf %306 : vector<2x128xf32>
    %308 = math.exp %307 : vector<2x128xf32>
    %cst_84 = arith.constant 1.000000e+00 : f32
    %309 = vector.broadcast %cst_84 : f32 to vector<2x128xf32>
    %310 = arith.addf %309, %308 : vector<2x128xf32>
    %311 = arith.divf %309, %310 : vector<2x128xf32>
    %312 = vector.extract_strided_slice %291 {offsets = [0, 256], sizes = [2, 128], strides = [1, 1]} : vector<2x384xf32> to vector<2x128xf32>
    %313 = vector.extract_strided_slice %295 {offsets = [0, 256], sizes = [2, 128], strides = [1, 1]} : vector<2x384xf32> to vector<2x128xf32>
    %314 = arith.mulf %303, %313 : vector<2x128xf32>
    %315 = arith.addf %312, %314 : vector<2x128xf32>
    %316 = math.tanh %315 : vector<2x128xf32>
    %cst_85 = arith.constant 1.000000e+00 : f32
    %317 = vector.broadcast %cst_85 : f32 to vector<2x128xf32>
    %318 = arith.subf %317, %311 : vector<2x128xf32>
    %319 = arith.mulf %318, %316 : vector<2x128xf32>
    %320 = arith.mulf %311, %290 : vector<2x128xf32>
    %321 = arith.addf %319, %320 : vector<2x128xf32>
    %322 = vector.extract_strided_slice %286 {offsets = [2, 0], sizes = [2, 384], strides = [1, 1]} : vector<16x384xf32> to vector<2x384xf32>
    %323 = arith.truncf %321 : vector<2x128xf32> to vector<2x128xbf16>
    %c0_86 = arith.constant 0 : index
    %c0_87 = arith.constant 0 : index
    %324 = vector.load %arg9[%c0_86, %c0_87] : memref<128x384xbf16, #tpu.memory_space<vmem>>, vector<128x384xbf16>
    %cst_88 = arith.constant dense<0.000000e+00> : vector<2x384xf32>
    %325 = tpu.matmul %323, %324, %cst_88 {dimension_numbers = #tpu.dot_dimension_numbers<[1], [0], [0], [1], [0, 0, 1, 1], [], []>} : vector<2x128xbf16>, vector<128x384xbf16>, vector<2x384xf32> -> vector<2x384xf32>
    %326 = arith.addf %325, %289 : vector<2x384xf32>
    %327 = vector.extract_strided_slice %322 {offsets = [0, 0], sizes = [2, 128], strides = [1, 1]} : vector<2x384xf32> to vector<2x128xf32>
    %328 = vector.extract_strided_slice %326 {offsets = [0, 0], sizes = [2, 128], strides = [1, 1]} : vector<2x384xf32> to vector<2x128xf32>
    %329 = arith.addf %327, %328 : vector<2x128xf32>
    %330 = arith.negf %329 : vector<2x128xf32>
    %331 = math.exp %330 : vector<2x128xf32>
    %cst_89 = arith.constant 1.000000e+00 : f32
    %332 = vector.broadcast %cst_89 : f32 to vector<2x128xf32>
    %333 = arith.addf %332, %331 : vector<2x128xf32>
    %334 = arith.divf %332, %333 : vector<2x128xf32>
    %335 = vector.extract_strided_slice %322 {offsets = [0, 128], sizes = [2, 128], strides = [1, 1]} : vector<2x384xf32> to vector<2x128xf32>
    %336 = vector.extract_strided_slice %326 {offsets = [0, 128], sizes = [2, 128], strides = [1, 1]} : vector<2x384xf32> to vector<2x128xf32>
    %337 = arith.addf %335, %336 : vector<2x128xf32>
    %338 = arith.negf %337 : vector<2x128xf32>
    %339 = math.exp %338 : vector<2x128xf32>
    %cst_90 = arith.constant 1.000000e+00 : f32
    %340 = vector.broadcast %cst_90 : f32 to vector<2x128xf32>
    %341 = arith.addf %340, %339 : vector<2x128xf32>
    %342 = arith.divf %340, %341 : vector<2x128xf32>
    %343 = vector.extract_strided_slice %322 {offsets = [0, 256], sizes = [2, 128], strides = [1, 1]} : vector<2x384xf32> to vector<2x128xf32>
    %344 = vector.extract_strided_slice %326 {offsets = [0, 256], sizes = [2, 128], strides = [1, 1]} : vector<2x384xf32> to vector<2x128xf32>
    %345 = arith.mulf %334, %344 : vector<2x128xf32>
    %346 = arith.addf %343, %345 : vector<2x128xf32>
    %347 = math.tanh %346 : vector<2x128xf32>
    %cst_91 = arith.constant 1.000000e+00 : f32
    %348 = vector.broadcast %cst_91 : f32 to vector<2x128xf32>
    %349 = arith.subf %348, %342 : vector<2x128xf32>
    %350 = arith.mulf %349, %347 : vector<2x128xf32>
    %351 = arith.mulf %342, %321 : vector<2x128xf32>
    %352 = arith.addf %350, %351 : vector<2x128xf32>
    %353 = vector.extract_strided_slice %286 {offsets = [4, 0], sizes = [2, 384], strides = [1, 1]} : vector<16x384xf32> to vector<2x384xf32>
    %354 = arith.truncf %352 : vector<2x128xf32> to vector<2x128xbf16>
    %c0_92 = arith.constant 0 : index
    %c0_93 = arith.constant 0 : index
    %355 = vector.load %arg9[%c0_92, %c0_93] : memref<128x384xbf16, #tpu.memory_space<vmem>>, vector<128x384xbf16>
    %cst_94 = arith.constant dense<0.000000e+00> : vector<2x384xf32>
    %356 = tpu.matmul %354, %355, %cst_94 {dimension_numbers = #tpu.dot_dimension_numbers<[1], [0], [0], [1], [0, 0, 1, 1], [], []>} : vector<2x128xbf16>, vector<128x384xbf16>, vector<2x384xf32> -> vector<2x384xf32>
    %357 = arith.addf %356, %289 : vector<2x384xf32>
    %358 = vector.extract_strided_slice %353 {offsets = [0, 0], sizes = [2, 128], strides = [1, 1]} : vector<2x384xf32> to vector<2x128xf32>
    %359 = vector.extract_strided_slice %357 {offsets = [0, 0], sizes = [2, 128], strides = [1, 1]} : vector<2x384xf32> to vector<2x128xf32>
    %360 = arith.addf %358, %359 : vector<2x128xf32>
    %361 = arith.negf %360 : vector<2x128xf32>
    %362 = math.exp %361 : vector<2x128xf32>
    %cst_95 = arith.constant 1.000000e+00 : f32
    %363 = vector.broadcast %cst_95 : f32 to vector<2x128xf32>
    %364 = arith.addf %363, %362 : vector<2x128xf32>
    %365 = arith.divf %363, %364 : vector<2x128xf32>
    %366 = vector.extract_strided_slice %353 {offsets = [0, 128], sizes = [2, 128], strides = [1, 1]} : vector<2x384xf32> to vector<2x128xf32>
    %367 = vector.extract_strided_slice %357 {offsets = [0, 128], sizes = [2, 128], strides = [1, 1]} : vector<2x384xf32> to vector<2x128xf32>
    %368 = arith.addf %366, %367 : vector<2x128xf32>
    %369 = arith.negf %368 : vector<2x128xf32>
    %370 = math.exp %369 : vector<2x128xf32>
    %cst_96 = arith.constant 1.000000e+00 : f32
    %371 = vector.broadcast %cst_96 : f32 to vector<2x128xf32>
    %372 = arith.addf %371, %370 : vector<2x128xf32>
    %373 = arith.divf %371, %372 : vector<2x128xf32>
    %374 = vector.extract_strided_slice %353 {offsets = [0, 256], sizes = [2, 128], strides = [1, 1]} : vector<2x384xf32> to vector<2x128xf32>
    %375 = vector.extract_strided_slice %357 {offsets = [0, 256], sizes = [2, 128], strides = [1, 1]} : vector<2x384xf32> to vector<2x128xf32>
    %376 = arith.mulf %365, %375 : vector<2x128xf32>
    %377 = arith.addf %374, %376 : vector<2x128xf32>
    %378 = math.tanh %377 : vector<2x128xf32>
    %cst_97 = arith.constant 1.000000e+00 : f32
    %379 = vector.broadcast %cst_97 : f32 to vector<2x128xf32>
    %380 = arith.subf %379, %373 : vector<2x128xf32>
    %381 = arith.mulf %380, %378 : vector<2x128xf32>
    %382 = arith.mulf %373, %352 : vector<2x128xf32>
    %383 = arith.addf %381, %382 : vector<2x128xf32>
    %384 = vector.extract_strided_slice %286 {offsets = [6, 0], sizes = [2, 384], strides = [1, 1]} : vector<16x384xf32> to vector<2x384xf32>
    %385 = arith.truncf %383 : vector<2x128xf32> to vector<2x128xbf16>
    %c0_98 = arith.constant 0 : index
    %c0_99 = arith.constant 0 : index
    %386 = vector.load %arg9[%c0_98, %c0_99] : memref<128x384xbf16, #tpu.memory_space<vmem>>, vector<128x384xbf16>
    %cst_100 = arith.constant dense<0.000000e+00> : vector<2x384xf32>
    %387 = tpu.matmul %385, %386, %cst_100 {dimension_numbers = #tpu.dot_dimension_numbers<[1], [0], [0], [1], [0, 0, 1, 1], [], []>} : vector<2x128xbf16>, vector<128x384xbf16>, vector<2x384xf32> -> vector<2x384xf32>
    %388 = arith.addf %387, %289 : vector<2x384xf32>
    %389 = vector.extract_strided_slice %384 {offsets = [0, 0], sizes = [2, 128], strides = [1, 1]} : vector<2x384xf32> to vector<2x128xf32>
    %390 = vector.extract_strided_slice %388 {offsets = [0, 0], sizes = [2, 128], strides = [1, 1]} : vector<2x384xf32> to vector<2x128xf32>
    %391 = arith.addf %389, %390 : vector<2x128xf32>
    %392 = arith.negf %391 : vector<2x128xf32>
    %393 = math.exp %392 : vector<2x128xf32>
    %cst_101 = arith.constant 1.000000e+00 : f32
    %394 = vector.broadcast %cst_101 : f32 to vector<2x128xf32>
    %395 = arith.addf %394, %393 : vector<2x128xf32>
    %396 = arith.divf %394, %395 : vector<2x128xf32>
    %397 = vector.extract_strided_slice %384 {offsets = [0, 128], sizes = [2, 128], strides = [1, 1]} : vector<2x384xf32> to vector<2x128xf32>
    %398 = vector.extract_strided_slice %388 {offsets = [0, 128], sizes = [2, 128], strides = [1, 1]} : vector<2x384xf32> to vector<2x128xf32>
    %399 = arith.addf %397, %398 : vector<2x128xf32>
    %400 = arith.negf %399 : vector<2x128xf32>
    %401 = math.exp %400 : vector<2x128xf32>
    %cst_102 = arith.constant 1.000000e+00 : f32
    %402 = vector.broadcast %cst_102 : f32 to vector<2x128xf32>
    %403 = arith.addf %402, %401 : vector<2x128xf32>
    %404 = arith.divf %402, %403 : vector<2x128xf32>
    %405 = vector.extract_strided_slice %384 {offsets = [0, 256], sizes = [2, 128], strides = [1, 1]} : vector<2x384xf32> to vector<2x128xf32>
    %406 = vector.extract_strided_slice %388 {offsets = [0, 256], sizes = [2, 128], strides = [1, 1]} : vector<2x384xf32> to vector<2x128xf32>
    %407 = arith.mulf %396, %406 : vector<2x128xf32>
    %408 = arith.addf %405, %407 : vector<2x128xf32>
    %409 = math.tanh %408 : vector<2x128xf32>
    %cst_103 = arith.constant 1.000000e+00 : f32
    %410 = vector.broadcast %cst_103 : f32 to vector<2x128xf32>
    %411 = arith.subf %410, %404 : vector<2x128xf32>
    %412 = arith.mulf %411, %409 : vector<2x128xf32>
    %413 = arith.mulf %404, %383 : vector<2x128xf32>
    %414 = arith.addf %412, %413 : vector<2x128xf32>
    %415 = vector.extract_strided_slice %286 {offsets = [8, 0], sizes = [2, 384], strides = [1, 1]} : vector<16x384xf32> to vector<2x384xf32>
    %416 = arith.truncf %414 : vector<2x128xf32> to vector<2x128xbf16>
    %c0_104 = arith.constant 0 : index
    %c0_105 = arith.constant 0 : index
    %417 = vector.load %arg9[%c0_104, %c0_105] : memref<128x384xbf16, #tpu.memory_space<vmem>>, vector<128x384xbf16>
    %cst_106 = arith.constant dense<0.000000e+00> : vector<2x384xf32>
    %418 = tpu.matmul %416, %417, %cst_106 {dimension_numbers = #tpu.dot_dimension_numbers<[1], [0], [0], [1], [0, 0, 1, 1], [], []>} : vector<2x128xbf16>, vector<128x384xbf16>, vector<2x384xf32> -> vector<2x384xf32>
    %419 = arith.addf %418, %289 : vector<2x384xf32>
    %420 = vector.extract_strided_slice %415 {offsets = [0, 0], sizes = [2, 128], strides = [1, 1]} : vector<2x384xf32> to vector<2x128xf32>
    %421 = vector.extract_strided_slice %419 {offsets = [0, 0], sizes = [2, 128], strides = [1, 1]} : vector<2x384xf32> to vector<2x128xf32>
    %422 = arith.addf %420, %421 : vector<2x128xf32>
    %423 = arith.negf %422 : vector<2x128xf32>
    %424 = math.exp %423 : vector<2x128xf32>
    %cst_107 = arith.constant 1.000000e+00 : f32
    %425 = vector.broadcast %cst_107 : f32 to vector<2x128xf32>
    %426 = arith.addf %425, %424 : vector<2x128xf32>
    %427 = arith.divf %425, %426 : vector<2x128xf32>
    %428 = vector.extract_strided_slice %415 {offsets = [0, 128], sizes = [2, 128], strides = [1, 1]} : vector<2x384xf32> to vector<2x128xf32>
    %429 = vector.extract_strided_slice %419 {offsets = [0, 128], sizes = [2, 128], strides = [1, 1]} : vector<2x384xf32> to vector<2x128xf32>
    %430 = arith.addf %428, %429 : vector<2x128xf32>
    %431 = arith.negf %430 : vector<2x128xf32>
    %432 = math.exp %431 : vector<2x128xf32>
    %cst_108 = arith.constant 1.000000e+00 : f32
    %433 = vector.broadcast %cst_108 : f32 to vector<2x128xf32>
    %434 = arith.addf %433, %432 : vector<2x128xf32>
    %435 = arith.divf %433, %434 : vector<2x128xf32>
    %436 = vector.extract_strided_slice %415 {offsets = [0, 256], sizes = [2, 128], strides = [1, 1]} : vector<2x384xf32> to vector<2x128xf32>
    %437 = vector.extract_strided_slice %419 {offsets = [0, 256], sizes = [2, 128], strides = [1, 1]} : vector<2x384xf32> to vector<2x128xf32>
    %438 = arith.mulf %427, %437 : vector<2x128xf32>
    %439 = arith.addf %436, %438 : vector<2x128xf32>
    %440 = math.tanh %439 : vector<2x128xf32>
    %cst_109 = arith.constant 1.000000e+00 : f32
    %441 = vector.broadcast %cst_109 : f32 to vector<2x128xf32>
    %442 = arith.subf %441, %435 : vector<2x128xf32>
    %443 = arith.mulf %442, %440 : vector<2x128xf32>
    %444 = arith.mulf %435, %414 : vector<2x128xf32>
    %445 = arith.addf %443, %444 : vector<2x128xf32>
    %446 = vector.extract_strided_slice %286 {offsets = [10, 0], sizes = [2, 384], strides = [1, 1]} : vector<16x384xf32> to vector<2x384xf32>
    %447 = arith.truncf %445 : vector<2x128xf32> to vector<2x128xbf16>
    %c0_110 = arith.constant 0 : index
    %c0_111 = arith.constant 0 : index
    %448 = vector.load %arg9[%c0_110, %c0_111] : memref<128x384xbf16, #tpu.memory_space<vmem>>, vector<128x384xbf16>
    %cst_112 = arith.constant dense<0.000000e+00> : vector<2x384xf32>
    %449 = tpu.matmul %447, %448, %cst_112 {dimension_numbers = #tpu.dot_dimension_numbers<[1], [0], [0], [1], [0, 0, 1, 1], [], []>} : vector<2x128xbf16>, vector<128x384xbf16>, vector<2x384xf32> -> vector<2x384xf32>
    %450 = arith.addf %449, %289 : vector<2x384xf32>
    %451 = vector.extract_strided_slice %446 {offsets = [0, 0], sizes = [2, 128], strides = [1, 1]} : vector<2x384xf32> to vector<2x128xf32>
    %452 = vector.extract_strided_slice %450 {offsets = [0, 0], sizes = [2, 128], strides = [1, 1]} : vector<2x384xf32> to vector<2x128xf32>
    %453 = arith.addf %451, %452 : vector<2x128xf32>
    %454 = arith.negf %453 : vector<2x128xf32>
    %455 = math.exp %454 : vector<2x128xf32>
    %cst_113 = arith.constant 1.000000e+00 : f32
    %456 = vector.broadcast %cst_113 : f32 to vector<2x128xf32>
    %457 = arith.addf %456, %455 : vector<2x128xf32>
    %458 = arith.divf %456, %457 : vector<2x128xf32>
    %459 = vector.extract_strided_slice %446 {offsets = [0, 128], sizes = [2, 128], strides = [1, 1]} : vector<2x384xf32> to vector<2x128xf32>
    %460 = vector.extract_strided_slice %450 {offsets = [0, 128], sizes = [2, 128], strides = [1, 1]} : vector<2x384xf32> to vector<2x128xf32>
    %461 = arith.addf %459, %460 : vector<2x128xf32>
    %462 = arith.negf %461 : vector<2x128xf32>
    %463 = math.exp %462 : vector<2x128xf32>
    %cst_114 = arith.constant 1.000000e+00 : f32
    %464 = vector.broadcast %cst_114 : f32 to vector<2x128xf32>
    %465 = arith.addf %464, %463 : vector<2x128xf32>
    %466 = arith.divf %464, %465 : vector<2x128xf32>
    %467 = vector.extract_strided_slice %446 {offsets = [0, 256], sizes = [2, 128], strides = [1, 1]} : vector<2x384xf32> to vector<2x128xf32>
    %468 = vector.extract_strided_slice %450 {offsets = [0, 256], sizes = [2, 128], strides = [1, 1]} : vector<2x384xf32> to vector<2x128xf32>
    %469 = arith.mulf %458, %468 : vector<2x128xf32>
    %470 = arith.addf %467, %469 : vector<2x128xf32>
    %471 = math.tanh %470 : vector<2x128xf32>
    %cst_115 = arith.constant 1.000000e+00 : f32
    %472 = vector.broadcast %cst_115 : f32 to vector<2x128xf32>
    %473 = arith.subf %472, %466 : vector<2x128xf32>
    %474 = arith.mulf %473, %471 : vector<2x128xf32>
    %475 = arith.mulf %466, %445 : vector<2x128xf32>
    %476 = arith.addf %474, %475 : vector<2x128xf32>
    %477 = vector.extract_strided_slice %286 {offsets = [12, 0], sizes = [2, 384], strides = [1, 1]} : vector<16x384xf32> to vector<2x384xf32>
    %478 = arith.truncf %476 : vector<2x128xf32> to vector<2x128xbf16>
    %c0_116 = arith.constant 0 : index
    %c0_117 = arith.constant 0 : index
    %479 = vector.load %arg9[%c0_116, %c0_117] : memref<128x384xbf16, #tpu.memory_space<vmem>>, vector<128x384xbf16>
    %cst_118 = arith.constant dense<0.000000e+00> : vector<2x384xf32>
    %480 = tpu.matmul %478, %479, %cst_118 {dimension_numbers = #tpu.dot_dimension_numbers<[1], [0], [0], [1], [0, 0, 1, 1], [], []>} : vector<2x128xbf16>, vector<128x384xbf16>, vector<2x384xf32> -> vector<2x384xf32>
    %481 = arith.addf %480, %289 : vector<2x384xf32>
    %482 = vector.extract_strided_slice %477 {offsets = [0, 0], sizes = [2, 128], strides = [1, 1]} : vector<2x384xf32> to vector<2x128xf32>
    %483 = vector.extract_strided_slice %481 {offsets = [0, 0], sizes = [2, 128], strides = [1, 1]} : vector<2x384xf32> to vector<2x128xf32>
    %484 = arith.addf %482, %483 : vector<2x128xf32>
    %485 = arith.negf %484 : vector<2x128xf32>
    %486 = math.exp %485 : vector<2x128xf32>
    %cst_119 = arith.constant 1.000000e+00 : f32
    %487 = vector.broadcast %cst_119 : f32 to vector<2x128xf32>
    %488 = arith.addf %487, %486 : vector<2x128xf32>
    %489 = arith.divf %487, %488 : vector<2x128xf32>
    %490 = vector.extract_strided_slice %477 {offsets = [0, 128], sizes = [2, 128], strides = [1, 1]} : vector<2x384xf32> to vector<2x128xf32>
    %491 = vector.extract_strided_slice %481 {offsets = [0, 128], sizes = [2, 128], strides = [1, 1]} : vector<2x384xf32> to vector<2x128xf32>
    %492 = arith.addf %490, %491 : vector<2x128xf32>
    %493 = arith.negf %492 : vector<2x128xf32>
    %494 = math.exp %493 : vector<2x128xf32>
    %cst_120 = arith.constant 1.000000e+00 : f32
    %495 = vector.broadcast %cst_120 : f32 to vector<2x128xf32>
    %496 = arith.addf %495, %494 : vector<2x128xf32>
    %497 = arith.divf %495, %496 : vector<2x128xf32>
    %498 = vector.extract_strided_slice %477 {offsets = [0, 256], sizes = [2, 128], strides = [1, 1]} : vector<2x384xf32> to vector<2x128xf32>
    %499 = vector.extract_strided_slice %481 {offsets = [0, 256], sizes = [2, 128], strides = [1, 1]} : vector<2x384xf32> to vector<2x128xf32>
    %500 = arith.mulf %489, %499 : vector<2x128xf32>
    %501 = arith.addf %498, %500 : vector<2x128xf32>
    %502 = math.tanh %501 : vector<2x128xf32>
    %cst_121 = arith.constant 1.000000e+00 : f32
    %503 = vector.broadcast %cst_121 : f32 to vector<2x128xf32>
    %504 = arith.subf %503, %497 : vector<2x128xf32>
    %505 = arith.mulf %504, %502 : vector<2x128xf32>
    %506 = arith.mulf %497, %476 : vector<2x128xf32>
    %507 = arith.addf %505, %506 : vector<2x128xf32>
    %508 = vector.extract_strided_slice %286 {offsets = [14, 0], sizes = [2, 384], strides = [1, 1]} : vector<16x384xf32> to vector<2x384xf32>
    %509 = arith.truncf %507 : vector<2x128xf32> to vector<2x128xbf16>
    %c0_122 = arith.constant 0 : index
    %c0_123 = arith.constant 0 : index
    %510 = vector.load %arg9[%c0_122, %c0_123] : memref<128x384xbf16, #tpu.memory_space<vmem>>, vector<128x384xbf16>
    %cst_124 = arith.constant dense<0.000000e+00> : vector<2x384xf32>
    %511 = tpu.matmul %509, %510, %cst_124 {dimension_numbers = #tpu.dot_dimension_numbers<[1], [0], [0], [1], [0, 0, 1, 1], [], []>} : vector<2x128xbf16>, vector<128x384xbf16>, vector<2x384xf32> -> vector<2x384xf32>
    %512 = arith.addf %511, %289 : vector<2x384xf32>
    %513 = vector.extract_strided_slice %508 {offsets = [0, 0], sizes = [2, 128], strides = [1, 1]} : vector<2x384xf32> to vector<2x128xf32>
    %514 = vector.extract_strided_slice %512 {offsets = [0, 0], sizes = [2, 128], strides = [1, 1]} : vector<2x384xf32> to vector<2x128xf32>
    %515 = arith.addf %513, %514 : vector<2x128xf32>
    %516 = arith.negf %515 : vector<2x128xf32>
    %517 = math.exp %516 : vector<2x128xf32>
    %cst_125 = arith.constant 1.000000e+00 : f32
    %518 = vector.broadcast %cst_125 : f32 to vector<2x128xf32>
    %519 = arith.addf %518, %517 : vector<2x128xf32>
    %520 = arith.divf %518, %519 : vector<2x128xf32>
    %521 = vector.extract_strided_slice %508 {offsets = [0, 128], sizes = [2, 128], strides = [1, 1]} : vector<2x384xf32> to vector<2x128xf32>
    %522 = vector.extract_strided_slice %512 {offsets = [0, 128], sizes = [2, 128], strides = [1, 1]} : vector<2x384xf32> to vector<2x128xf32>
    %523 = arith.addf %521, %522 : vector<2x128xf32>
    %524 = arith.negf %523 : vector<2x128xf32>
    %525 = math.exp %524 : vector<2x128xf32>
    %cst_126 = arith.constant 1.000000e+00 : f32
    %526 = vector.broadcast %cst_126 : f32 to vector<2x128xf32>
    %527 = arith.addf %526, %525 : vector<2x128xf32>
    %528 = arith.divf %526, %527 : vector<2x128xf32>
    %529 = vector.extract_strided_slice %508 {offsets = [0, 256], sizes = [2, 128], strides = [1, 1]} : vector<2x384xf32> to vector<2x128xf32>
    %530 = vector.extract_strided_slice %512 {offsets = [0, 256], sizes = [2, 128], strides = [1, 1]} : vector<2x384xf32> to vector<2x128xf32>
    %531 = arith.mulf %520, %530 : vector<2x128xf32>
    %532 = arith.addf %529, %531 : vector<2x128xf32>
    %533 = math.tanh %532 : vector<2x128xf32>
    %cst_127 = arith.constant 1.000000e+00 : f32
    %534 = vector.broadcast %cst_127 : f32 to vector<2x128xf32>
    %535 = arith.subf %534, %528 : vector<2x128xf32>
    %536 = arith.mulf %535, %533 : vector<2x128xf32>
    %537 = arith.mulf %528, %507 : vector<2x128xf32>
    %538 = arith.addf %536, %537 : vector<2x128xf32>
    %539 = tpu.concatenate %321, %352, %383, %414, %445, %476, %507, %538 in 0 : vector<2x128xf32>, vector<2x128xf32>, vector<2x128xf32>, vector<2x128xf32>, vector<2x128xf32>, vector<2x128xf32>, vector<2x128xf32>, vector<2x128xf32> -> vector<16x128xf32>
    %540 = arith.truncf %539 : vector<16x128xf32> to vector<16x128xbf16>
    %c0_128 = arith.constant 0 : index
    %c0_129 = arith.constant 0 : index
    %541 = vector.load %arg3[%c0_128, %c0_129] : memref<128x128xbf16, #tpu.memory_space<vmem>>, vector<128x128xbf16>
    %cst_130 = arith.constant dense<0.000000e+00> : vector<16x128xf32>
    %542 = tpu.matmul %540, %541, %cst_130 {dimension_numbers = #tpu.dot_dimension_numbers<[1], [0], [0], [1], [0, 0, 1, 1], [], []>} : vector<16x128xbf16>, vector<128x128xbf16>, vector<16x128xf32> -> vector<16x128xf32>
    %cst_131 = arith.constant 0.333333343 : f32
    %543 = vector.broadcast %cst_131 : f32 to vector<16x128xf32>
    %544 = arith.mulf %542, %543 : vector<16x128xf32>
    %c0_132 = arith.constant 0 : index
    %c0_133 = arith.constant 0 : index
    %545 = vector.load %arg12[%c0_132, %c0_133] : memref<16x128xf32, #tpu.memory_space<vmem>>, vector<16x128xf32>
    tpu.vector_store %arg12[%c0_132, %c0_133], %544 {strides = array<i32>} : memref<16x128xf32, #tpu.memory_space<vmem>>, vector<16x128xf32>,
    return
  }
}

</mosaic_0001>

<llo_original>
// kernel: cnn_krnn_forward.1
$region0: #{cnn_krnn_forward.1}
  #allocation0 [shape = 'u32[]', space=smem, size = 0x4, offset = 0x4, fixed_abs, tag = 'smem constant byte address 0x4 - core index']
  #allocation1 [shape = 'u32[72,128]{1,0:T(1,128)}', space=vmem, size = 0x9000, scoped, tag = 'internal scratch']
  %s0 = inlined_call_operand.vmem [shape: f32[20,4], index: 0, kind: input, shape index: {}]
  %s1 = inlined_call_operand.vmem [shape: bf16[3,4,16], index: 1, kind: input, shape index: {}]
  %s2 = inlined_call_operand.vmem [shape: f32[1,16], index: 2, kind: input, shape index: {}]
  %s3 = inlined_call_operand.vmem [shape: bf16[128,128], index: 3, kind: input, shape index: {}]
  %s4 = inlined_call_operand.vmem [shape: bf16[16,384], index: 4, kind: input, shape index: {}]
  %s5 = inlined_call_operand.hbm [shape: bf16[128,384], index: 5, kind: input, shape index: {}]
  %s6 = inlined_call_operand.vmem [shape: f32[1,384], index: 6, kind: input, shape index: {}]
  %s7 = inlined_call_operand.vmem [shape: f32[1,384], index: 7, kind: input, shape index: {}]
  %s8 = inlined_call_operand.hbm [shape: bf16[128,384], index: 8, kind: input, shape index: {}]
  %s9 = inlined_call_operand.hbm [shape: bf16[128,384], index: 9, kind: input, shape index: {}]
  %s10 = inlined_call_operand.vmem [shape: f32[1,384], index: 10, kind: input, shape index: {}]
  %s11 = inlined_call_operand.vmem [shape: f32[1,384], index: 11, kind: input, shape index: {}]
  %s12 = inlined_call_operand.vmem [shape: f32[16,128], index: 12, kind: output, shape index: {}]
  %s13 = sld [smem:[#allocation0]]
  $region70: #{cnn_krnn_forward.1} parent=0
    _
  %s15 = ssub.s32 1, %s13
  %s16 = scalar_select 0, %s15, %s13
  $region1: #{cnn_krnn_forward.1} parent=0
    #allocation2 [shape = 'u8[98304]{0}', space=vmem, size = 0x18000, scoped, tag = 'input window, operand 5, single buffered']
    #allocation3 [shape = 's32[1]{0}', space=sflag, size = 0x4, scoped, tag = 'scoped memory for cnn_krnn_forward.1']
    #allocation4 [shape = 'u8[98304]{0}', space=vmem, size = 0x18000, scoped, tag = 'input window, operand 8, single buffered']
    #allocation5 [shape = 's32[1]{0}', space=sflag, size = 0x4, scoped, tag = 'scoped memory for cnn_krnn_forward.1']
    #allocation6 [shape = 'u8[98304]{0}', space=vmem, size = 0x18000, scoped, tag = 'input window, operand 9, single buffered']
    %17 = vsyncpa [#allocation3], 0
    %18 = vsyncpa [#allocation5], 0
    // Predicated region
    $region2: #{cnn_krnn_forward.1} parent=1 // pred_check
      _
    $region3: #{cnn_krnn_forward.1} parent=1 // pred_check_branch
      %20 = sbr.rel (0) target = $region5
    $region4: #{cnn_krnn_forward.1} parent=1 // pred_region
      _
    $region5: #{cnn_krnn_forward.1} parent=1 // pred_fallthru
      _
    // Predicated region
    $region6: #{cnn_krnn_forward.1} parent=1 // pred_check
      _
    $region7: #{cnn_krnn_forward.1} parent=1 // pred_check_branch
      %22 = sbr.rel (0) target = $region9
    $region8: #{cnn_krnn_forward.1} parent=1 // pred_region
      _
    $region9: #{cnn_krnn_forward.1} parent=1 // pred_fallthru
      _
    // Predicated region
    $region10: #{cnn_krnn_forward.1} parent=1 // pred_check
      _
    $region11: #{cnn_krnn_forward.1} parent=1 // pred_check_branch
      %24 = sbr.rel (0) target = $region13
    $region12: #{cnn_krnn_forward.1} parent=1 // pred_region
      _
    $region13: #{cnn_krnn_forward.1} parent=1 // pred_fallthru
      _
    // Predicated region
    $region14: #{cnn_krnn_forward.1} parent=1 // pred_check
      _
    $region15: #{cnn_krnn_forward.1} parent=1 // pred_check_branch
      %26 = sbr.rel (0) target = $region17
    $region16: #{cnn_krnn_forward.1} parent=1 // pred_region
      _
    $region17: #{cnn_krnn_forward.1} parent=1 // pred_fallthru
      _
    // Predicated region
    $region18: #{cnn_krnn_forward.1} parent=1 // pred_check
      _
    $region19: #{cnn_krnn_forward.1} parent=1 // pred_check_branch
      %28 = sbr.rel (0) target = $region21
    $region20: #{cnn_krnn_forward.1} parent=1 // pred_region
      _
    $region21: #{cnn_krnn_forward.1} parent=1 // pred_fallthru
      _
    // Predicated region
    $region22: #{cnn_krnn_forward.1} parent=1 // pred_check
      _
    $region23: #{cnn_krnn_forward.1} parent=1 // pred_check_branch
      %30 = sbr.rel (0) target = $region25
    $region24: #{cnn_krnn_forward.1} parent=1 // pred_region
      %32 = vsyncadd [#allocation3], 0
      %s33 = sshll.u32 %s5, 4
      %s34 = int_to_ptr.hbm [resolvable:$true] %s33
      %s35 = sshll.u32 [#allocation2], 4
      %s36 = int_to_ptr.vmem [resolvable:$true] %s35
      %41 = dma.hbm_to_vmem [thread:$0]  %s34, 3072, %s36, [#allocation3], 192, 192, 12
    $region25: #{cnn_krnn_forward.1} parent=1 // pred_fallthru
      _
    // Predicated region
    $region26: #{cnn_krnn_forward.1} parent=1 // pred_check
      _
    $region27: #{cnn_krnn_forward.1} parent=1 // pred_check_branch
      %43 = sbr.rel (0) target = $region29
    $region28: #{cnn_krnn_forward.1} parent=1 // pred_region
      _
    $region29: #{cnn_krnn_forward.1} parent=1 // pred_fallthru
      _
    // Predicated region
    $region30: #{cnn_krnn_forward.1} parent=1 // pred_check
      _
    $region31: #{cnn_krnn_forward.1} parent=1 // pred_check_branch
      %45 = sbr.rel (0) target = $region33
    $region32: #{cnn_krnn_forward.1} parent=1 // pred_region
      _
    $region33: #{cnn_krnn_forward.1} parent=1 // pred_fallthru
      _
    // Predicated region
    $region34: #{cnn_krnn_forward.1} parent=1 // pred_check
      _
    $region35: #{cnn_krnn_forward.1} parent=1 // pred_check_branch
      %47 = sbr.rel (0) target = $region37
    $region36: #{cnn_krnn_forward.1} parent=1 // pred_region
      %49 = vsyncadd [#allocation5], 0
      %s50 = sshll.u32 %s8, 4
      %s51 = int_to_ptr.hbm [resolvable:$true] %s50
      %s52 = sshll.u32 [#allocation4], 4
      %s53 = int_to_ptr.vmem [resolvable:$true] %s52
      %58 = dma.hbm_to_vmem [thread:$0]  %s51, 3072, %s53, [#allocation5], 192, 192, 12
    $region37: #{cnn_krnn_forward.1} parent=1 // pred_fallthru
      _
    // Predicated region
    $region38: #{cnn_krnn_forward.1} parent=1 // pred_check
      _
    $region39: #{cnn_krnn_forward.1} parent=1 // pred_check_branch
      %60 = sbr.rel (0) target = $region41
    $region40: #{cnn_krnn_forward.1} parent=1 // pred_region
      %62 = vsyncadd [#allocation5], 0
      %s63 = sshll.u32 %s9, 4
      %s64 = int_to_ptr.hbm [resolvable:$true] %s63
      %s65 = sshll.u32 [#allocation6], 4
      %s66 = int_to_ptr.vmem [resolvable:$true] %s65
      %71 = dma.hbm_to_vmem [thread:$0]  %s64, 3072, %s66, [#allocation5], 192, 192, 12
    $region41: #{cnn_krnn_forward.1} parent=1 // pred_fallthru
      _
    // Predicated region
    $region42: #{cnn_krnn_forward.1} parent=1 // pred_check
      _
    $region43: #{cnn_krnn_forward.1} parent=1 // pred_check_branch
      %73 = sbr.rel (0) target = $region45
    $region44: #{cnn_krnn_forward.1} parent=1 // pred_region
      _
    $region45: #{cnn_krnn_forward.1} parent=1 // pred_fallthru
      _
    // Predicated region
    $region46: #{cnn_krnn_forward.1} parent=1 // pred_check
      _
    $region47: #{cnn_krnn_forward.1} parent=1 // pred_check_branch
      %75 = sbr.rel (0) target = $region49
    $region48: #{cnn_krnn_forward.1} parent=1 // pred_region
      _
    $region49: #{cnn_krnn_forward.1} parent=1 // pred_fallthru
      _
    // Predicated region
    $region50: #{cnn_krnn_forward.1} parent=1 // pred_check
      _
    $region51: #{cnn_krnn_forward.1} parent=1 // pred_check_branch
      %77 = sbr.rel (0) target = $region53
    $region52: #{cnn_krnn_forward.1} parent=1 // pred_region
      %79 = dma.done [#allocation3], 3072
    $region53: #{cnn_krnn_forward.1} parent=1 // pred_fallthru
      _
    // Predicated region
    $region54: #{cnn_krnn_forward.1} parent=1 // pred_check
      _
    $region55: #{cnn_krnn_forward.1} parent=1 // pred_check_branch
      %81 = sbr.rel (0) target = $region57
    $region56: #{cnn_krnn_forward.1} parent=1 // pred_region
      %83 = dma.done [#allocation5], 3072
    $region57: #{cnn_krnn_forward.1} parent=1 // pred_fallthru
      _
    // Predicated region
    $region58: #{cnn_krnn_forward.1} parent=1 // pred_check
      _
    $region59: #{cnn_krnn_forward.1} parent=1 // pred_check_branch
      %85 = sbr.rel (0) target = $region61
    $region60: #{cnn_krnn_forward.1} parent=1 // pred_region
      %87 = dma.done [#allocation5], 3072
    $region61: #{cnn_krnn_forward.1} parent=1 // pred_fallthru
      _
    %v89 = vld [vmem:[%s2] sm:$0x1]
    %v91 = vperm.slane %v89, 0
    %v93 = vadd.f32 %v91, 0.0
    %v94 = vld [vmem:[%s0] sm:$0xff]
    %v95 = vld [vmem:[%s0 + $0x8] sm:$0xff]
    %v96 = vpack.c.bf16 %v95, %v94
    %v97 = vld [vmem:[%s1] sm:$0x3]
    %vm98 = vcmask 31744
    %v100 = vsel %vm98, %v96, 0
    %vm102 = vcmask 1041408
    %v104 = vsel %vm102, %v97, 0
    %106 = vmatpush.bf16.msra.mxu0 0
    %107 = vmatpush.bf16.msra.mxu0 0
    %108 = vmatpush.bf16.msra.mxu0 0
    %109 = vmatpush.bf16.msra.mxu0 0
    %110 = vmatpush.bf16.msra.mxu0 0
    %111 = vmatpush.bf16.msra.mxu0 0
    %112 = vmatpush.bf16.msra.mxu0 0
    %113 = vmatpush.bf16.msra.mxu0 %v104
    %114 = vmatmul.bf16.gmra.mxu0 %v100
    %v115 = vpop.f32.mrf.mxu0
    %v116 = vadd.f32 0.0, %v115
    %v117 = vpop.f32.mrf.mxu0
    %v118 = vadd.f32 0.0, %v117
    %119 = vdwg.mxu0
    %v120 = vadd.f32 %v93, %v116
    %v121 = vadd.f32 %v93, %v118
    %v122 = vld [vmem:[%s0 + $0x2] sm:$0xff]
    %v123 = vld [vmem:[%s0 + $0xa] sm:$0xff]
    %v124 = vpack.c.bf16 %v123, %v122
    %s125 = scalar_lea.vmem %s1, 2
    %v126 = vld [vmem:[%s125] sm:$0x3]
    %v128 = vsel %vm98, %v124, 0
    %v131 = vsel %vm102, %v126, 0
    %133 = vmatpush.bf16.msra.mxu0 0
    %134 = vmatpush.bf16.msra.mxu0 0
    %135 = vmatpush.bf16.msra.mxu0 0
    %136 = vmatpush.bf16.msra.mxu0 0
    %137 = vmatpush.bf16.msra.mxu0 0
    %138 = vmatpush.bf16.msra.mxu0 0
    %139 = vmatpush.bf16.msra.mxu0 0
    %140 = vmatpush.bf16.msra.mxu0 %v131
    %141 = vmatmul.bf16.gmra.mxu0 %v128
    %v142 = vpop.f32.mrf.mxu0
    %v143 = vadd.f32 0.0, %v142
    %v144 = vpop.f32.mrf.mxu0
    %v145 = vadd.f32 0.0, %v144
    %146 = vdwg.mxu0
    %v147 = vadd.f32 %v120, %v143
    %v148 = vadd.f32 %v121, %v145
    %v149 = vld [vmem:[%s0 + $0x4] sm:$0xff]
    %v150 = vld [vmem:[%s0 + $0xc] sm:$0xff]
    %v151 = vpack.c.bf16 %v150, %v149
    %s152 = scalar_lea.vmem %s1, 4
    %v153 = vld [vmem:[%s152] sm:$0x3]
    %v155 = vsel %vm98, %v151, 0
    %v158 = vsel %vm102, %v153, 0
    %160 = vmatpush.bf16.msra.mxu0 0
    %161 = vmatpush.bf16.msra.mxu0 0
    %162 = vmatpush.bf16.msra.mxu0 0
    %163 = vmatpush.bf16.msra.mxu0 0
    %164 = vmatpush.bf16.msra.mxu0 0
    %165 = vmatpush.bf16.msra.mxu0 0
    %166 = vmatpush.bf16.msra.mxu0 0
    %167 = vmatpush.bf16.msra.mxu0 %v158
    %168 = vmatmul.bf16.gmra.mxu0 %v155
    %v169 = vpop.f32.mrf.mxu0
    %v170 = vadd.f32 0.0, %v169
    %v171 = vpop.f32.mrf.mxu0
    %v172 = vadd.f32 0.0, %v171
    %173 = vdwg.mxu0
    %v174 = vadd.f32 %v147, %v170
    %v175 = vadd.f32 %v148, %v172
    %v176 = vpack.c.bf16 %v175, %v174
    %v177 = vld [vmem:[%s4] sm:$0xff]
    %v178 = vld [vmem:[%s4 + $0x8] sm:$0xf]
    %v179 = vld [vmem:[%s4 + $0xc] sm:$0xff]
    %v180 = vld [vmem:[%s4 + $0x14] sm:$0xf]
    %v181 = vld [vmem:[%s6] sm:$0x7]
    %v183 = vperm.slane %v181, 0
    %v184 = vperm.slane %v181, 1
    %v185 = vperm.slane %v181, 2
    %v193 = vunpack.c.l.b16 %v177
    %v194 = vunpack.c.h.b16 %v177
    %v195 = vunpack.c.l.b16 %v178
    %v196 = vunpack.c.l.b16 %v179
    %v197 = vunpack.c.h.b16 %v179
    %v198 = vunpack.c.l.b16 %v180
    %v199 = vpack.c.b16 %v196, %v193
    %v200 = vpack.c.b16 %v197, %v194
    %v201 = vpack.c.b16 %v198, %v195
    %vm205 = vcmask 130048
    %v207 = vsel %vm205, %v176, 0
    %209 = vmatpush.bf16.msra.mxu0 0
    %210 = vmatpush.bf16.msra.mxu0 0
    %211 = vmatpush.bf16.msra.mxu0 0
    %212 = vmatpush.bf16.msra.mxu0 0
    %213 = vmatpush.bf16.msra.mxu0 0
    %214 = vmatpush.bf16.msra.mxu0 0
    %215 = vmatpush.bf16.msra.mxu0 0
    %216 = vmatpush.bf16.msra.mxu0 %v199
    %217 = vmatmul.bf16.gmra.mxu0 %v207
    %v218 = vpop.f32.mrf.mxu0
    %v219 = vadd.f32 %v183, %v218
    %v220 = vpop.f32.mrf.mxu0
    %v221 = vadd.f32 %v183, %v220
    %222 = vdwg.mxu0
    %223 = vmatpush.bf16.msra.mxu0 0
    %224 = vmatpush.bf16.msra.mxu0 0
    %225 = vmatpush.bf16.msra.mxu0 0
    %226 = vmatpush.bf16.msra.mxu0 0
    %227 = vmatpush.bf16.msra.mxu0 0
    %228 = vmatpush.bf16.msra.mxu0 0
    %229 = vmatpush.bf16.msra.mxu0 0
    %230 = vmatpush.bf16.msra.mxu0 %v200
    %231 = vmatmul.bf16.gmra.mxu0 %v207
    %v232 = vpop.f32.mrf.mxu0
    %v233 = vadd.f32 %v184, %v232
    %v234 = vpop.f32.mrf.mxu0
    %v235 = vadd.f32 %v184, %v234
    %236 = vdwg.mxu0
    %237 = vmatpush.bf16.msra.mxu0 0
    %238 = vmatpush.bf16.msra.mxu0 0
    %239 = vmatpush.bf16.msra.mxu0 0
    %240 = vmatpush.bf16.msra.mxu0 0
    %241 = vmatpush.bf16.msra.mxu0 0
    %242 = vmatpush.bf16.msra.mxu0 0
    %243 = vmatpush.bf16.msra.mxu0 0
    %244 = vmatpush.bf16.msra.mxu0 %v201
    %245 = vmatmul.bf16.gmra.mxu0 %v207
    %v246 = vpop.f32.mrf.mxu0
    %v247 = vadd.f32 %v185, %v246
    %v248 = vpop.f32.mrf.mxu0
    %v249 = vadd.f32 %v185, %v248
    %250 = vdwg.mxu0
    %v251 = vld [vmem:[%s7] sm:$0x7]
    %v253 = vperm.slane %v251, 0
    %v254 = vperm.slane %v251, 1
    %v255 = vperm.slane %v251, 2
    %v259 = vld [vmem:[#allocation2] sm:$0xff]
    %v260 = vld [vmem:[#allocation2 + $0x8] sm:$0xf]
    %v261 = vld [vmem:[#allocation2 + $0xc] sm:$0xff]
    %v262 = vld [vmem:[#allocation2 + $0x14] sm:$0xf]
    %v263 = vld [vmem:[#allocation2 + $0x18] sm:$0xff]
    %v264 = vld [vmem:[#allocation2 + $0x20] sm:$0xf]
    %v265 = vld [vmem:[#allocation2 + $0x24] sm:$0xff]
    %v266 = vld [vmem:[#allocation2 + $0x2c] sm:$0xf]
    %v267 = vld [vmem:[#allocation2 + $0x30] sm:$0xff]
    %v268 = vld [vmem:[#allocation2 + $0x38] sm:$0xf]
    %v269 = vld [vmem:[#allocation2 + $0x3c] sm:$0xff]
    %v270 = vld [vmem:[#allocation2 + $0x44] sm:$0xf]
    %v271 = vld [vmem:[#allocation2 + $0x48] sm:$0xff]
    %v272 = vld [vmem:[#allocation2 + $0x50] sm:$0xf]
    %v273 = vld [vmem:[#allocation2 + $0x54] sm:$0xff]
    %v274 = vld [vmem:[#allocation2 + $0x5c] sm:$0xf]
    %v275 = vld [vmem:[#allocation2 + $0x60] sm:$0xff]
    %v276 = vld [vmem:[#allocation2 + $0x68] sm:$0xf]
    %v277 = vld [vmem:[#allocation2 + $0x6c] sm:$0xff]
    %v278 = vld [vmem:[#allocation2 + $0x74] sm:$0xf]
    %v279 = vld [vmem:[#allocation2 + $0x78] sm:$0xff]
    %v280 = vld [vmem:[#allocation2 + $0x80] sm:$0xf]
    %v281 = vld [vmem:[#allocation2 + $0x84] sm:$0xff]
    %v282 = vld [vmem:[#allocation2 + $0x8c] sm:$0xf]
    %v283 = vld [vmem:[#allocation2 + $0x90] sm:$0xff]
    %v284 = vld [vmem:[#allocation2 + $0x98] sm:$0xf]
    %v285 = vld [vmem:[#allocation2 + $0x9c] sm:$0xff]
    %v286 = vld [vmem:[#allocation2 + $0xa4] sm:$0xf]
    %v287 = vld [vmem:[#allocation2 + $0xa8] sm:$0xff]
    %v288 = vld [vmem:[#allocation2 + $0xb0] sm:$0xf]
    %v289 = vld [vmem:[#allocation2 + $0xb4] sm:$0xff]
    %v290 = vld [vmem:[#allocation2 + $0xbc] sm:$0xf]
    %v323 = vunpack.c.l.b16 %v259
    %v324 = vunpack.c.h.b16 %v259
    %v325 = vunpack.c.l.b16 %v260
    %v326 = vunpack.c.l.b16 %v261
    %v327 = vunpack.c.h.b16 %v261
    %v328 = vunpack.c.l.b16 %v262
    %v329 = vunpack.c.l.b16 %v263
    %v330 = vunpack.c.h.b16 %v263
    %v331 = vunpack.c.l.b16 %v264
    %v332 = vunpack.c.l.b16 %v265
    %v333 = vunpack.c.h.b16 %v265
    %v334 = vunpack.c.l.b16 %v266
    %v335 = vunpack.c.l.b16 %v267
    %v336 = vunpack.c.h.b16 %v267
    %v337 = vunpack.c.l.b16 %v268
    %v338 = vunpack.c.l.b16 %v269
    %v339 = vunpack.c.h.b16 %v269
    %v340 = vunpack.c.l.b16 %v270
    %v341 = vunpack.c.l.b16 %v271
    %v342 = vunpack.c.h.b16 %v271
    %v343 = vunpack.c.l.b16 %v272
    %v344 = vunpack.c.l.b16 %v273
    %v345 = vunpack.c.h.b16 %v273
    %v346 = vunpack.c.l.b16 %v274
    %v347 = vunpack.c.l.b16 %v275
    %v348 = vunpack.c.h.b16 %v275
    %v349 = vunpack.c.l.b16 %v276
    %v350 = vunpack.c.l.b16 %v277
    %v351 = vunpack.c.h.b16 %v277
    %v352 = vunpack.c.l.b16 %v278
    %v353 = vunpack.c.l.b16 %v279
    %v354 = vunpack.c.h.b16 %v279
    %v355 = vunpack.c.l.b16 %v280
    %v356 = vunpack.c.l.b16 %v281
    %v357 = vunpack.c.h.b16 %v281
    %v358 = vunpack.c.l.b16 %v282
    %v359 = vunpack.c.l.b16 %v283
    %v360 = vunpack.c.h.b16 %v283
    %v361 = vunpack.c.l.b16 %v284
    %v362 = vunpack.c.l.b16 %v285
    %v363 = vunpack.c.h.b16 %v285
    %v364 = vunpack.c.l.b16 %v286
    %v365 = vunpack.c.l.b16 %v287
    %v366 = vunpack.c.h.b16 %v287
    %v367 = vunpack.c.l.b16 %v288
    %v368 = vunpack.c.l.b16 %v289
    %v369 = vunpack.c.h.b16 %v289
    %v370 = vunpack.c.l.b16 %v290
    %v371 = vpack.c.b16 %v326, %v323
    %v372 = vpack.c.b16 %v327, %v324
    %v373 = vpack.c.b16 %v328, %v325
    %v374 = vpack.c.b16 %v332, %v329
    %v375 = vpack.c.b16 %v333, %v330
    %v376 = vpack.c.b16 %v334, %v331
    %v377 = vpack.c.b16 %v338, %v335
    %v378 = vpack.c.b16 %v339, %v336
    %v379 = vpack.c.b16 %v340, %v337
    %v380 = vpack.c.b16 %v344, %v341
    %v381 = vpack.c.b16 %v345, %v342
    %v382 = vpack.c.b16 %v346, %v343
    %v383 = vpack.c.b16 %v350, %v347
    %v384 = vpack.c.b16 %v351, %v348
    %v385 = vpack.c.b16 %v352, %v349
    %v386 = vpack.c.b16 %v356, %v353
    %v387 = vpack.c.b16 %v357, %v354
    %v388 = vpack.c.b16 %v358, %v355
    %v389 = vpack.c.b16 %v362, %v359
    %v390 = vpack.c.b16 %v363, %v360
    %v391 = vpack.c.b16 %v364, %v361
    %v392 = vpack.c.b16 %v368, %v365
    %v393 = vpack.c.b16 %v369, %v366
    %v394 = vpack.c.b16 %v370, %v367
    %419 = vmatpush.bf16.msra.mxu0 %v392
    %420 = vmatpush.bf16.msra.mxu0 %v389
    %421 = vmatpush.bf16.msra.mxu0 %v386
    %422 = vmatpush.bf16.msra.mxu0 %v383
    %423 = vmatpush.bf16.msra.mxu0 %v380
    %424 = vmatpush.bf16.msra.mxu0 %v377
    %425 = vmatpush.bf16.msra.mxu0 %v374
    %426 = vmatpush.bf16.msra.mxu0 %v371
    %427 = vmatmul.bf16.gmra.mxu0 0
    %v428 = vpop.f32.mrf.mxu0
    %v429 = vadd.f32 %v253, %v428
    %v430 = vpop.f32.mrf.mxu0
    %431 = vdwg.mxu0
    %432 = vmatpush.bf16.msra.mxu0 %v393
    %433 = vmatpush.bf16.msra.mxu0 %v390
    %434 = vmatpush.bf16.msra.mxu0 %v387
    %435 = vmatpush.bf16.msra.mxu0 %v384
    %436 = vmatpush.bf16.msra.mxu0 %v381
    %437 = vmatpush.bf16.msra.mxu0 %v378
    %438 = vmatpush.bf16.msra.mxu0 %v375
    %439 = vmatpush.bf16.msra.mxu0 %v372
    %440 = vmatmul.bf16.gmra.mxu0 0
    %v441 = vpop.f32.mrf.mxu0
    %v442 = vadd.f32 %v254, %v441
    %v443 = vpop.f32.mrf.mxu0
    %444 = vdwg.mxu0
    %445 = vmatpush.bf16.msra.mxu0 %v394
    %446 = vmatpush.bf16.msra.mxu0 %v391
    %447 = vmatpush.bf16.msra.mxu0 %v388
    %448 = vmatpush.bf16.msra.mxu0 %v385
    %449 = vmatpush.bf16.msra.mxu0 %v382
    %450 = vmatpush.bf16.msra.mxu0 %v379
    %451 = vmatpush.bf16.msra.mxu0 %v376
    %452 = vmatpush.bf16.msra.mxu0 %v373
    %453 = vmatmul.bf16.gmra.mxu0 0
    %v454 = vpop.f32.mrf.mxu0
    %v455 = vadd.f32 %v255, %v454
    %v456 = vpop.f32.mrf.mxu0
    %457 = vdwg.mxu0
    %v458 = vadd.f32 %v219, %v429
    %v459 = vxor.u32 %v458, 2147483648
    %v460 = vmul.f32 %v459, 1.442695
    %v461 = vpow.pop %v460
    %v462 = vadd.f32 %v461, 1.0
    %v463 = vrcp.pop %v462
    %v464 = vmul.f32 %v462, %v463
    %v465 = vsub.f32 1.0, %v464
    %v466 = vmul.f32 %v463, %v465
    %v467 = vadd.f32 %v463, %v466
    %vm468 = vweird.f32 %v462
    %vm469 = vweird.f32 %v463
    %vm470 = vmor %vm468, %vm469
    %v471 = vsel %vm470, %v463, %v467
    %v472 = vand.u32 2147483647, %v462
    %vm473 = vcmp.eq.f32.partialorder %v472, 8.507059e+37
    %v474 = vand.u32 %v462, 2147483648
    %v475 = vor.u32 1.1754944e-38, %v474
    %v476 = vsel %vm473, %v475, %v471
    %v477 = vmul.f32 1.0, %v476
    %v478 = vadd.f32 %v233, %v442
    %v479 = vxor.u32 %v478, 2147483648
    %v480 = vmul.f32 %v479, 1.442695
    %v481 = vpow.pop %v480
    %v482 = vadd.f32 %v481, 1.0
    %v483 = vrcp.pop %v482
    %v484 = vmul.f32 %v482, %v483
    %v485 = vsub.f32 1.0, %v484
    %v486 = vmul.f32 %v483, %v485
    %v487 = vadd.f32 %v483, %v486
    %vm488 = vweird.f32 %v482
    %vm489 = vweird.f32 %v483
    %vm490 = vmor %vm488, %vm489
    %v491 = vsel %vm490, %v483, %v487
    %v492 = vand.u32 2147483647, %v482
    %vm493 = vcmp.eq.f32.partialorder %v492, 8.507059e+37
    %v494 = vand.u32 %v482, 2147483648
    %v495 = vor.u32 1.1754944e-38, %v494
    %v496 = vsel %vm493, %v495, %v491
    %v497 = vmul.f32 1.0, %v496
    %v498 = vmul.f32 %v477, %v455
    %v499 = vadd.f32 %v247, %v498
    %v500 = vtanh.pop %v499
    %v501 = vsub.f32 1.0, %v497
    %v502 = vmul.f32 %v501, %v500
    %v503 = vmul.f32 %v497, 0.0
    %v504 = vadd.f32 %v502, %v503
    %v505 = vpack.c.bf16 %v504, %v504
    %506 = vmatpush.bf16.msra.mxu0 %v392
    %507 = vmatpush.bf16.msra.mxu0 %v389
    %508 = vmatpush.bf16.msra.mxu0 %v386
    %509 = vmatpush.bf16.msra.mxu0 %v383
    %510 = vmatpush.bf16.msra.mxu0 %v380
    %511 = vmatpush.bf16.msra.mxu0 %v377
    %512 = vmatpush.bf16.msra.mxu0 %v374
    %513 = vmatpush.bf16.msra.mxu0 %v371
    %514 = vmatmul.bf16.gmra.mxu0 %v505
    %v515 = vpop.f32.mrf.mxu0
    %v516 = vadd.f32 %v253, %v515
    %v517 = vpop.f32.mrf.mxu0
    %518 = vdwg.mxu0
    %519 = vmatpush.bf16.msra.mxu0 %v393
    %520 = vmatpush.bf16.msra.mxu0 %v390
    %521 = vmatpush.bf16.msra.mxu0 %v387
    %522 = vmatpush.bf16.msra.mxu0 %v384
    %523 = vmatpush.bf16.msra.mxu0 %v381
    %524 = vmatpush.bf16.msra.mxu0 %v378
    %525 = vmatpush.bf16.msra.mxu0 %v375
    %526 = vmatpush.bf16.msra.mxu0 %v372
    %527 = vmatmul.bf16.gmra.mxu0 %v505
    %v528 = vpop.f32.mrf.mxu0
    %v529 = vadd.f32 %v254, %v528
    %v530 = vpop.f32.mrf.mxu0
    %531 = vdwg.mxu0
    %532 = vmatpush.bf16.msra.mxu0 %v394
    %533 = vmatpush.bf16.msra.mxu0 %v391
    %534 = vmatpush.bf16.msra.mxu0 %v388
    %535 = vmatpush.bf16.msra.mxu0 %v385
    %536 = vmatpush.bf16.msra.mxu0 %v382
    %537 = vmatpush.bf16.msra.mxu0 %v379
    %538 = vmatpush.bf16.msra.mxu0 %v376
    %539 = vmatpush.bf16.msra.mxu0 %v373
    %540 = vmatmul.bf16.gmra.mxu0 %v505
    %v541 = vpop.f32.mrf.mxu0
    %v542 = vadd.f32 %v255, %v541
    %v543 = vpop.f32.mrf.mxu0
    %544 = vdwg.mxu0
    %v546 = vrot.slane %v516, 6
    %v548 = vadd.f32 %v219, %v546
    %v549 = vxor.u32 %v548, 2147483648
    %v550 = vmul.f32 %v549, 1.442695
    %v551 = vpow.pop %v550
    %v552 = vadd.f32 %v551, 1.0
    %v553 = vrcp.pop %v552
    %v554 = vmul.f32 %v552, %v553
    %v555 = vsub.f32 1.0, %v554
    %v556 = vmul.f32 %v553, %v555
    %v557 = vadd.f32 %v553, %v556
    %vm558 = vweird.f32 %v552
    %vm559 = vweird.f32 %v553
    %vm560 = vmor %vm558, %vm559
    %v561 = vsel %vm560, %v553, %v557
    %v562 = vand.u32 2147483647, %v552
    %vm563 = vcmp.eq.f32.partialorder %v562, 8.507059e+37
    %v564 = vand.u32 %v552, 2147483648
    %v565 = vor.u32 1.1754944e-38, %v564
    %v566 = vsel %vm563, %v565, %v561
    %v567 = vmul.f32 1.0, %v566
    %v569 = vrot.slane %v529, 6
    %v571 = vadd.f32 %v233, %v569
    %v572 = vxor.u32 %v571, 2147483648
    %v573 = vmul.f32 %v572, 1.442695
    %v574 = vpow.pop %v573
    %v575 = vadd.f32 %v574, 1.0
    %v576 = vrcp.pop %v575
    %v577 = vmul.f32 %v575, %v576
    %v578 = vsub.f32 1.0, %v577
    %v579 = vmul.f32 %v576, %v578
    %v580 = vadd.f32 %v576, %v579
    %vm581 = vweird.f32 %v575
    %vm582 = vweird.f32 %v576
    %vm583 = vmor %vm581, %vm582
    %v584 = vsel %vm583, %v576, %v580
    %v585 = vand.u32 2147483647, %v575
    %vm586 = vcmp.eq.f32.partialorder %v585, 8.507059e+37
    %v587 = vand.u32 %v575, 2147483648
    %v588 = vor.u32 1.1754944e-38, %v587
    %v589 = vsel %vm586, %v588, %v584
    %v590 = vmul.f32 1.0, %v589
    %v592 = vrot.slane %v542, 6
    %v594 = vmul.f32 %v567, %v592
    %v595 = vadd.f32 %v247, %v594
    %v596 = vtanh.pop %v595
    %v597 = vsub.f32 1.0, %v590
    %v598 = vmul.f32 %v597, %v596
    %v600 = vrot.slane %v504, 6
    %v602 = vmul.f32 %v590, %v600
    %v603 = vadd.f32 %v598, %v602
    %v604 = vpack.c.bf16 %v603, %v603
    %v606 = vrot.slane %v604, 1
    %608 = vmatpush.bf16.msra.mxu0 %v392
    %609 = vmatpush.bf16.msra.mxu0 %v389
    %610 = vmatpush.bf16.msra.mxu0 %v386
    %611 = vmatpush.bf16.msra.mxu0 %v383
    %612 = vmatpush.bf16.msra.mxu0 %v380
    %613 = vmatpush.bf16.msra.mxu0 %v377
    %614 = vmatpush.bf16.msra.mxu0 %v374
    %615 = vmatpush.bf16.msra.mxu0 %v371
    %616 = vmatmul.bf16.gmra.mxu0 %v606
    %v617 = vpop.f32.mrf.mxu0
    %v618 = vadd.f32 %v253, %v617
    %v619 = vpop.f32.mrf.mxu0
    %620 = vdwg.mxu0
    %621 = vmatpush.bf16.msra.mxu0 %v393
    %622 = vmatpush.bf16.msra.mxu0 %v390
    %623 = vmatpush.bf16.msra.mxu0 %v387
    %624 = vmatpush.bf16.msra.mxu0 %v384
    %625 = vmatpush.bf16.msra.mxu0 %v381
    %626 = vmatpush.bf16.msra.mxu0 %v378
    %627 = vmatpush.bf16.msra.mxu0 %v375
    %628 = vmatpush.bf16.msra.mxu0 %v372
    %629 = vmatmul.bf16.gmra.mxu0 %v606
    %v630 = vpop.f32.mrf.mxu0
    %v631 = vadd.f32 %v254, %v630
    %v632 = vpop.f32.mrf.mxu0
    %633 = vdwg.mxu0
    %634 = vmatpush.bf16.msra.mxu0 %v394
    %635 = vmatpush.bf16.msra.mxu0 %v391
    %636 = vmatpush.bf16.msra.mxu0 %v388
    %637 = vmatpush.bf16.msra.mxu0 %v385
    %638 = vmatpush.bf16.msra.mxu0 %v382
    %639 = vmatpush.bf16.msra.mxu0 %v379
    %640 = vmatpush.bf16.msra.mxu0 %v376
    %641 = vmatpush.bf16.msra.mxu0 %v373
    %642 = vmatmul.bf16.gmra.mxu0 %v606
    %v643 = vpop.f32.mrf.mxu0
    %v644 = vadd.f32 %v255, %v643
    %v645 = vpop.f32.mrf.mxu0
    %646 = vdwg.mxu0
    %v648 = vrot.slane %v618, 4
    %v650 = vadd.f32 %v219, %v648
    %v651 = vxor.u32 %v650, 2147483648
    %v652 = vmul.f32 %v651, 1.442695
    %v653 = vpow.pop %v652
    %v654 = vadd.f32 %v653, 1.0
    %v655 = vrcp.pop %v654
    %v656 = vmul.f32 %v654, %v655
    %v657 = vsub.f32 1.0, %v656
    %v658 = vmul.f32 %v655, %v657
    %v659 = vadd.f32 %v655, %v658
    %vm660 = vweird.f32 %v654
    %vm661 = vweird.f32 %v655
    %vm662 = vmor %vm660, %vm661
    %v663 = vsel %vm662, %v655, %v659
    %v664 = vand.u32 2147483647, %v654
    %vm665 = vcmp.eq.f32.partialorder %v664, 8.507059e+37
    %v666 = vand.u32 %v654, 2147483648
    %v667 = vor.u32 1.1754944e-38, %v666
    %v668 = vsel %vm665, %v667, %v663
    %v669 = vmul.f32 1.0, %v668
    %v671 = vrot.slane %v631, 4
    %v673 = vadd.f32 %v233, %v671
    %v674 = vxor.u32 %v673, 2147483648
    %v675 = vmul.f32 %v674, 1.442695
    %v676 = vpow.pop %v675
    %v677 = vadd.f32 %v676, 1.0
    %v678 = vrcp.pop %v677
    %v679 = vmul.f32 %v677, %v678
    %v680 = vsub.f32 1.0, %v679
    %v681 = vmul.f32 %v678, %v680
    %v682 = vadd.f32 %v678, %v681
    %vm683 = vweird.f32 %v677
    %vm684 = vweird.f32 %v678
    %vm685 = vmor %vm683, %vm684
    %v686 = vsel %vm685, %v678, %v682
    %v687 = vand.u32 2147483647, %v677
    %vm688 = vcmp.eq.f32.partialorder %v687, 8.507059e+37
    %v689 = vand.u32 %v677, 2147483648
    %v690 = vor.u32 1.1754944e-38, %v689
    %v691 = vsel %vm688, %v690, %v686
    %v692 = vmul.f32 1.0, %v691
    %v694 = vrot.slane %v644, 4
    %v696 = vmul.f32 %v669, %v694
    %v697 = vadd.f32 %v247, %v696
    %v698 = vtanh.pop %v697
    %v699 = vsub.f32 1.0, %v692
    %v700 = vmul.f32 %v699, %v698
    %v702 = vrot.slane %v603, 6
    %v704 = vmul.f32 %v692, %v702
    %v705 = vadd.f32 %v700, %v704
    %v706 = vpack.c.bf16 %v705, %v705
    %v708 = vrot.slane %v706, 2
    %710 = vmatpush.bf16.msra.mxu0 %v392
    %711 = vmatpush.bf16.msra.mxu0 %v389
    %712 = vmatpush.bf16.msra.mxu0 %v386
    %713 = vmatpush.bf16.msra.mxu0 %v383
    %714 = vmatpush.bf16.msra.mxu0 %v380
    %715 = vmatpush.bf16.msra.mxu0 %v377
    %716 = vmatpush.bf16.msra.mxu0 %v374
    %717 = vmatpush.bf16.msra.mxu0 %v371
    %718 = vmatmul.bf16.gmra.mxu0 %v708
    %v719 = vpop.f32.mrf.mxu0
    %v720 = vadd.f32 %v253, %v719
    %v721 = vpop.f32.mrf.mxu0
    %722 = vdwg.mxu0
    %723 = vmatpush.bf16.msra.mxu0 %v393
    %724 = vmatpush.bf16.msra.mxu0 %v390
    %725 = vmatpush.bf16.msra.mxu0 %v387
    %726 = vmatpush.bf16.msra.mxu0 %v384
    %727 = vmatpush.bf16.msra.mxu0 %v381
    %728 = vmatpush.bf16.msra.mxu0 %v378
    %729 = vmatpush.bf16.msra.mxu0 %v375
    %730 = vmatpush.bf16.msra.mxu0 %v372
    %731 = vmatmul.bf16.gmra.mxu0 %v708
    %v732 = vpop.f32.mrf.mxu0
    %v733 = vadd.f32 %v254, %v732
    %v734 = vpop.f32.mrf.mxu0
    %735 = vdwg.mxu0
    %736 = vmatpush.bf16.msra.mxu0 %v394
    %737 = vmatpush.bf16.msra.mxu0 %v391
    %738 = vmatpush.bf16.msra.mxu0 %v388
    %739 = vmatpush.bf16.msra.mxu0 %v385
    %740 = vmatpush.bf16.msra.mxu0 %v382
    %741 = vmatpush.bf16.msra.mxu0 %v379
    %742 = vmatpush.bf16.msra.mxu0 %v376
    %743 = vmatpush.bf16.msra.mxu0 %v373
    %744 = vmatmul.bf16.gmra.mxu0 %v708
    %v745 = vpop.f32.mrf.mxu0
    %v746 = vadd.f32 %v255, %v745
    %v747 = vpop.f32.mrf.mxu0
    %748 = vdwg.mxu0
    %v750 = vrot.slane %v720, 2
    %v752 = vadd.f32 %v219, %v750
    %v753 = vxor.u32 %v752, 2147483648
    %v754 = vmul.f32 %v753, 1.442695
    %v755 = vpow.pop %v754
    %v756 = vadd.f32 %v755, 1.0
    %v757 = vrcp.pop %v756
    %v758 = vmul.f32 %v756, %v757
    %v759 = vsub.f32 1.0, %v758
    %v760 = vmul.f32 %v757, %v759
    %v761 = vadd.f32 %v757, %v760
    %vm762 = vweird.f32 %v756
    %vm763 = vweird.f32 %v757
    %vm764 = vmor %vm762, %vm763
    %v765 = vsel %vm764, %v757, %v761
    %v766 = vand.u32 2147483647, %v756
    %vm767 = vcmp.eq.f32.partialorder %v766, 8.507059e+37
    %v768 = vand.u32 %v756, 2147483648
    %v769 = vor.u32 1.1754944e-38, %v768
    %v770 = vsel %vm767, %v769, %v765
    %v771 = vmul.f32 1.0, %v770
    %v773 = vrot.slane %v733, 2
    %v775 = vadd.f32 %v233, %v773
    %v776 = vxor.u32 %v775, 2147483648
    %v777 = vmul.f32 %v776, 1.442695
    %v778 = vpow.pop %v777
    %v779 = vadd.f32 %v778, 1.0
    %v780 = vrcp.pop %v779
    %v781 = vmul.f32 %v779, %v780
    %v782 = vsub.f32 1.0, %v781
    %v783 = vmul.f32 %v780, %v782
    %v784 = vadd.f32 %v780, %v783
    %vm785 = vweird.f32 %v779
    %vm786 = vweird.f32 %v780
    %vm787 = vmor %vm785, %vm786
    %v788 = vsel %vm787, %v780, %v784
    %v789 = vand.u32 2147483647, %v779
    %vm790 = vcmp.eq.f32.partialorder %v789, 8.507059e+37
    %v791 = vand.u32 %v779, 2147483648
    %v792 = vor.u32 1.1754944e-38, %v791
    %v793 = vsel %vm790, %v792, %v788
    %v794 = vmul.f32 1.0, %v793
    %v796 = vrot.slane %v746, 2
    %v798 = vmul.f32 %v771, %v796
    %v799 = vadd.f32 %v247, %v798
    %v800 = vtanh.pop %v799
    %v801 = vsub.f32 1.0, %v794
    %v802 = vmul.f32 %v801, %v800
    %v804 = vrot.slane %v705, 6
    %v806 = vmul.f32 %v794, %v804
    %v807 = vadd.f32 %v802, %v806
    %v808 = vpack.c.bf16 %v807, %v807
    %v810 = vrot.slane %v808, 3
    %812 = vmatpush.bf16.msra.mxu0 %v392
    %813 = vmatpush.bf16.msra.mxu0 %v389
    %814 = vmatpush.bf16.msra.mxu0 %v386
    %815 = vmatpush.bf16.msra.mxu0 %v383
    %816 = vmatpush.bf16.msra.mxu0 %v380
    %817 = vmatpush.bf16.msra.mxu0 %v377
    %818 = vmatpush.bf16.msra.mxu0 %v374
    %819 = vmatpush.bf16.msra.mxu0 %v371
    %820 = vmatmul.bf16.gmra.mxu0 %v810
    %v821 = vpop.f32.mrf.mxu0
    %v822 = vadd.f32 %v253, %v821
    %v823 = vpop.f32.mrf.mxu0
    %824 = vdwg.mxu0
    %825 = vmatpush.bf16.msra.mxu0 %v393
    %826 = vmatpush.bf16.msra.mxu0 %v390
    %827 = vmatpush.bf16.msra.mxu0 %v387
    %828 = vmatpush.bf16.msra.mxu0 %v384
    %829 = vmatpush.bf16.msra.mxu0 %v381
    %830 = vmatpush.bf16.msra.mxu0 %v378
    %831 = vmatpush.bf16.msra.mxu0 %v375
    %832 = vmatpush.bf16.msra.mxu0 %v372
    %833 = vmatmul.bf16.gmra.mxu0 %v810
    %v834 = vpop.f32.mrf.mxu0
    %v835 = vadd.f32 %v254, %v834
    %v836 = vpop.f32.mrf.mxu0
    %837 = vdwg.mxu0
    %838 = vmatpush.bf16.msra.mxu0 %v394
    %839 = vmatpush.bf16.msra.mxu0 %v391
    %840 = vmatpush.bf16.msra.mxu0 %v388
    %841 = vmatpush.bf16.msra.mxu0 %v385
    %842 = vmatpush.bf16.msra.mxu0 %v382
    %843 = vmatpush.bf16.msra.mxu0 %v379
    %844 = vmatpush.bf16.msra.mxu0 %v376
    %845 = vmatpush.bf16.msra.mxu0 %v373
    %846 = vmatmul.bf16.gmra.mxu0 %v810
    %v847 = vpop.f32.mrf.mxu0
    %v848 = vadd.f32 %v255, %v847
    %v849 = vpop.f32.mrf.mxu0
    %850 = vdwg.mxu0
    %v851 = vadd.f32 %v221, %v822
    %v852 = vxor.u32 %v851, 2147483648
    %v853 = vmul.f32 %v852, 1.442695
    %v854 = vpow.pop %v853
    %v855 = vadd.f32 %v854, 1.0
    %v856 = vrcp.pop %v855
    %v857 = vmul.f32 %v855, %v856
    %v858 = vsub.f32 1.0, %v857
    %v859 = vmul.f32 %v856, %v858
    %v860 = vadd.f32 %v856, %v859
    %vm861 = vweird.f32 %v855
    %vm862 = vweird.f32 %v856
    %vm863 = vmor %vm861, %vm862
    %v864 = vsel %vm863, %v856, %v860
    %v865 = vand.u32 2147483647, %v855
    %vm866 = vcmp.eq.f32.partialorder %v865, 8.507059e+37
    %v867 = vand.u32 %v855, 2147483648
    %v868 = vor.u32 1.1754944e-38, %v867
    %v869 = vsel %vm866, %v868, %v864
    %v870 = vmul.f32 1.0, %v869
    %v871 = vadd.f32 %v235, %v835
    %v872 = vxor.u32 %v871, 2147483648
    %v873 = vmul.f32 %v872, 1.442695
    %v874 = vpow.pop %v873
    %v875 = vadd.f32 %v874, 1.0
    %v876 = vrcp.pop %v875
    %v877 = vmul.f32 %v875, %v876
    %v878 = vsub.f32 1.0, %v877
    %v879 = vmul.f32 %v876, %v878
    %v880 = vadd.f32 %v876, %v879
    %vm881 = vweird.f32 %v875
    %vm882 = vweird.f32 %v876
    %vm883 = vmor %vm881, %vm882
    %v884 = vsel %vm883, %v876, %v880
    %v885 = vand.u32 2147483647, %v875
    %vm886 = vcmp.eq.f32.partialorder %v885, 8.507059e+37
    %v887 = vand.u32 %v875, 2147483648
    %v888 = vor.u32 1.1754944e-38, %v887
    %v889 = vsel %vm886, %v888, %v884
    %v890 = vmul.f32 1.0, %v889
    %v891 = vmul.f32 %v870, %v848
    %v892 = vadd.f32 %v249, %v891
    %v893 = vtanh.pop %v892
    %v894 = vsub.f32 1.0, %v890
    %v895 = vmul.f32 %v894, %v893
    %v897 = vrot.slane %v807, 6
    %v899 = vmul.f32 %v890, %v897
    %v900 = vadd.f32 %v895, %v899
    %v901 = vpack.c.bf16 %v900, %v900
    %902 = vmatpush.bf16.msra.mxu0 %v392
    %903 = vmatpush.bf16.msra.mxu0 %v389
    %904 = vmatpush.bf16.msra.mxu0 %v386
    %905 = vmatpush.bf16.msra.mxu0 %v383
    %906 = vmatpush.bf16.msra.mxu0 %v380
    %907 = vmatpush.bf16.msra.mxu0 %v377
    %908 = vmatpush.bf16.msra.mxu0 %v374
    %909 = vmatpush.bf16.msra.mxu0 %v371
    %910 = vmatmul.bf16.gmra.mxu0 %v901
    %v911 = vpop.f32.mrf.mxu0
    %v912 = vadd.f32 %v253, %v911
    %v913 = vpop.f32.mrf.mxu0
    %914 = vdwg.mxu0
    %915 = vmatpush.bf16.msra.mxu0 %v393
    %916 = vmatpush.bf16.msra.mxu0 %v390
    %917 = vmatpush.bf16.msra.mxu0 %v387
    %918 = vmatpush.bf16.msra.mxu0 %v384
    %919 = vmatpush.bf16.msra.mxu0 %v381
    %920 = vmatpush.bf16.msra.mxu0 %v378
    %921 = vmatpush.bf16.msra.mxu0 %v375
    %922 = vmatpush.bf16.msra.mxu0 %v372
    %923 = vmatmul.bf16.gmra.mxu0 %v901
    %v924 = vpop.f32.mrf.mxu0
    %v925 = vadd.f32 %v254, %v924
    %v926 = vpop.f32.mrf.mxu0
    %927 = vdwg.mxu0
    %928 = vmatpush.bf16.msra.mxu0 %v394
    %929 = vmatpush.bf16.msra.mxu0 %v391
    %930 = vmatpush.bf16.msra.mxu0 %v388
    %931 = vmatpush.bf16.msra.mxu0 %v385
    %932 = vmatpush.bf16.msra.mxu0 %v382
    %933 = vmatpush.bf16.msra.mxu0 %v379
    %934 = vmatpush.bf16.msra.mxu0 %v376
    %935 = vmatpush.bf16.msra.mxu0 %v373
    %936 = vmatmul.bf16.gmra.mxu0 %v901
    %v937 = vpop.f32.mrf.mxu0
    %v938 = vadd.f32 %v255, %v937
    %v939 = vpop.f32.mrf.mxu0
    %940 = vdwg.mxu0
    %v942 = vrot.slane %v912, 6
    %v944 = vadd.f32 %v221, %v942
    %v945 = vxor.u32 %v944, 2147483648
    %v946 = vmul.f32 %v945, 1.442695
    %v947 = vpow.pop %v946
    %v948 = vadd.f32 %v947, 1.0
    %v949 = vrcp.pop %v948
    %v950 = vmul.f32 %v948, %v949
    %v951 = vsub.f32 1.0, %v950
    %v952 = vmul.f32 %v949, %v951
    %v953 = vadd.f32 %v949, %v952
    %vm954 = vweird.f32 %v948
    %vm955 = vweird.f32 %v949
    %vm956 = vmor %vm954, %vm955
    %v957 = vsel %vm956, %v949, %v953
    %v958 = vand.u32 2147483647, %v948
    %vm959 = vcmp.eq.f32.partialorder %v958, 8.507059e+37
    %v960 = vand.u32 %v948, 2147483648
    %v961 = vor.u32 1.1754944e-38, %v960
    %v962 = vsel %vm959, %v961, %v957
    %v963 = vmul.f32 1.0, %v962
    %v965 = vrot.slane %v925, 6
    %v967 = vadd.f32 %v235, %v965
    %v968 = vxor.u32 %v967, 2147483648
    %v969 = vmul.f32 %v968, 1.442695
    %v970 = vpow.pop %v969
    %v971 = vadd.f32 %v970, 1.0
    %v972 = vrcp.pop %v971
    %v973 = vmul.f32 %v971, %v972
    %v974 = vsub.f32 1.0, %v973
    %v975 = vmul.f32 %v972, %v974
    %v976 = vadd.f32 %v972, %v975
    %vm977 = vweird.f32 %v971
    %vm978 = vweird.f32 %v972
    %vm979 = vmor %vm977, %vm978
    %v980 = vsel %vm979, %v972, %v976
    %v981 = vand.u32 2147483647, %v971
    %vm982 = vcmp.eq.f32.partialorder %v981, 8.507059e+37
    %v983 = vand.u32 %v971, 2147483648
    %v984 = vor.u32 1.1754944e-38, %v983
    %v985 = vsel %vm982, %v984, %v980
    %v986 = vmul.f32 1.0, %v985
    %v988 = vrot.slane %v938, 6
    %v990 = vmul.f32 %v963, %v988
    %v991 = vadd.f32 %v249, %v990
    %v992 = vtanh.pop %v991
    %v993 = vsub.f32 1.0, %v986
    %v994 = vmul.f32 %v993, %v992
    %v996 = vrot.slane %v900, 6
    %v998 = vmul.f32 %v986, %v996
    %v999 = vadd.f32 %v994, %v998
    %v1000 = vpack.c.bf16 %v999, %v999
    %v1002 = vrot.slane %v1000, 1
    %1004 = vmatpush.bf16.msra.mxu0 %v392
    %1005 = vmatpush.bf16.msra.mxu0 %v389
    %1006 = vmatpush.bf16.msra.mxu0 %v386
    %1007 = vmatpush.bf16.msra.mxu0 %v383
    %1008 = vmatpush.bf16.msra.mxu0 %v380
    %1009 = vmatpush.bf16.msra.mxu0 %v377
    %1010 = vmatpush.bf16.msra.mxu0 %v374
    %1011 = vmatpush.bf16.msra.mxu0 %v371
    %1012 = vmatmul.bf16.gmra.mxu0 %v1002
    %v1013 = vpop.f32.mrf.mxu0
    %v1014 = vadd.f32 %v253, %v1013
    %v1015 = vpop.f32.mrf.mxu0
    %1016 = vdwg.mxu0
    %1017 = vmatpush.bf16.msra.mxu0 %v393
    %1018 = vmatpush.bf16.msra.mxu0 %v390
    %1019 = vmatpush.bf16.msra.mxu0 %v387
    %1020 = vmatpush.bf16.msra.mxu0 %v384
    %1021 = vmatpush.bf16.msra.mxu0 %v381
    %1022 = vmatpush.bf16.msra.mxu0 %v378
    %1023 = vmatpush.bf16.msra.mxu0 %v375
    %1024 = vmatpush.bf16.msra.mxu0 %v372
    %1025 = vmatmul.bf16.gmra.mxu0 %v1002
    %v1026 = vpop.f32.mrf.mxu0
    %v1027 = vadd.f32 %v254, %v1026
    %v1028 = vpop.f32.mrf.mxu0
    %1029 = vdwg.mxu0
    %1030 = vmatpush.bf16.msra.mxu0 %v394
    %1031 = vmatpush.bf16.msra.mxu0 %v391
    %1032 = vmatpush.bf16.msra.mxu0 %v388
    %1033 = vmatpush.bf16.msra.mxu0 %v385
    %1034 = vmatpush.bf16.msra.mxu0 %v382
    %1035 = vmatpush.bf16.msra.mxu0 %v379
    %1036 = vmatpush.bf16.msra.mxu0 %v376
    %1037 = vmatpush.bf16.msra.mxu0 %v373
    %1038 = vmatmul.bf16.gmra.mxu0 %v1002
    %v1039 = vpop.f32.mrf.mxu0
    %v1040 = vadd.f32 %v255, %v1039
    %v1041 = vpop.f32.mrf.mxu0
    %1042 = vdwg.mxu0
    %v1044 = vrot.slane %v1014, 4
    %v1046 = vadd.f32 %v221, %v1044
    %v1047 = vxor.u32 %v1046, 2147483648
    %v1048 = vmul.f32 %v1047, 1.442695
    %v1049 = vpow.pop %v1048
    %v1050 = vadd.f32 %v1049, 1.0
    %v1051 = vrcp.pop %v1050
    %v1052 = vmul.f32 %v1050, %v1051
    %v1053 = vsub.f32 1.0, %v1052
    %v1054 = vmul.f32 %v1051, %v1053
    %v1055 = vadd.f32 %v1051, %v1054
    %vm1056 = vweird.f32 %v1050
    %vm1057 = vweird.f32 %v1051
    %vm1058 = vmor %vm1056, %vm1057
    %v1059 = vsel %vm1058, %v1051, %v1055
    %v1060 = vand.u32 2147483647, %v1050
    %vm1061 = vcmp.eq.f32.partialorder %v1060, 8.507059e+37
    %v1062 = vand.u32 %v1050, 2147483648
    %v1063 = vor.u32 1.1754944e-38, %v1062
    %v1064 = vsel %vm1061, %v1063, %v1059
    %v1065 = vmul.f32 1.0, %v1064
    %v1067 = vrot.slane %v1027, 4
    %v1069 = vadd.f32 %v235, %v1067
    %v1070 = vxor.u32 %v1069, 2147483648
    %v1071 = vmul.f32 %v1070, 1.442695
    %v1072 = vpow.pop %v1071
    %v1073 = vadd.f32 %v1072, 1.0
    %v1074 = vrcp.pop %v1073
    %v1075 = vmul.f32 %v1073, %v1074
    %v1076 = vsub.f32 1.0, %v1075
    %v1077 = vmul.f32 %v1074, %v1076
    %v1078 = vadd.f32 %v1074, %v1077
    %vm1079 = vweird.f32 %v1073
    %vm1080 = vweird.f32 %v1074
    %vm1081 = vmor %vm1079, %vm1080
    %v1082 = vsel %vm1081, %v1074, %v1078
    %v1083 = vand.u32 2147483647, %v1073
    %vm1084 = vcmp.eq.f32.partialorder %v1083, 8.507059e+37
    %v1085 = vand.u32 %v1073, 2147483648
    %v1086 = vor.u32 1.1754944e-38, %v1085
    %v1087 = vsel %vm1084, %v1086, %v1082
    %v1088 = vmul.f32 1.0, %v1087
    %v1090 = vrot.slane %v1040, 4
    %v1092 = vmul.f32 %v1065, %v1090
    %v1093 = vadd.f32 %v249, %v1092
    %v1094 = vtanh.pop %v1093
    %v1095 = vsub.f32 1.0, %v1088
    %v1096 = vmul.f32 %v1095, %v1094
    %v1098 = vrot.slane %v999, 6
    %v1100 = vmul.f32 %v1088, %v1098
    %v1101 = vadd.f32 %v1096, %v1100
    %v1102 = vpack.c.bf16 %v1101, %v1101
    %v1104 = vrot.slane %v1102, 2
    %1106 = vmatpush.bf16.msra.mxu0 %v392
    %1107 = vmatpush.bf16.msra.mxu0 %v389
    %1108 = vmatpush.bf16.msra.mxu0 %v386
    %1109 = vmatpush.bf16.msra.mxu0 %v383
    %1110 = vmatpush.bf16.msra.mxu0 %v380
    %1111 = vmatpush.bf16.msra.mxu0 %v377
    %1112 = vmatpush.bf16.msra.mxu0 %v374
    %1113 = vmatpush.bf16.msra.mxu0 %v371
    %1114 = vmatmul.bf16.gmra.mxu0 %v1104
    %v1115 = vpop.f32.mrf.mxu0
    %v1116 = vadd.f32 %v253, %v1115
    %v1117 = vpop.f32.mrf.mxu0
    %1118 = vdwg.mxu0
    %1119 = vmatpush.bf16.msra.mxu0 %v393
    %1120 = vmatpush.bf16.msra.mxu0 %v390
    %1121 = vmatpush.bf16.msra.mxu0 %v387
    %1122 = vmatpush.bf16.msra.mxu0 %v384
    %1123 = vmatpush.bf16.msra.mxu0 %v381
    %1124 = vmatpush.bf16.msra.mxu0 %v378
    %1125 = vmatpush.bf16.msra.mxu0 %v375
    %1126 = vmatpush.bf16.msra.mxu0 %v372
    %1127 = vmatmul.bf16.gmra.mxu0 %v1104
    %v1128 = vpop.f32.mrf.mxu0
    %v1129 = vadd.f32 %v254, %v1128
    %v1130 = vpop.f32.mrf.mxu0
    %1131 = vdwg.mxu0
    %1132 = vmatpush.bf16.msra.mxu0 %v394
    %1133 = vmatpush.bf16.msra.mxu0 %v391
    %1134 = vmatpush.bf16.msra.mxu0 %v388
    %1135 = vmatpush.bf16.msra.mxu0 %v385
    %1136 = vmatpush.bf16.msra.mxu0 %v382
    %1137 = vmatpush.bf16.msra.mxu0 %v379
    %1138 = vmatpush.bf16.msra.mxu0 %v376
    %1139 = vmatpush.bf16.msra.mxu0 %v373
    %1140 = vmatmul.bf16.gmra.mxu0 %v1104
    %v1141 = vpop.f32.mrf.mxu0
    %v1142 = vadd.f32 %v255, %v1141
    %v1143 = vpop.f32.mrf.mxu0
    %1144 = vdwg.mxu0
    %v1146 = vrot.slane %v1116, 2
    %v1148 = vadd.f32 %v221, %v1146
    %v1149 = vxor.u32 %v1148, 2147483648
    %v1150 = vmul.f32 %v1149, 1.442695
    %v1151 = vpow.pop %v1150
    %v1152 = vadd.f32 %v1151, 1.0
    %v1153 = vrcp.pop %v1152
    %v1154 = vmul.f32 %v1152, %v1153
    %v1155 = vsub.f32 1.0, %v1154
    %v1156 = vmul.f32 %v1153, %v1155
    %v1157 = vadd.f32 %v1153, %v1156
    %vm1158 = vweird.f32 %v1152
    %vm1159 = vweird.f32 %v1153
    %vm1160 = vmor %vm1158, %vm1159
    %v1161 = vsel %vm1160, %v1153, %v1157
    %v1162 = vand.u32 2147483647, %v1152
    %vm1163 = vcmp.eq.f32.partialorder %v1162, 8.507059e+37
    %v1164 = vand.u32 %v1152, 2147483648
    %v1165 = vor.u32 1.1754944e-38, %v1164
    %v1166 = vsel %vm1163, %v1165, %v1161
    %v1167 = vmul.f32 1.0, %v1166
    %v1169 = vrot.slane %v1129, 2
    %v1171 = vadd.f32 %v235, %v1169
    %v1172 = vxor.u32 %v1171, 2147483648
    %v1173 = vmul.f32 %v1172, 1.442695
    %v1174 = vpow.pop %v1173
    %v1175 = vadd.f32 %v1174, 1.0
    %v1176 = vrcp.pop %v1175
    %v1177 = vmul.f32 %v1175, %v1176
    %v1178 = vsub.f32 1.0, %v1177
    %v1179 = vmul.f32 %v1176, %v1178
    %v1180 = vadd.f32 %v1176, %v1179
    %vm1181 = vweird.f32 %v1175
    %vm1182 = vweird.f32 %v1176
    %vm1183 = vmor %vm1181, %vm1182
    %v1184 = vsel %vm1183, %v1176, %v1180
    %v1185 = vand.u32 2147483647, %v1175
    %vm1186 = vcmp.eq.f32.partialorder %v1185, 8.507059e+37
    %v1187 = vand.u32 %v1175, 2147483648
    %v1188 = vor.u32 1.1754944e-38, %v1187
    %v1189 = vsel %vm1186, %v1188, %v1184
    %v1190 = vmul.f32 1.0, %v1189
    %v1192 = vrot.slane %v1142, 2
    %v1194 = vmul.f32 %v1167, %v1192
    %v1195 = vadd.f32 %v249, %v1194
    %v1196 = vtanh.pop %v1195
    %v1197 = vsub.f32 1.0, %v1190
    %v1198 = vmul.f32 %v1197, %v1196
    %v1200 = vrot.slane %v1101, 6
    %v1202 = vmul.f32 %v1190, %v1200
    %v1203 = vadd.f32 %v1198, %v1202
    %v1204 = vsel %vm102, %v504, %v603
    %vm1205 = vcmask 1043456
    %v1206 = vsel %vm1205, %v1204, %v705
    %vm1207 = vcmask 1045504
    %v1208 = vsel %vm1207, %v1206, %v807
    %v1209 = vsel %vm102, %v900, %v999
    %v1210 = vsel %vm1205, %v1209, %v1101
    %v1211 = vsel %vm1207, %v1210, %v1203
    %v1212 = vpack.c.bf16 %v1211, %v1208
    %v1213 = vld [vmem:[#allocation4] sm:$0xff]
    %v1214 = vld [vmem:[#allocation4 + $0x8] sm:$0xf]
    %v1215 = vld [vmem:[#allocation4 + $0xc] sm:$0xff]
    %v1216 = vld [vmem:[#allocation4 + $0x14] sm:$0xf]
    %v1217 = vld [vmem:[#allocation4 + $0x18] sm:$0xff]
    %v1218 = vld [vmem:[#allocation4 + $0x20] sm:$0xf]
    %v1219 = vld [vmem:[#allocation4 + $0x24] sm:$0xff]
    %v1220 = vld [vmem:[#allocation4 + $0x2c] sm:$0xf]
    %v1221 = vld [vmem:[#allocation4 + $0x30] sm:$0xff]
    %v1222 = vld [vmem:[#allocation4 + $0x38] sm:$0xf]
    %v1223 = vld [vmem:[#allocation4 + $0x3c] sm:$0xff]
    %v1224 = vld [vmem:[#allocation4 + $0x44] sm:$0xf]
    %v1225 = vld [vmem:[#allocation4 + $0x48] sm:$0xff]
    %v1226 = vld [vmem:[#allocation4 + $0x50] sm:$0xf]
    %v1227 = vld [vmem:[#allocation4 + $0x54] sm:$0xff]
    %v1228 = vld [vmem:[#allocation4 + $0x5c] sm:$0xf]
    %v1229 = vld [vmem:[#allocation4 + $0x60] sm:$0xff]
    %v1230 = vld [vmem:[#allocation4 + $0x68] sm:$0xf]
    %v1231 = vld [vmem:[#allocation4 + $0x6c] sm:$0xff]
    %v1232 = vld [vmem:[#allocation4 + $0x74] sm:$0xf]
    %v1233 = vld [vmem:[#allocation4 + $0x78] sm:$0xff]
    %v1234 = vld [vmem:[#allocation4 + $0x80] sm:$0xf]
    %v1235 = vld [vmem:[#allocation4 + $0x84] sm:$0xff]
    %v1236 = vld [vmem:[#allocation4 + $0x8c] sm:$0xf]
    %v1237 = vld [vmem:[#allocation4 + $0x90] sm:$0xff]
    %v1238 = vld [vmem:[#allocation4 + $0x98] sm:$0xf]
    %v1239 = vld [vmem:[#allocation4 + $0x9c] sm:$0xff]
    %v1240 = vld [vmem:[#allocation4 + $0xa4] sm:$0xf]
    %v1241 = vld [vmem:[#allocation4 + $0xa8] sm:$0xff]
    %v1242 = vld [vmem:[#allocation4 + $0xb0] sm:$0xf]
    %v1243 = vld [vmem:[#allocation4 + $0xb4] sm:$0xff]
    %v1244 = vld [vmem:[#allocation4 + $0xbc] sm:$0xf]
    %v1245 = vld [vmem:[%s10] sm:$0x7]
    %v1247 = vperm.slane %v1245, 0
    %v1248 = vperm.slane %v1245, 1
    %v1249 = vperm.slane %v1245, 2
    %v1285 = vunpack.c.l.b16 %v1213
    %v1286 = vunpack.c.h.b16 %v1213
    %v1287 = vunpack.c.l.b16 %v1214
    %v1288 = vunpack.c.l.b16 %v1215
    %v1289 = vunpack.c.h.b16 %v1215
    %v1290 = vunpack.c.l.b16 %v1216
    %v1291 = vunpack.c.l.b16 %v1217
    %v1292 = vunpack.c.h.b16 %v1217
    %v1293 = vunpack.c.l.b16 %v1218
    %v1294 = vunpack.c.l.b16 %v1219
    %v1295 = vunpack.c.h.b16 %v1219
    %v1296 = vunpack.c.l.b16 %v1220
    %v1297 = vunpack.c.l.b16 %v1221
    %v1298 = vunpack.c.h.b16 %v1221
    %v1299 = vunpack.c.l.b16 %v1222
    %v1300 = vunpack.c.l.b16 %v1223
    %v1301 = vunpack.c.h.b16 %v1223
    %v1302 = vunpack.c.l.b16 %v1224
    %v1303 = vunpack.c.l.b16 %v1225
    %v1304 = vunpack.c.h.b16 %v1225
    %v1305 = vunpack.c.l.b16 %v1226
    %v1306 = vunpack.c.l.b16 %v1227
    %v1307 = vunpack.c.h.b16 %v1227
    %v1308 = vunpack.c.l.b16 %v1228
    %v1309 = vunpack.c.l.b16 %v1229
    %v1310 = vunpack.c.h.b16 %v1229
    %v1311 = vunpack.c.l.b16 %v1230
    %v1312 = vunpack.c.l.b16 %v1231
    %v1313 = vunpack.c.h.b16 %v1231
    %v1314 = vunpack.c.l.b16 %v1232
    %v1315 = vunpack.c.l.b16 %v1233
    %v1316 = vunpack.c.h.b16 %v1233
    %v1317 = vunpack.c.l.b16 %v1234
    %v1318 = vunpack.c.l.b16 %v1235
    %v1319 = vunpack.c.h.b16 %v1235
    %v1320 = vunpack.c.l.b16 %v1236
    %v1321 = vunpack.c.l.b16 %v1237
    %v1322 = vunpack.c.h.b16 %v1237
    %v1323 = vunpack.c.l.b16 %v1238
    %v1324 = vunpack.c.l.b16 %v1239
    %v1325 = vunpack.c.h.b16 %v1239
    %v1326 = vunpack.c.l.b16 %v1240
    %v1327 = vunpack.c.l.b16 %v1241
    %v1328 = vunpack.c.h.b16 %v1241
    %v1329 = vunpack.c.l.b16 %v1242
    %v1330 = vunpack.c.l.b16 %v1243
    %v1331 = vunpack.c.h.b16 %v1243
    %v1332 = vunpack.c.l.b16 %v1244
    %v1333 = vpack.c.b16 %v1288, %v1285
    %v1334 = vpack.c.b16 %v1289, %v1286
    %v1335 = vpack.c.b16 %v1290, %v1287
    %v1336 = vpack.c.b16 %v1294, %v1291
    %v1337 = vpack.c.b16 %v1295, %v1292
    %v1338 = vpack.c.b16 %v1296, %v1293
    %v1339 = vpack.c.b16 %v1300, %v1297
    %v1340 = vpack.c.b16 %v1301, %v1298
    %v1341 = vpack.c.b16 %v1302, %v1299
    %v1342 = vpack.c.b16 %v1306, %v1303
    %v1343 = vpack.c.b16 %v1307, %v1304
    %v1344 = vpack.c.b16 %v1308, %v1305
    %v1345 = vpack.c.b16 %v1312, %v1309
    %v1346 = vpack.c.b16 %v1313, %v1310
    %v1347 = vpack.c.b16 %v1314, %v1311
    %v1348 = vpack.c.b16 %v1318, %v1315
    %v1349 = vpack.c.b16 %v1319, %v1316
    %v1350 = vpack.c.b16 %v1320, %v1317
    %v1351 = vpack.c.b16 %v1324, %v1321
    %v1352 = vpack.c.b16 %v1325, %v1322
    %v1353 = vpack.c.b16 %v1326, %v1323
    %v1354 = vpack.c.b16 %v1330, %v1327
    %v1355 = vpack.c.b16 %v1331, %v1328
    %v1356 = vpack.c.b16 %v1332, %v1329
    %1381 = vmatpush.bf16.msra.mxu0 %v1354
    %1382 = vmatpush.bf16.msra.mxu0 %v1351
    %1383 = vmatpush.bf16.msra.mxu0 %v1348
    %1384 = vmatpush.bf16.msra.mxu0 %v1345
    %1385 = vmatpush.bf16.msra.mxu0 %v1342
    %1386 = vmatpush.bf16.msra.mxu0 %v1339
    %1387 = vmatpush.bf16.msra.mxu0 %v1336
    %1388 = vmatpush.bf16.msra.mxu0 %v1333
    %1389 = vmatmul.bf16.gmra.mxu0 %v1212
    %v1390 = vpop.f32.mrf.mxu0
    %v1391 = vadd.f32 %v1247, %v1390
    %v1392 = vpop.f32.mrf.mxu0
    %v1393 = vadd.f32 %v1247, %v1392
    %1394 = vdwg.mxu0
    %1395 = vmatpush.bf16.msra.mxu0 %v1355
    %1396 = vmatpush.bf16.msra.mxu0 %v1352
    %1397 = vmatpush.bf16.msra.mxu0 %v1349
    %1398 = vmatpush.bf16.msra.mxu0 %v1346
    %1399 = vmatpush.bf16.msra.mxu0 %v1343
    %1400 = vmatpush.bf16.msra.mxu0 %v1340
    %1401 = vmatpush.bf16.msra.mxu0 %v1337
    %1402 = vmatpush.bf16.msra.mxu0 %v1334
    %1403 = vmatmul.bf16.gmra.mxu0 %v1212
    %v1404 = vpop.f32.mrf.mxu0
    %v1405 = vadd.f32 %v1248, %v1404
    %v1406 = vpop.f32.mrf.mxu0
    %v1407 = vadd.f32 %v1248, %v1406
    %1408 = vdwg.mxu0
    %1409 = vmatpush.bf16.msra.mxu0 %v1356
    %1410 = vmatpush.bf16.msra.mxu0 %v1353
    %1411 = vmatpush.bf16.msra.mxu0 %v1350
    %1412 = vmatpush.bf16.msra.mxu0 %v1347
    %1413 = vmatpush.bf16.msra.mxu0 %v1344
    %1414 = vmatpush.bf16.msra.mxu0 %v1341
    %1415 = vmatpush.bf16.msra.mxu0 %v1338
    %1416 = vmatpush.bf16.msra.mxu0 %v1335
    %1417 = vmatmul.bf16.gmra.mxu0 %v1212
    %v1418 = vpop.f32.mrf.mxu0
    %v1419 = vadd.f32 %v1249, %v1418
    %v1420 = vpop.f32.mrf.mxu0
    %v1421 = vadd.f32 %v1249, %v1420
    %1422 = vdwg.mxu0
    %v1423 = vld [vmem:[%s11] sm:$0x7]
    %v1425 = vperm.slane %v1423, 0
    %v1426 = vperm.slane %v1423, 1
    %v1427 = vperm.slane %v1423, 2
    %v1431 = vld [vmem:[#allocation6] sm:$0xff]
    %v1432 = vld [vmem:[#allocation6 + $0x8] sm:$0xf]
    %v1433 = vld [vmem:[#allocation6 + $0xc] sm:$0xff]
    %v1434 = vld [vmem:[#allocation6 + $0x14] sm:$0xf]
    %v1435 = vld [vmem:[#allocation6 + $0x18] sm:$0xff]
    %v1436 = vld [vmem:[#allocation6 + $0x20] sm:$0xf]
    %v1437 = vld [vmem:[#allocation6 + $0x24] sm:$0xff]
    %v1438 = vld [vmem:[#allocation6 + $0x2c] sm:$0xf]
    %v1439 = vld [vmem:[#allocation6 + $0x30] sm:$0xff]
    %v1440 = vld [vmem:[#allocation6 + $0x38] sm:$0xf]
    %v1441 = vld [vmem:[#allocation6 + $0x3c] sm:$0xff]
    %v1442 = vld [vmem:[#allocation6 + $0x44] sm:$0xf]
    %v1443 = vld [vmem:[#allocation6 + $0x48] sm:$0xff]
    %v1444 = vld [vmem:[#allocation6 + $0x50] sm:$0xf]
    %v1445 = vld [vmem:[#allocation6 + $0x54] sm:$0xff]
    %v1446 = vld [vmem:[#allocation6 + $0x5c] sm:$0xf]
    %v1447 = vld [vmem:[#allocation6 + $0x60] sm:$0xff]
    %v1448 = vld [vmem:[#allocation6 + $0x68] sm:$0xf]
    %v1449 = vld [vmem:[#allocation6 + $0x6c] sm:$0xff]
    %v1450 = vld [vmem:[#allocation6 + $0x74] sm:$0xf]
    %v1451 = vld [vmem:[#allocation6 + $0x78] sm:$0xff]
    %v1452 = vld [vmem:[#allocation6 + $0x80] sm:$0xf]
    %v1453 = vld [vmem:[#allocation6 + $0x84] sm:$0xff]
    %v1454 = vld [vmem:[#allocation6 + $0x8c] sm:$0xf]
    %v1455 = vld [vmem:[#allocation6 + $0x90] sm:$0xff]
    %v1456 = vld [vmem:[#allocation6 + $0x98] sm:$0xf]
    %v1457 = vld [vmem:[#allocation6 + $0x9c] sm:$0xff]
    %v1458 = vld [vmem:[#allocation6 + $0xa4] sm:$0xf]
    %v1459 = vld [vmem:[#allocation6 + $0xa8] sm:$0xff]
    %v1460 = vld [vmem:[#allocation6 + $0xb0] sm:$0xf]
    %v1461 = vld [vmem:[#allocation6 + $0xb4] sm:$0xff]
    %v1462 = vld [vmem:[#allocation6 + $0xbc] sm:$0xf]
    %v1495 = vunpack.c.l.b16 %v1431
    %v1496 = vunpack.c.h.b16 %v1431
    %v1497 = vunpack.c.l.b16 %v1432
    %v1498 = vunpack.c.l.b16 %v1433
    %v1499 = vunpack.c.h.b16 %v1433
    %v1500 = vunpack.c.l.b16 %v1434
    %v1501 = vunpack.c.l.b16 %v1435
    %v1502 = vunpack.c.h.b16 %v1435
    %v1503 = vunpack.c.l.b16 %v1436
    %v1504 = vunpack.c.l.b16 %v1437
    %v1505 = vunpack.c.h.b16 %v1437
    %v1506 = vunpack.c.l.b16 %v1438
    %v1507 = vunpack.c.l.b16 %v1439
    %v1508 = vunpack.c.h.b16 %v1439
    %v1509 = vunpack.c.l.b16 %v1440
    %v1510 = vunpack.c.l.b16 %v1441
    %v1511 = vunpack.c.h.b16 %v1441
    %v1512 = vunpack.c.l.b16 %v1442
    %v1513 = vunpack.c.l.b16 %v1443
    %v1514 = vunpack.c.h.b16 %v1443
    %v1515 = vunpack.c.l.b16 %v1444
    %v1516 = vunpack.c.l.b16 %v1445
    %v1517 = vunpack.c.h.b16 %v1445
    %v1518 = vunpack.c.l.b16 %v1446
    %v1519 = vunpack.c.l.b16 %v1447
    %v1520 = vunpack.c.h.b16 %v1447
    %v1521 = vunpack.c.l.b16 %v1448
    %v1522 = vunpack.c.l.b16 %v1449
    %v1523 = vunpack.c.h.b16 %v1449
    %v1524 = vunpack.c.l.b16 %v1450
    %v1525 = vunpack.c.l.b16 %v1451
    %v1526 = vunpack.c.h.b16 %v1451
    %v1527 = vunpack.c.l.b16 %v1452
    %v1528 = vunpack.c.l.b16 %v1453
    %v1529 = vunpack.c.h.b16 %v1453
    %v1530 = vunpack.c.l.b16 %v1454
    %v1531 = vunpack.c.l.b16 %v1455
    %v1532 = vunpack.c.h.b16 %v1455
    %v1533 = vunpack.c.l.b16 %v1456
    %v1534 = vunpack.c.l.b16 %v1457
    %v1535 = vunpack.c.h.b16 %v1457
    %v1536 = vunpack.c.l.b16 %v1458
    %v1537 = vunpack.c.l.b16 %v1459
    %v1538 = vunpack.c.h.b16 %v1459
    %v1539 = vunpack.c.l.b16 %v1460
    %v1540 = vunpack.c.l.b16 %v1461
    %v1541 = vunpack.c.h.b16 %v1461
    %v1542 = vunpack.c.l.b16 %v1462
    %v1543 = vpack.c.b16 %v1498, %v1495
    %v1544 = vpack.c.b16 %v1499, %v1496
    %v1545 = vpack.c.b16 %v1500, %v1497
    %v1546 = vpack.c.b16 %v1504, %v1501
    %v1547 = vpack.c.b16 %v1505, %v1502
    %v1548 = vpack.c.b16 %v1506, %v1503
    %v1549 = vpack.c.b16 %v1510, %v1507
    %v1550 = vpack.c.b16 %v1511, %v1508
    %v1551 = vpack.c.b16 %v1512, %v1509
    %v1552 = vpack.c.b16 %v1516, %v1513
    %v1553 = vpack.c.b16 %v1517, %v1514
    %v1554 = vpack.c.b16 %v1518, %v1515
    %v1555 = vpack.c.b16 %v1522, %v1519
    %v1556 = vpack.c.b16 %v1523, %v1520
    %v1557 = vpack.c.b16 %v1524, %v1521
    %v1558 = vpack.c.b16 %v1528, %v1525
    %v1559 = vpack.c.b16 %v1529, %v1526
    %v1560 = vpack.c.b16 %v1530, %v1527
    %v1561 = vpack.c.b16 %v1534, %v1531
    %v1562 = vpack.c.b16 %v1535, %v1532
    %v1563 = vpack.c.b16 %v1536, %v1533
    %v1564 = vpack.c.b16 %v1540, %v1537
    %v1565 = vpack.c.b16 %v1541, %v1538
    %v1566 = vpack.c.b16 %v1542, %v1539
    %1591 = vmatpush.bf16.msra.mxu0 %v1564
    %1592 = vmatpush.bf16.msra.mxu0 %v1561
    %1593 = vmatpush.bf16.msra.mxu0 %v1558
    %1594 = vmatpush.bf16.msra.mxu0 %v1555
    %1595 = vmatpush.bf16.msra.mxu0 %v1552
    %1596 = vmatpush.bf16.msra.mxu0 %v1549
    %1597 = vmatpush.bf16.msra.mxu0 %v1546
    %1598 = vmatpush.bf16.msra.mxu0 %v1543
    %1599 = vmatmul.bf16.gmra.mxu0 0
    %v1600 = vpop.f32.mrf.mxu0
    %v1601 = vadd.f32 %v1425, %v1600
    %v1602 = vpop.f32.mrf.mxu0
    %1603 = vdwg.mxu0
    %1604 = vmatpush.bf16.msra.mxu0 %v1565
    %1605 = vmatpush.bf16.msra.mxu0 %v1562
    %1606 = vmatpush.bf16.msra.mxu0 %v1559
    %1607 = vmatpush.bf16.msra.mxu0 %v1556
    %1608 = vmatpush.bf16.msra.mxu0 %v1553
    %1609 = vmatpush.bf16.msra.mxu0 %v1550
    %1610 = vmatpush.bf16.msra.mxu0 %v1547
    %1611 = vmatpush.bf16.msra.mxu0 %v1544
    %1612 = vmatmul.bf16.gmra.mxu0 0
    %v1613 = vpop.f32.mrf.mxu0
    %v1614 = vadd.f32 %v1426, %v1613
    %v1615 = vpop.f32.mrf.mxu0
    %1616 = vdwg.mxu0
    %1617 = vmatpush.bf16.msra.mxu0 %v1566
    %1618 = vmatpush.bf16.msra.mxu0 %v1563
    %1619 = vmatpush.bf16.msra.mxu0 %v1560
    %1620 = vmatpush.bf16.msra.mxu0 %v1557
    %1621 = vmatpush.bf16.msra.mxu0 %v1554
    %1622 = vmatpush.bf16.msra.mxu0 %v1551
    %1623 = vmatpush.bf16.msra.mxu0 %v1548
    %1624 = vmatpush.bf16.msra.mxu0 %v1545
    %1625 = vmatmul.bf16.gmra.mxu0 0
    %v1626 = vpop.f32.mrf.mxu0
    %v1627 = vadd.f32 %v1427, %v1626
    %v1628 = vpop.f32.mrf.mxu0
    %1629 = vdwg.mxu0
    %v1630 = vadd.f32 %v1391, %v1601
    %v1631 = vxor.u32 %v1630, 2147483648
    %v1632 = vmul.f32 %v1631, 1.442695
    %v1633 = vpow.pop %v1632
    %v1634 = vadd.f32 %v1633, 1.0
    %v1635 = vrcp.pop %v1634
    %v1636 = vmul.f32 %v1634, %v1635
    %v1637 = vsub.f32 1.0, %v1636
    %v1638 = vmul.f32 %v1635, %v1637
    %v1639 = vadd.f32 %v1635, %v1638
    %vm1640 = vweird.f32 %v1634
    %vm1641 = vweird.f32 %v1635
    %vm1642 = vmor %vm1640, %vm1641
    %v1643 = vsel %vm1642, %v1635, %v1639
    %v1644 = vand.u32 2147483647, %v1634
    %vm1645 = vcmp.eq.f32.partialorder %v1644, 8.507059e+37
    %v1646 = vand.u32 %v1634, 2147483648
    %v1647 = vor.u32 1.1754944e-38, %v1646
    %v1648 = vsel %vm1645, %v1647, %v1643
    %v1649 = vmul.f32 1.0, %v1648
    %v1650 = vadd.f32 %v1405, %v1614
    %v1651 = vxor.u32 %v1650, 2147483648
    %v1652 = vmul.f32 %v1651, 1.442695
    %v1653 = vpow.pop %v1652
    %v1654 = vadd.f32 %v1653, 1.0
    %v1655 = vrcp.pop %v1654
    %v1656 = vmul.f32 %v1654, %v1655
    %v1657 = vsub.f32 1.0, %v1656
    %v1658 = vmul.f32 %v1655, %v1657
    %v1659 = vadd.f32 %v1655, %v1658
    %vm1660 = vweird.f32 %v1654
    %vm1661 = vweird.f32 %v1655
    %vm1662 = vmor %vm1660, %vm1661
    %v1663 = vsel %vm1662, %v1655, %v1659
    %v1664 = vand.u32 2147483647, %v1654
    %vm1665 = vcmp.eq.f32.partialorder %v1664, 8.507059e+37
    %v1666 = vand.u32 %v1654, 2147483648
    %v1667 = vor.u32 1.1754944e-38, %v1666
    %v1668 = vsel %vm1665, %v1667, %v1663
    %v1669 = vmul.f32 1.0, %v1668
    %v1670 = vmul.f32 %v1649, %v1627
    %v1671 = vadd.f32 %v1419, %v1670
    %v1672 = vtanh.pop %v1671
    %v1673 = vsub.f32 1.0, %v1669
    %v1674 = vmul.f32 %v1673, %v1672
    %v1675 = vmul.f32 %v1669, 0.0
    %v1676 = vadd.f32 %v1674, %v1675
    %v1677 = vpack.c.bf16 %v1676, %v1676
    %1678 = vmatpush.bf16.msra.mxu0 %v1564
    %1679 = vmatpush.bf16.msra.mxu0 %v1561
    %1680 = vmatpush.bf16.msra.mxu0 %v1558
    %1681 = vmatpush.bf16.msra.mxu0 %v1555
    %1682 = vmatpush.bf16.msra.mxu0 %v1552
    %1683 = vmatpush.bf16.msra.mxu0 %v1549
    %1684 = vmatpush.bf16.msra.mxu0 %v1546
    %1685 = vmatpush.bf16.msra.mxu0 %v1543
    %1686 = vmatmul.bf16.gmra.mxu0 %v1677
    %v1687 = vpop.f32.mrf.mxu0
    %v1688 = vadd.f32 %v1425, %v1687
    %v1689 = vpop.f32.mrf.mxu0
    %1690 = vdwg.mxu0
    %1691 = vmatpush.bf16.msra.mxu0 %v1565
    %1692 = vmatpush.bf16.msra.mxu0 %v1562
    %1693 = vmatpush.bf16.msra.mxu0 %v1559
    %1694 = vmatpush.bf16.msra.mxu0 %v1556
    %1695 = vmatpush.bf16.msra.mxu0 %v1553
    %1696 = vmatpush.bf16.msra.mxu0 %v1550
    %1697 = vmatpush.bf16.msra.mxu0 %v1547
    %1698 = vmatpush.bf16.msra.mxu0 %v1544
    %1699 = vmatmul.bf16.gmra.mxu0 %v1677
    %v1700 = vpop.f32.mrf.mxu0
    %v1701 = vadd.f32 %v1426, %v1700
    %v1702 = vpop.f32.mrf.mxu0
    %1703 = vdwg.mxu0
    %1704 = vmatpush.bf16.msra.mxu0 %v1566
    %1705 = vmatpush.bf16.msra.mxu0 %v1563
    %1706 = vmatpush.bf16.msra.mxu0 %v1560
    %1707 = vmatpush.bf16.msra.mxu0 %v1557
    %1708 = vmatpush.bf16.msra.mxu0 %v1554
    %1709 = vmatpush.bf16.msra.mxu0 %v1551
    %1710 = vmatpush.bf16.msra.mxu0 %v1548
    %1711 = vmatpush.bf16.msra.mxu0 %v1545
    %1712 = vmatmul.bf16.gmra.mxu0 %v1677
    %v1713 = vpop.f32.mrf.mxu0
    %v1714 = vadd.f32 %v1427, %v1713
    %v1715 = vpop.f32.mrf.mxu0
    %1716 = vdwg.mxu0
    %v1718 = vrot.slane %v1688, 6
    %v1720 = vadd.f32 %v1391, %v1718
    %v1721 = vxor.u32 %v1720, 2147483648
    %v1722 = vmul.f32 %v1721, 1.442695
    %v1723 = vpow.pop %v1722
    %v1724 = vadd.f32 %v1723, 1.0
    %v1725 = vrcp.pop %v1724
    %v1726 = vmul.f32 %v1724, %v1725
    %v1727 = vsub.f32 1.0, %v1726
    %v1728 = vmul.f32 %v1725, %v1727
    %v1729 = vadd.f32 %v1725, %v1728
    %vm1730 = vweird.f32 %v1724
    %vm1731 = vweird.f32 %v1725
    %vm1732 = vmor %vm1730, %vm1731
    %v1733 = vsel %vm1732, %v1725, %v1729
    %v1734 = vand.u32 2147483647, %v1724
    %vm1735 = vcmp.eq.f32.partialorder %v1734, 8.507059e+37
    %v1736 = vand.u32 %v1724, 2147483648
    %v1737 = vor.u32 1.1754944e-38, %v1736
    %v1738 = vsel %vm1735, %v1737, %v1733
    %v1739 = vmul.f32 1.0, %v1738
    %v1741 = vrot.slane %v1701, 6
    %v1743 = vadd.f32 %v1405, %v1741
    %v1744 = vxor.u32 %v1743, 2147483648
    %v1745 = vmul.f32 %v1744, 1.442695
    %v1746 = vpow.pop %v1745
    %v1747 = vadd.f32 %v1746, 1.0
    %v1748 = vrcp.pop %v1747
    %v1749 = vmul.f32 %v1747, %v1748
    %v1750 = vsub.f32 1.0, %v1749
    %v1751 = vmul.f32 %v1748, %v1750
    %v1752 = vadd.f32 %v1748, %v1751
    %vm1753 = vweird.f32 %v1747
    %vm1754 = vweird.f32 %v1748
    %vm1755 = vmor %vm1753, %vm1754
    %v1756 = vsel %vm1755, %v1748, %v1752
    %v1757 = vand.u32 2147483647, %v1747
    %vm1758 = vcmp.eq.f32.partialorder %v1757, 8.507059e+37
    %v1759 = vand.u32 %v1747, 2147483648
    %v1760 = vor.u32 1.1754944e-38, %v1759
    %v1761 = vsel %vm1758, %v1760, %v1756
    %v1762 = vmul.f32 1.0, %v1761
    %v1764 = vrot.slane %v1714, 6
    %v1766 = vmul.f32 %v1739, %v1764
    %v1767 = vadd.f32 %v1419, %v1766
    %v1768 = vtanh.pop %v1767
    %v1769 = vsub.f32 1.0, %v1762
    %v1770 = vmul.f32 %v1769, %v1768
    %v1772 = vrot.slane %v1676, 6
    %v1774 = vmul.f32 %v1762, %v1772
    %v1775 = vadd.f32 %v1770, %v1774
    %v1776 = vpack.c.bf16 %v1775, %v1775
    %v1778 = vrot.slane %v1776, 1
    %1780 = vmatpush.bf16.msra.mxu0 %v1564
    %1781 = vmatpush.bf16.msra.mxu0 %v1561
    %1782 = vmatpush.bf16.msra.mxu0 %v1558
    %1783 = vmatpush.bf16.msra.mxu0 %v1555
    %1784 = vmatpush.bf16.msra.mxu0 %v1552
    %1785 = vmatpush.bf16.msra.mxu0 %v1549
    %1786 = vmatpush.bf16.msra.mxu0 %v1546
    %1787 = vmatpush.bf16.msra.mxu0 %v1543
    %1788 = vmatmul.bf16.gmra.mxu0 %v1778
    %v1789 = vpop.f32.mrf.mxu0
    %v1790 = vadd.f32 %v1425, %v1789
    %v1791 = vpop.f32.mrf.mxu0
    %1792 = vdwg.mxu0
    %1793 = vmatpush.bf16.msra.mxu0 %v1565
    %1794 = vmatpush.bf16.msra.mxu0 %v1562
    %1795 = vmatpush.bf16.msra.mxu0 %v1559
    %1796 = vmatpush.bf16.msra.mxu0 %v1556
    %1797 = vmatpush.bf16.msra.mxu0 %v1553
    %1798 = vmatpush.bf16.msra.mxu0 %v1550
    %1799 = vmatpush.bf16.msra.mxu0 %v1547
    %1800 = vmatpush.bf16.msra.mxu0 %v1544
    %1801 = vmatmul.bf16.gmra.mxu0 %v1778
    %v1802 = vpop.f32.mrf.mxu0
    %v1803 = vadd.f32 %v1426, %v1802
    %v1804 = vpop.f32.mrf.mxu0
    %1805 = vdwg.mxu0
    %1806 = vmatpush.bf16.msra.mxu0 %v1566
    %1807 = vmatpush.bf16.msra.mxu0 %v1563
    %1808 = vmatpush.bf16.msra.mxu0 %v1560
    %1809 = vmatpush.bf16.msra.mxu0 %v1557
    %1810 = vmatpush.bf16.msra.mxu0 %v1554
    %1811 = vmatpush.bf16.msra.mxu0 %v1551
    %1812 = vmatpush.bf16.msra.mxu0 %v1548
    %1813 = vmatpush.bf16.msra.mxu0 %v1545
    %1814 = vmatmul.bf16.gmra.mxu0 %v1778
    %v1815 = vpop.f32.mrf.mxu0
    %v1816 = vadd.f32 %v1427, %v1815
    %v1817 = vpop.f32.mrf.mxu0
    %1818 = vdwg.mxu0
    %v1820 = vrot.slane %v1790, 4
    %v1822 = vadd.f32 %v1391, %v1820
    %v1823 = vxor.u32 %v1822, 2147483648
    %v1824 = vmul.f32 %v1823, 1.442695
    %v1825 = vpow.pop %v1824
    %v1826 = vadd.f32 %v1825, 1.0
    %v1827 = vrcp.pop %v1826
    %v1828 = vmul.f32 %v1826, %v1827
    %v1829 = vsub.f32 1.0, %v1828
    %v1830 = vmul.f32 %v1827, %v1829
    %v1831 = vadd.f32 %v1827, %v1830
    %vm1832 = vweird.f32 %v1826
    %vm1833 = vweird.f32 %v1827
    %vm1834 = vmor %vm1832, %vm1833
    %v1835 = vsel %vm1834, %v1827, %v1831
    %v1836 = vand.u32 2147483647, %v1826
    %vm1837 = vcmp.eq.f32.partialorder %v1836, 8.507059e+37
    %v1838 = vand.u32 %v1826, 2147483648
    %v1839 = vor.u32 1.1754944e-38, %v1838
    %v1840 = vsel %vm1837, %v1839, %v1835
    %v1841 = vmul.f32 1.0, %v1840
    %v1843 = vrot.slane %v1803, 4
    %v1845 = vadd.f32 %v1405, %v1843
    %v1846 = vxor.u32 %v1845, 2147483648
    %v1847 = vmul.f32 %v1846, 1.442695
    %v1848 = vpow.pop %v1847
    %v1849 = vadd.f32 %v1848, 1.0
    %v1850 = vrcp.pop %v1849
    %v1851 = vmul.f32 %v1849, %v1850
    %v1852 = vsub.f32 1.0, %v1851
    %v1853 = vmul.f32 %v1850, %v1852
    %v1854 = vadd.f32 %v1850, %v1853
    %vm1855 = vweird.f32 %v1849
    %vm1856 = vweird.f32 %v1850
    %vm1857 = vmor %vm1855, %vm1856
    %v1858 = vsel %vm1857, %v1850, %v1854
    %v1859 = vand.u32 2147483647, %v1849
    %vm1860 = vcmp.eq.f32.partialorder %v1859, 8.507059e+37
    %v1861 = vand.u32 %v1849, 2147483648
    %v1862 = vor.u32 1.1754944e-38, %v1861
    %v1863 = vsel %vm1860, %v1862, %v1858
    %v1864 = vmul.f32 1.0, %v1863
    %v1866 = vrot.slane %v1816, 4
    %v1868 = vmul.f32 %v1841, %v1866
    %v1869 = vadd.f32 %v1419, %v1868
    %v1870 = vtanh.pop %v1869
    %v1871 = vsub.f32 1.0, %v1864
    %v1872 = vmul.f32 %v1871, %v1870
    %v1874 = vrot.slane %v1775, 6
    %v1876 = vmul.f32 %v1864, %v1874
    %v1877 = vadd.f32 %v1872, %v1876
    %v1878 = vpack.c.bf16 %v1877, %v1877
    %v1880 = vrot.slane %v1878, 2
    %1882 = vmatpush.bf16.msra.mxu0 %v1564
    %1883 = vmatpush.bf16.msra.mxu0 %v1561
    %1884 = vmatpush.bf16.msra.mxu0 %v1558
    %1885 = vmatpush.bf16.msra.mxu0 %v1555
    %1886 = vmatpush.bf16.msra.mxu0 %v1552
    %1887 = vmatpush.bf16.msra.mxu0 %v1549
    %1888 = vmatpush.bf16.msra.mxu0 %v1546
    %1889 = vmatpush.bf16.msra.mxu0 %v1543
    %1890 = vmatmul.bf16.gmra.mxu0 %v1880
    %v1891 = vpop.f32.mrf.mxu0
    %v1892 = vadd.f32 %v1425, %v1891
    %v1893 = vpop.f32.mrf.mxu0
    %1894 = vdwg.mxu0
    %1895 = vmatpush.bf16.msra.mxu0 %v1565
    %1896 = vmatpush.bf16.msra.mxu0 %v1562
    %1897 = vmatpush.bf16.msra.mxu0 %v1559
    %1898 = vmatpush.bf16.msra.mxu0 %v1556
    %1899 = vmatpush.bf16.msra.mxu0 %v1553
    %1900 = vmatpush.bf16.msra.mxu0 %v1550
    %1901 = vmatpush.bf16.msra.mxu0 %v1547
    %1902 = vmatpush.bf16.msra.mxu0 %v1544
    %1903 = vmatmul.bf16.gmra.mxu0 %v1880
    %v1904 = vpop.f32.mrf.mxu0
    %v1905 = vadd.f32 %v1426, %v1904
    %v1906 = vpop.f32.mrf.mxu0
    %1907 = vdwg.mxu0
    %1908 = vmatpush.bf16.msra.mxu0 %v1566
    %1909 = vmatpush.bf16.msra.mxu0 %v1563
    %1910 = vmatpush.bf16.msra.mxu0 %v1560
    %1911 = vmatpush.bf16.msra.mxu0 %v1557
    %1912 = vmatpush.bf16.msra.mxu0 %v1554
    %1913 = vmatpush.bf16.msra.mxu0 %v1551
    %1914 = vmatpush.bf16.msra.mxu0 %v1548
    %1915 = vmatpush.bf16.msra.mxu0 %v1545
    %1916 = vmatmul.bf16.gmra.mxu0 %v1880
    %v1917 = vpop.f32.mrf.mxu0
    %v1918 = vadd.f32 %v1427, %v1917
    %v1919 = vpop.f32.mrf.mxu0
    %1920 = vdwg.mxu0
    %v1922 = vrot.slane %v1892, 2
    %v1924 = vadd.f32 %v1391, %v1922
    %v1925 = vxor.u32 %v1924, 2147483648
    %v1926 = vmul.f32 %v1925, 1.442695
    %v1927 = vpow.pop %v1926
    %v1928 = vadd.f32 %v1927, 1.0
    %v1929 = vrcp.pop %v1928
    %v1930 = vmul.f32 %v1928, %v1929
    %v1931 = vsub.f32 1.0, %v1930
    %v1932 = vmul.f32 %v1929, %v1931
    %v1933 = vadd.f32 %v1929, %v1932
    %vm1934 = vweird.f32 %v1928
    %vm1935 = vweird.f32 %v1929
    %vm1936 = vmor %vm1934, %vm1935
    %v1937 = vsel %vm1936, %v1929, %v1933
    %v1938 = vand.u32 2147483647, %v1928
    %vm1939 = vcmp.eq.f32.partialorder %v1938, 8.507059e+37
    %v1940 = vand.u32 %v1928, 2147483648
    %v1941 = vor.u32 1.1754944e-38, %v1940
    %v1942 = vsel %vm1939, %v1941, %v1937
    %v1943 = vmul.f32 1.0, %v1942
    %v1945 = vrot.slane %v1905, 2
    %v1947 = vadd.f32 %v1405, %v1945
    %v1948 = vxor.u32 %v1947, 2147483648
    %v1949 = vmul.f32 %v1948, 1.442695
    %v1950 = vpow.pop %v1949
    %v1951 = vadd.f32 %v1950, 1.0
    %v1952 = vrcp.pop %v1951
    %v1953 = vmul.f32 %v1951, %v1952
    %v1954 = vsub.f32 1.0, %v1953
    %v1955 = vmul.f32 %v1952, %v1954
    %v1956 = vadd.f32 %v1952, %v1955
    %vm1957 = vweird.f32 %v1951
    %vm1958 = vweird.f32 %v1952
    %vm1959 = vmor %vm1957, %vm1958
    %v1960 = vsel %vm1959, %v1952, %v1956
    %v1961 = vand.u32 2147483647, %v1951
    %vm1962 = vcmp.eq.f32.partialorder %v1961, 8.507059e+37
    %v1963 = vand.u32 %v1951, 2147483648
    %v1964 = vor.u32 1.1754944e-38, %v1963
    %v1965 = vsel %vm1962, %v1964, %v1960
    %v1966 = vmul.f32 1.0, %v1965
    %v1968 = vrot.slane %v1918, 2
    %v1970 = vmul.f32 %v1943, %v1968
    %v1971 = vadd.f32 %v1419, %v1970
    %v1972 = vtanh.pop %v1971
    %v1973 = vsub.f32 1.0, %v1966
    %v1974 = vmul.f32 %v1973, %v1972
    %v1976 = vrot.slane %v1877, 6
    %v1978 = vmul.f32 %v1966, %v1976
    %v1979 = vadd.f32 %v1974, %v1978
    %v1980 = vpack.c.bf16 %v1979, %v1979
    %v1982 = vrot.slane %v1980, 3
    %1984 = vmatpush.bf16.msra.mxu0 %v1564
    %1985 = vmatpush.bf16.msra.mxu0 %v1561
    %1986 = vmatpush.bf16.msra.mxu0 %v1558
    %1987 = vmatpush.bf16.msra.mxu0 %v1555
    %1988 = vmatpush.bf16.msra.mxu0 %v1552
    %1989 = vmatpush.bf16.msra.mxu0 %v1549
    %1990 = vmatpush.bf16.msra.mxu0 %v1546
    %1991 = vmatpush.bf16.msra.mxu0 %v1543
    %1992 = vmatmul.bf16.gmra.mxu0 %v1982
    %v1993 = vpop.f32.mrf.mxu0
    %v1994 = vadd.f32 %v1425, %v1993
    %v1995 = vpop.f32.mrf.mxu0
    %1996 = vdwg.mxu0
    %1997 = vmatpush.bf16.msra.mxu0 %v1565
    %1998 = vmatpush.bf16.msra.mxu0 %v1562
    %1999 = vmatpush.bf16.msra.mxu0 %v1559
    %2000 = vmatpush.bf16.msra.mxu0 %v1556
    %2001 = vmatpush.bf16.msra.mxu0 %v1553
    %2002 = vmatpush.bf16.msra.mxu0 %v1550
    %2003 = vmatpush.bf16.msra.mxu0 %v1547
    %2004 = vmatpush.bf16.msra.mxu0 %v1544
    %2005 = vmatmul.bf16.gmra.mxu0 %v1982
    %v2006 = vpop.f32.mrf.mxu0
    %v2007 = vadd.f32 %v1426, %v2006
    %v2008 = vpop.f32.mrf.mxu0
    %2009 = vdwg.mxu0
    %2010 = vmatpush.bf16.msra.mxu0 %v1566
    %2011 = vmatpush.bf16.msra.mxu0 %v1563
    %2012 = vmatpush.bf16.msra.mxu0 %v1560
    %2013 = vmatpush.bf16.msra.mxu0 %v1557
    %2014 = vmatpush.bf16.msra.mxu0 %v1554
    %2015 = vmatpush.bf16.msra.mxu0 %v1551
    %2016 = vmatpush.bf16.msra.mxu0 %v1548
    %2017 = vmatpush.bf16.msra.mxu0 %v1545
    %2018 = vmatmul.bf16.gmra.mxu0 %v1982
    %v2019 = vpop.f32.mrf.mxu0
    %v2020 = vadd.f32 %v1427, %v2019
    %v2021 = vpop.f32.mrf.mxu0
    %2022 = vdwg.mxu0
    %v2023 = vadd.f32 %v1393, %v1994
    %v2024 = vxor.u32 %v2023, 2147483648
    %v2025 = vmul.f32 %v2024, 1.442695
    %v2026 = vpow.pop %v2025
    %v2027 = vadd.f32 %v2026, 1.0
    %v2028 = vrcp.pop %v2027
    %v2029 = vmul.f32 %v2027, %v2028
    %v2030 = vsub.f32 1.0, %v2029
    %v2031 = vmul.f32 %v2028, %v2030
    %v2032 = vadd.f32 %v2028, %v2031
    %vm2033 = vweird.f32 %v2027
    %vm2034 = vweird.f32 %v2028
    %vm2035 = vmor %vm2033, %vm2034
    %v2036 = vsel %vm2035, %v2028, %v2032
    %v2037 = vand.u32 2147483647, %v2027
    %vm2038 = vcmp.eq.f32.partialorder %v2037, 8.507059e+37
    %v2039 = vand.u32 %v2027, 2147483648
    %v2040 = vor.u32 1.1754944e-38, %v2039
    %v2041 = vsel %vm2038, %v2040, %v2036
    %v2042 = vmul.f32 1.0, %v2041
    %v2043 = vadd.f32 %v1407, %v2007
    %v2044 = vxor.u32 %v2043, 2147483648
    %v2045 = vmul.f32 %v2044, 1.442695
    %v2046 = vpow.pop %v2045
    %v2047 = vadd.f32 %v2046, 1.0
    %v2048 = vrcp.pop %v2047
    %v2049 = vmul.f32 %v2047, %v2048
    %v2050 = vsub.f32 1.0, %v2049
    %v2051 = vmul.f32 %v2048, %v2050
    %v2052 = vadd.f32 %v2048, %v2051
    %vm2053 = vweird.f32 %v2047
    %vm2054 = vweird.f32 %v2048
    %vm2055 = vmor %vm2053, %vm2054
    %v2056 = vsel %vm2055, %v2048, %v2052
    %v2057 = vand.u32 2147483647, %v2047
    %vm2058 = vcmp.eq.f32.partialorder %v2057, 8.507059e+37
    %v2059 = vand.u32 %v2047, 2147483648
    %v2060 = vor.u32 1.1754944e-38, %v2059
    %v2061 = vsel %vm2058, %v2060, %v2056
    %v2062 = vmul.f32 1.0, %v2061
    %v2063 = vmul.f32 %v2042, %v2020
    %v2064 = vadd.f32 %v1421, %v2063
    %v2065 = vtanh.pop %v2064
    %v2066 = vsub.f32 1.0, %v2062
    %v2067 = vmul.f32 %v2066, %v2065
    %v2069 = vrot.slane %v1979, 6
    %v2071 = vmul.f32 %v2062, %v2069
    %v2072 = vadd.f32 %v2067, %v2071
    %v2073 = vpack.c.bf16 %v2072, %v2072
    %2074 = vmatpush.bf16.msra.mxu0 %v1564
    %2075 = vmatpush.bf16.msra.mxu0 %v1561
    %2076 = vmatpush.bf16.msra.mxu0 %v1558
    %2077 = vmatpush.bf16.msra.mxu0 %v1555
    %2078 = vmatpush.bf16.msra.mxu0 %v1552
    %2079 = vmatpush.bf16.msra.mxu0 %v1549
    %2080 = vmatpush.bf16.msra.mxu0 %v1546
    %2081 = vmatpush.bf16.msra.mxu0 %v1543
    %2082 = vmatmul.bf16.gmra.mxu0 %v2073
    %v2083 = vpop.f32.mrf.mxu0
    %v2084 = vadd.f32 %v1425, %v2083
    %v2085 = vpop.f32.mrf.mxu0
    %2086 = vdwg.mxu0
    %2087 = vmatpush.bf16.msra.mxu0 %v1565
    %2088 = vmatpush.bf16.msra.mxu0 %v1562
    %2089 = vmatpush.bf16.msra.mxu0 %v1559
    %2090 = vmatpush.bf16.msra.mxu0 %v1556
    %2091 = vmatpush.bf16.msra.mxu0 %v1553
    %2092 = vmatpush.bf16.msra.mxu0 %v1550
    %2093 = vmatpush.bf16.msra.mxu0 %v1547
    %2094 = vmatpush.bf16.msra.mxu0 %v1544
    %2095 = vmatmul.bf16.gmra.mxu0 %v2073
    %v2096 = vpop.f32.mrf.mxu0
    %v2097 = vadd.f32 %v1426, %v2096
    %v2098 = vpop.f32.mrf.mxu0
    %2099 = vdwg.mxu0
    %2100 = vmatpush.bf16.msra.mxu0 %v1566
    %2101 = vmatpush.bf16.msra.mxu0 %v1563
    %2102 = vmatpush.bf16.msra.mxu0 %v1560
    %2103 = vmatpush.bf16.msra.mxu0 %v1557
    %2104 = vmatpush.bf16.msra.mxu0 %v1554
    %2105 = vmatpush.bf16.msra.mxu0 %v1551
    %2106 = vmatpush.bf16.msra.mxu0 %v1548
    %2107 = vmatpush.bf16.msra.mxu0 %v1545
    %2108 = vmatmul.bf16.gmra.mxu0 %v2073
    %v2109 = vpop.f32.mrf.mxu0
    %v2110 = vadd.f32 %v1427, %v2109
    %v2111 = vpop.f32.mrf.mxu0
    %2112 = vdwg.mxu0
    %v2114 = vrot.slane %v2084, 6
    %v2116 = vadd.f32 %v1393, %v2114
    %v2117 = vxor.u32 %v2116, 2147483648
    %v2118 = vmul.f32 %v2117, 1.442695
    %v2119 = vpow.pop %v2118
    %v2120 = vadd.f32 %v2119, 1.0
    %v2121 = vrcp.pop %v2120
    %v2122 = vmul.f32 %v2120, %v2121
    %v2123 = vsub.f32 1.0, %v2122
    %v2124 = vmul.f32 %v2121, %v2123
    %v2125 = vadd.f32 %v2121, %v2124
    %vm2126 = vweird.f32 %v2120
    %vm2127 = vweird.f32 %v2121
    %vm2128 = vmor %vm2126, %vm2127
    %v2129 = vsel %vm2128, %v2121, %v2125
    %v2130 = vand.u32 2147483647, %v2120
    %vm2131 = vcmp.eq.f32.partialorder %v2130, 8.507059e+37
    %v2132 = vand.u32 %v2120, 2147483648
    %v2133 = vor.u32 1.1754944e-38, %v2132
    %v2134 = vsel %vm2131, %v2133, %v2129
    %v2135 = vmul.f32 1.0, %v2134
    %v2137 = vrot.slane %v2097, 6
    %v2139 = vadd.f32 %v1407, %v2137
    %v2140 = vxor.u32 %v2139, 2147483648
    %v2141 = vmul.f32 %v2140, 1.442695
    %v2142 = vpow.pop %v2141
    %v2143 = vadd.f32 %v2142, 1.0
    %v2144 = vrcp.pop %v2143
    %v2145 = vmul.f32 %v2143, %v2144
    %v2146 = vsub.f32 1.0, %v2145
    %v2147 = vmul.f32 %v2144, %v2146
    %v2148 = vadd.f32 %v2144, %v2147
    %vm2149 = vweird.f32 %v2143
    %vm2150 = vweird.f32 %v2144
    %vm2151 = vmor %vm2149, %vm2150
    %v2152 = vsel %vm2151, %v2144, %v2148
    %v2153 = vand.u32 2147483647, %v2143
    %vm2154 = vcmp.eq.f32.partialorder %v2153, 8.507059e+37
    %v2155 = vand.u32 %v2143, 2147483648
    %v2156 = vor.u32 1.1754944e-38, %v2155
    %v2157 = vsel %vm2154, %v2156, %v2152
    %v2158 = vmul.f32 1.0, %v2157
    %v2160 = vrot.slane %v2110, 6
    %v2162 = vmul.f32 %v2135, %v2160
    %v2163 = vadd.f32 %v1421, %v2162
    %v2164 = vtanh.pop %v2163
    %v2165 = vsub.f32 1.0, %v2158
    %v2166 = vmul.f32 %v2165, %v2164
    %v2168 = vrot.slane %v2072, 6
    %v2170 = vmul.f32 %v2158, %v2168
    %v2171 = vadd.f32 %v2166, %v2170
    %v2172 = vpack.c.bf16 %v2171, %v2171
    %v2174 = vrot.slane %v2172, 1
    %2176 = vmatpush.bf16.msra.mxu0 %v1564
    %2177 = vmatpush.bf16.msra.mxu0 %v1561
    %2178 = vmatpush.bf16.msra.mxu0 %v1558
    %2179 = vmatpush.bf16.msra.mxu0 %v1555
    %2180 = vmatpush.bf16.msra.mxu0 %v1552
    %2181 = vmatpush.bf16.msra.mxu0 %v1549
    %2182 = vmatpush.bf16.msra.mxu0 %v1546
    %2183 = vmatpush.bf16.msra.mxu0 %v1543
    %2184 = vmatmul.bf16.gmra.mxu0 %v2174
    %v2185 = vpop.f32.mrf.mxu0
    %v2186 = vadd.f32 %v1425, %v2185
    %v2187 = vpop.f32.mrf.mxu0
    %2188 = vdwg.mxu0
    %2189 = vmatpush.bf16.msra.mxu0 %v1565
    %2190 = vmatpush.bf16.msra.mxu0 %v1562
    %2191 = vmatpush.bf16.msra.mxu0 %v1559
    %2192 = vmatpush.bf16.msra.mxu0 %v1556
    %2193 = vmatpush.bf16.msra.mxu0 %v1553
    %2194 = vmatpush.bf16.msra.mxu0 %v1550
    %2195 = vmatpush.bf16.msra.mxu0 %v1547
    %2196 = vmatpush.bf16.msra.mxu0 %v1544
    %2197 = vmatmul.bf16.gmra.mxu0 %v2174
    %v2198 = vpop.f32.mrf.mxu0
    %v2199 = vadd.f32 %v1426, %v2198
    %v2200 = vpop.f32.mrf.mxu0
    %2201 = vdwg.mxu0
    %2202 = vmatpush.bf16.msra.mxu0 %v1566
    %2203 = vmatpush.bf16.msra.mxu0 %v1563
    %2204 = vmatpush.bf16.msra.mxu0 %v1560
    %2205 = vmatpush.bf16.msra.mxu0 %v1557
    %2206 = vmatpush.bf16.msra.mxu0 %v1554
    %2207 = vmatpush.bf16.msra.mxu0 %v1551
    %2208 = vmatpush.bf16.msra.mxu0 %v1548
    %2209 = vmatpush.bf16.msra.mxu0 %v1545
    %2210 = vmatmul.bf16.gmra.mxu0 %v2174
    %v2211 = vpop.f32.mrf.mxu0
    %v2212 = vadd.f32 %v1427, %v2211
    %v2213 = vpop.f32.mrf.mxu0
    %2214 = vdwg.mxu0
    %v2216 = vrot.slane %v2186, 4
    %v2218 = vadd.f32 %v1393, %v2216
    %v2219 = vxor.u32 %v2218, 2147483648
    %v2220 = vmul.f32 %v2219, 1.442695
    %v2221 = vpow.pop %v2220
    %v2222 = vadd.f32 %v2221, 1.0
    %v2223 = vrcp.pop %v2222
    %v2224 = vmul.f32 %v2222, %v2223
    %v2225 = vsub.f32 1.0, %v2224
    %v2226 = vmul.f32 %v2223, %v2225
    %v2227 = vadd.f32 %v2223, %v2226
    %vm2228 = vweird.f32 %v2222
    %vm2229 = vweird.f32 %v2223
    %vm2230 = vmor %vm2228, %vm2229
    %v2231 = vsel %vm2230, %v2223, %v2227
    %v2232 = vand.u32 2147483647, %v2222
    %vm2233 = vcmp.eq.f32.partialorder %v2232, 8.507059e+37
    %v2234 = vand.u32 %v2222, 2147483648
    %v2235 = vor.u32 1.1754944e-38, %v2234
    %v2236 = vsel %vm2233, %v2235, %v2231
    %v2237 = vmul.f32 1.0, %v2236
    %v2239 = vrot.slane %v2199, 4
    %v2241 = vadd.f32 %v1407, %v2239
    %v2242 = vxor.u32 %v2241, 2147483648
    %v2243 = vmul.f32 %v2242, 1.442695
    %v2244 = vpow.pop %v2243
    %v2245 = vadd.f32 %v2244, 1.0
    %v2246 = vrcp.pop %v2245
    %v2247 = vmul.f32 %v2245, %v2246
    %v2248 = vsub.f32 1.0, %v2247
    %v2249 = vmul.f32 %v2246, %v2248
    %v2250 = vadd.f32 %v2246, %v2249
    %vm2251 = vweird.f32 %v2245
    %vm2252 = vweird.f32 %v2246
    %vm2253 = vmor %vm2251, %vm2252
    %v2254 = vsel %vm2253, %v2246, %v2250
    %v2255 = vand.u32 2147483647, %v2245
    %vm2256 = vcmp.eq.f32.partialorder %v2255, 8.507059e+37
    %v2257 = vand.u32 %v2245, 2147483648
    %v2258 = vor.u32 1.1754944e-38, %v2257
    %v2259 = vsel %vm2256, %v2258, %v2254
    %v2260 = vmul.f32 1.0, %v2259
    %v2262 = vrot.slane %v2212, 4
    %v2264 = vmul.f32 %v2237, %v2262
    %v2265 = vadd.f32 %v1421, %v2264
    %v2266 = vtanh.pop %v2265
    %v2267 = vsub.f32 1.0, %v2260
    %v2268 = vmul.f32 %v2267, %v2266
    %v2270 = vrot.slane %v2171, 6
    %v2272 = vmul.f32 %v2260, %v2270
    %v2273 = vadd.f32 %v2268, %v2272
    %v2274 = vpack.c.bf16 %v2273, %v2273
    %v2276 = vrot.slane %v2274, 2
    %2278 = vmatpush.bf16.msra.mxu0 %v1564
    %2279 = vmatpush.bf16.msra.mxu0 %v1561
    %2280 = vmatpush.bf16.msra.mxu0 %v1558
    %2281 = vmatpush.bf16.msra.mxu0 %v1555
    %2282 = vmatpush.bf16.msra.mxu0 %v1552
    %2283 = vmatpush.bf16.msra.mxu0 %v1549
    %2284 = vmatpush.bf16.msra.mxu0 %v1546
    %2285 = vmatpush.bf16.msra.mxu0 %v1543
    %2286 = vmatmul.bf16.gmra.mxu0 %v2276
    %v2287 = vpop.f32.mrf.mxu0
    %v2288 = vadd.f32 %v1425, %v2287
    %v2289 = vpop.f32.mrf.mxu0
    %2290 = vdwg.mxu0
    %2291 = vmatpush.bf16.msra.mxu0 %v1565
    %2292 = vmatpush.bf16.msra.mxu0 %v1562
    %2293 = vmatpush.bf16.msra.mxu0 %v1559
    %2294 = vmatpush.bf16.msra.mxu0 %v1556
    %2295 = vmatpush.bf16.msra.mxu0 %v1553
    %2296 = vmatpush.bf16.msra.mxu0 %v1550
    %2297 = vmatpush.bf16.msra.mxu0 %v1547
    %2298 = vmatpush.bf16.msra.mxu0 %v1544
    %2299 = vmatmul.bf16.gmra.mxu0 %v2276
    %v2300 = vpop.f32.mrf.mxu0
    %v2301 = vadd.f32 %v1426, %v2300
    %v2302 = vpop.f32.mrf.mxu0
    %2303 = vdwg.mxu0
    %2304 = vmatpush.bf16.msra.mxu0 %v1566
    %2305 = vmatpush.bf16.msra.mxu0 %v1563
    %2306 = vmatpush.bf16.msra.mxu0 %v1560
    %2307 = vmatpush.bf16.msra.mxu0 %v1557
    %2308 = vmatpush.bf16.msra.mxu0 %v1554
    %2309 = vmatpush.bf16.msra.mxu0 %v1551
    %2310 = vmatpush.bf16.msra.mxu0 %v1548
    %2311 = vmatpush.bf16.msra.mxu0 %v1545
    %2312 = vmatmul.bf16.gmra.mxu0 %v2276
    %v2313 = vpop.f32.mrf.mxu0
    %v2314 = vadd.f32 %v1427, %v2313
    %v2315 = vpop.f32.mrf.mxu0
    %2316 = vdwg.mxu0
    %v2318 = vrot.slane %v2288, 2
    %v2320 = vadd.f32 %v1393, %v2318
    %v2321 = vxor.u32 %v2320, 2147483648
    %v2322 = vmul.f32 %v2321, 1.442695
    %v2323 = vpow.pop %v2322
    %v2324 = vadd.f32 %v2323, 1.0
    %v2325 = vrcp.pop %v2324
    %v2326 = vmul.f32 %v2324, %v2325
    %v2327 = vsub.f32 1.0, %v2326
    %v2328 = vmul.f32 %v2325, %v2327
    %v2329 = vadd.f32 %v2325, %v2328
    %vm2330 = vweird.f32 %v2324
    %vm2331 = vweird.f32 %v2325
    %vm2332 = vmor %vm2330, %vm2331
    %v2333 = vsel %vm2332, %v2325, %v2329
    %v2334 = vand.u32 2147483647, %v2324
    %vm2335 = vcmp.eq.f32.partialorder %v2334, 8.507059e+37
    %v2336 = vand.u32 %v2324, 2147483648
    %v2337 = vor.u32 1.1754944e-38, %v2336
    %v2338 = vsel %vm2335, %v2337, %v2333
    %v2339 = vmul.f32 1.0, %v2338
    %v2341 = vrot.slane %v2301, 2
    %v2343 = vadd.f32 %v1407, %v2341
    %v2344 = vxor.u32 %v2343, 2147483648
    %v2345 = vmul.f32 %v2344, 1.442695
    %v2346 = vpow.pop %v2345
    %v2347 = vadd.f32 %v2346, 1.0
    %v2348 = vrcp.pop %v2347
    %v2349 = vmul.f32 %v2347, %v2348
    %v2350 = vsub.f32 1.0, %v2349
    %v2351 = vmul.f32 %v2348, %v2350
    %v2352 = vadd.f32 %v2348, %v2351
    %vm2353 = vweird.f32 %v2347
    %vm2354 = vweird.f32 %v2348
    %vm2355 = vmor %vm2353, %vm2354
    %v2356 = vsel %vm2355, %v2348, %v2352
    %v2357 = vand.u32 2147483647, %v2347
    %vm2358 = vcmp.eq.f32.partialorder %v2357, 8.507059e+37
    %v2359 = vand.u32 %v2347, 2147483648
    %v2360 = vor.u32 1.1754944e-38, %v2359
    %v2361 = vsel %vm2358, %v2360, %v2356
    %v2362 = vmul.f32 1.0, %v2361
    %v2364 = vrot.slane %v2314, 2
    %v2366 = vmul.f32 %v2339, %v2364
    %v2367 = vadd.f32 %v1421, %v2366
    %v2368 = vtanh.pop %v2367
    %v2369 = vsub.f32 1.0, %v2362
    %v2370 = vmul.f32 %v2369, %v2368
    %v2372 = vrot.slane %v2273, 6
    %v2374 = vmul.f32 %v2362, %v2372
    %v2375 = vadd.f32 %v2370, %v2374
    %v2376 = vsel %vm102, %v1676, %v1775
    %v2377 = vsel %vm1205, %v2376, %v1877
    %v2378 = vsel %vm1207, %v2377, %v1979
    %v2379 = vsel %vm102, %v2072, %v2171
    %v2380 = vsel %vm1205, %v2379, %v2273
    %v2381 = vsel %vm1207, %v2380, %v2375
    %v2382 = vpack.c.bf16 %v2381, %v2378
    %v2383 = vld [vmem:[%s3] sm:$0xf]
    %v2384 = vld [vmem:[%s3 + $0x4] sm:$0xf]
    %v2385 = vld [vmem:[%s3 + $0x8] sm:$0xf]
    %v2386 = vld [vmem:[%s3 + $0xc] sm:$0xf]
    %v2387 = vld [vmem:[%s3 + $0x10] sm:$0xf]
    %v2388 = vld [vmem:[%s3 + $0x14] sm:$0xf]
    %v2389 = vld [vmem:[%s3 + $0x18] sm:$0xf]
    %v2390 = vld [vmem:[%s3 + $0x1c] sm:$0xf]
    %v2391 = vld [vmem:[%s3 + $0x20] sm:$0xf]
    %v2392 = vld [vmem:[%s3 + $0x24] sm:$0xf]
    %v2393 = vld [vmem:[%s3 + $0x28] sm:$0xf]
    %v2394 = vld [vmem:[%s3 + $0x2c] sm:$0xf]
    %v2395 = vld [vmem:[%s3 + $0x30] sm:$0xf]
    %v2396 = vld [vmem:[%s3 + $0x34] sm:$0xf]
    %v2397 = vld [vmem:[%s3 + $0x38] sm:$0xf]
    %v2398 = vld [vmem:[%s3 + $0x3c] sm:$0xf]
    %v2415 = vunpack.c.l.b16 %v2383
    %v2416 = vunpack.c.l.b16 %v2384
    %v2417 = vunpack.c.l.b16 %v2385
    %v2418 = vunpack.c.l.b16 %v2386
    %v2419 = vunpack.c.l.b16 %v2387
    %v2420 = vunpack.c.l.b16 %v2388
    %v2421 = vunpack.c.l.b16 %v2389
    %v2422 = vunpack.c.l.b16 %v2390
    %v2423 = vunpack.c.l.b16 %v2391
    %v2424 = vunpack.c.l.b16 %v2392
    %v2425 = vunpack.c.l.b16 %v2393
    %v2426 = vunpack.c.l.b16 %v2394
    %v2427 = vunpack.c.l.b16 %v2395
    %v2428 = vunpack.c.l.b16 %v2396
    %v2429 = vunpack.c.l.b16 %v2397
    %v2430 = vunpack.c.l.b16 %v2398
    %v2431 = vpack.c.b16 %v2416, %v2415
    %v2432 = vpack.c.b16 %v2418, %v2417
    %v2433 = vpack.c.b16 %v2420, %v2419
    %v2434 = vpack.c.b16 %v2422, %v2421
    %v2435 = vpack.c.b16 %v2424, %v2423
    %v2436 = vpack.c.b16 %v2426, %v2425
    %v2437 = vpack.c.b16 %v2428, %v2427
    %v2438 = vpack.c.b16 %v2430, %v2429
    %2447 = vmatpush.bf16.msra.mxu0 %v2438
    %2448 = vmatpush.bf16.msra.mxu0 %v2437
    %2449 = vmatpush.bf16.msra.mxu0 %v2436
    %2450 = vmatpush.bf16.msra.mxu0 %v2435
    %2451 = vmatpush.bf16.msra.mxu0 %v2434
    %2452 = vmatpush.bf16.msra.mxu0 %v2433
    %2453 = vmatpush.bf16.msra.mxu0 %v2432
    %2454 = vmatpush.bf16.msra.mxu0 %v2431
    %2455 = vmatmul.bf16.gmra.mxu0 %v2382
    %v2456 = vpop.f32.mrf.mxu0
    %v2457 = vadd.f32 0.0, %v2456
    %v2458 = vpop.f32.mrf.mxu0
    %v2459 = vadd.f32 0.0, %v2458
    %2460 = vdwg.mxu0
    %v2461 = vmul.f32 %v2457, 0.33333334
    %v2462 = vmul.f32 %v2459, 0.33333334
    %2463 = vst [vmem:[%s12] sm:$0xff] %v2461
    %2464 = vst [vmem:[%s12 + $0x8] sm:$0xff] %v2462
    // Predicated region
    $region62: #{cnn_krnn_forward.1} parent=1 // pred_check
      _
    $region63: #{cnn_krnn_forward.1} parent=1 // pred_check_branch
      %2466 = sbr.rel (0) target = $region65
    $region64: #{cnn_krnn_forward.1} parent=1 // pred_region
      _
    $region65: #{cnn_krnn_forward.1} parent=1 // pred_fallthru
      _
    // Predicated region
    $region66: #{cnn_krnn_forward.1} parent=1 // pred_check
      _
    $region67: #{cnn_krnn_forward.1} parent=1 // pred_check_branch
      %2468 = sbr.rel (0) target = $region69
    $region68: #{cnn_krnn_forward.1} parent=1 // pred_region
      _
    $region69: #{cnn_krnn_forward.1} parent=1 // pred_fallthru
      _
    %2469 = vsyncpa [#allocation3], 1
    %2470 = vsyncpa [#allocation5], 1

</llo_original>
